<compile_context>
chip_gen: v5e
topology: v5e:2x2
jax: 0.10.0
libtpu: 0.0.40
codegen_flags: <defaults>
</compile_context>

<pallas_src>
import functools
import math

import jax
import jax.numpy as jnp
from jax.experimental import pallas as pl
from jax.experimental.pallas import tpu as pltpu


def transformer_layer_kernel(qk_ref, v_ref,
                             wk_ref, bk_ref,        # (Dp, Dp), (1, Dp)
                             wv_ref, bv_ref,        # (Dp, Dp), (1, Dp)
                             wo_ref, bo_ref,        # (D,  Dp), (1, Dp)
                             ln1w_ref, ln1b_ref,    # (1, Dp), (1, Dp)
                             w1_ref, b1_ref,        # (Dp, Fp), (1, Fp)
                             w2_ref, b2_ref,        # (Fp, Dp), (1, Dp)
                             ln2w_ref, ln2b_ref,    # (1, Dp), (1, Dp)
                             out_ref,               # (N, Dp)
                             *, n_heads, d_k, d_model, seq_len,
                             compute_dtype, eps=1e-5):
    N, Dp = out_ref.shape         # N = TB * S rows of this block (lane-dense Dp)
    S = seq_len
    TB = N // S
    D = d_model                   # real (unpadded) model width = n_heads * d_k
    cdt = compute_dtype

    qk_rows = qk_ref[...]                       # (2N, Dp) f32: [q rows ; k rows]
    q_resid = qk_rows[:N]                       # residual (padded cols are zero)

    scale = jnp.float32(1.0 / math.sqrt(d_k))

    # ---- fused full-width projections (one MXU pass each) ----
    qk_proj = jnp.dot(qk_rows.astype(cdt), wk_ref[...],
                      preferred_element_type=jnp.float32) + bk_ref[...]   # (2N, Dp)
    v_proj = jnp.dot(v_ref[...].astype(cdt), wv_ref[...],
                     preferred_element_type=jnp.float32) + bv_ref[...]    # (N, Dp)

    q_proj = qk_proj[:N] * scale                # fold 1/sqrt(d_k) once into q
    k_proj = qk_proj[N:]

    # ---- masks, built once and reused across all heads ----
    qi = jax.lax.broadcasted_iota(jnp.int32, (1, S, S), 1)   # query position
    kj = jax.lax.broadcasted_iota(jnp.int32, (1, S, S), 2)   # key position
    causal = kj < qi                 # mask==0 (j >= i) -> -1e32
    not_first_row = qi > 0           # zero_pad=True: first query row zeroed

    ctx_heads = []
    for h in range(n_heads):
        lo = h * d_k
        q_h = q_proj[:, lo:lo + d_k].reshape(TB, S, d_k).astype(cdt)
        k_h = k_proj[:, lo:lo + d_k].reshape(TB, S, d_k).astype(cdt)
        v_h = v_proj[:, lo:lo + d_k].reshape(TB, S, d_k).astype(cdt)

        s = jnp.einsum("bqd,bkd->bqk", q_h, k_h,
                       preferred_element_type=jnp.float32)               # (TB, S, S)
        s = jnp.where(causal, s, jnp.float32(-1e32))
        m = jnp.max(s, axis=-1, keepdims=True)
        e = jnp.exp(s - m)
        denom = jnp.sum(e, axis=-1, keepdims=True)
        r = pl.reciprocal(denom, approx=True)            # EUP slot
        r = r * (2.0 - denom * r)                        # one Newton step -> f32 accurate
        p = e * r
        p = jnp.where(not_first_row, p, jnp.float32(0.0))

        ctx = jnp.einsum("bqk,bkd->bqd", p.astype(cdt), v_h,
                         preferred_element_type=jnp.float32)             # (TB, S, d_k)
        ctx_heads.append(ctx.reshape(N, d_k))

    # Head concat + single full-width output projection.
    ctx2d = jnp.concatenate(ctx_heads, axis=-1)                          # (N, D)
    attn = jnp.dot(ctx2d.astype(cdt), wo_ref[...],
                   preferred_element_type=jnp.float32) + bo_ref[...]     # (N, Dp)

    # ---- LayerNorm over the real D columns only (padded cols stay exactly 0) ----
    col = jax.lax.broadcasted_iota(jnp.int32, (1, Dp), 1)
    dmask = (col < D).astype(jnp.float32)
    inv_d = jnp.float32(1.0 / D)

    def layer_norm(x, w, b):
        mu = jnp.sum(x, axis=-1, keepdims=True) * inv_d          # pads of x are zero
        xc = x - mu
        var = jnp.sum(xc * xc * dmask, axis=-1, keepdims=True) * inv_d
        return xc * jax.lax.rsqrt(var + eps) * w + b             # pad gamma/beta = 0

    # residual + LayerNorm1
    x = layer_norm(q_resid + attn, ln1w_ref[...], ln1b_ref[...])

    # position-wise FFN: linear2(relu(linear1(x)))
    hdn = jnp.dot(x.astype(cdt), w1_ref[...],
                  preferred_element_type=jnp.float32) + b1_ref[...]
    hdn = jnp.maximum(hdn, 0.0)
    ff = jnp.dot(hdn.astype(cdt), w2_ref[...],
                 preferred_element_type=jnp.float32) + b2_ref[...]

    # residual + LayerNorm2
    y = layer_norm(x + ff, ln2w_ref[...], ln2b_ref[...])
    out_ref[...] = y.astype(out_ref.dtype)


# ------------------------------ wrapper helpers ------------------------------

def _round_up(x, m):
    return (x + m - 1) // m * m


def _tpu_vmem_bytes():
    """Physical VMEM per TensorCore; conservative default (v7x = 64 MiB)."""
    default = 64 * 1024 * 1024
    try:
        info = pltpu.get_tpu_info()
        return int(getattr(info, "vmem_capacity_bytes", default))
    except Exception:
        return default


def _pick_batch_block(B, S, Dp, Fp, weight_bytes, vmem_budget, two_tensorcores):
    """Largest batch block whose per-step working set fits the VMEM budget.

    On 64 MiB parts (v7x-class, 2 TCs) prefer an even number of grid steps so both
    TensorCores stay busy; on 128 MiB single-TC parts let the block grow to the whole
    batch (the grid is a serial loop there, smaller blocks only add per-step overhead).
    """
    if B <= 1:
        return 1
    budget = max(vmem_budget // 2, 1 << 20)   # headroom for compiler scratch

    def fits(tb):
        n = tb * S
        act_io = 2 * 4 * 4 * n * Dp           # double-buffered f32 (q|k)=2n, v=n, out=n blocks
        proj_tmp = 4 * n * (3 * Dp + Fp)      # qk/v projections, FFN hidden, misc f32 temps
        attn_tmp = 16 * tb * S * S            # score / exp / prob / ctx per head iteration
        return weight_bytes + act_io + proj_tmp + attn_tmp <= budget

    divisors = [tb for tb in range(B, 0, -1) if B % tb == 0]

    def pick(step_ok):
        for tb in divisors:
            if step_ok(B // tb) and fits(tb):
                return tb
        return None

    if two_tensorcores:
        tb = (pick(lambda s: s >= 2 and s % 2 == 0)
              or pick(lambda s: s >= 2)
              or pick(lambda s: True))
    else:
        tb = pick(lambda s: True)
    return tb or 1


def _pad2(x, rows, cols):
    r, c = x.shape
    return jnp.pad(x, ((0, rows - r), (0, cols - c)))


def transformer_layer(query, key, values, params, *, n_heads,
                      batch_block=None, matmul_dtype=jnp.bfloat16,
                      single_buffer_weights=True):
    B, S, D = query.shape
    assert D % n_heads == 0
    d_k = D // n_heads
    d_ff = params["w1"].shape[0]
    cdt = matmul_dtype

    # Lane-dense padding of the model / FFN widths.
    Dp = _round_up(D, 128)
    Fp = _round_up(d_ff, 128)

    # Generation-aware VMEM limit and batch-block selection.
    phys_vmem = _tpu_vmem_bytes()
    vmem_limit = int(min(phys_vmem * 3 // 4, 100 * 1024 * 1024))
    two_tc = phys_vmem <= 96 * 1024 * 1024          # 64 MiB VMEM => v7x-class (2 TCs)
    w_item = jnp.dtype(cdt).itemsize
    weight_bytes = (2 * (2 * Dp * Dp + Dp * Fp + Fp * Dp + D * Dp) * w_item
                    + 2 * (6 * Dp + Fp) * 4)
    TB = (_pick_batch_block(B, S, Dp, Fp, weight_bytes, vmem_limit, two_tc)
          if batch_block is None else batch_block)
    assert B % TB == 0
    N = TB * S
    G = B // TB

    # ---- wrapper-side weight plumbing: pre-transpose, zero-pad, cast ----
    wk_p = _pad2(params["wk"].T, Dp, Dp).astype(cdt)     # y = x @ wk_p
    wv_p = _pad2(params["wv"].T, Dp, Dp).astype(cdt)
    wo_p = _pad2(params["wo"].T, D, Dp).astype(cdt)      # contraction over real D context cols
    w1_p = _pad2(params["w1"].T, Dp, Fp).astype(cdt)
    w2_p = _pad2(params["w2"].T, Fp, Dp).astype(cdt)
    bk_p = _pad2(params["bk"], 1, Dp)
    bv_p = _pad2(params["bv"], 1, Dp)
    bo_p = _pad2(params["bo"], 1, Dp)
    b1_p = _pad2(params["b1"], 1, Fp)
    b2_p = _pad2(params["b2"], 1, Dp)
    ln1w_p = _pad2(params["ln1w"], 1, Dp)
    ln1b_p = _pad2(params["ln1b"], 1, Dp)
    ln2w_p = _pad2(params["ln2w"], 1, Dp)
    ln2b_p = _pad2(params["ln2b"], 1, Dp)

    # q/k rows stacked wrapper-side (kq_same=1 shares k_linear): per grid step the
    # (2N, Dp) block is [q rows of this batch block ; k rows of this batch block].
    q3 = query.reshape(G, N, D)
    k3 = key.reshape(G, N, D)
    qk = jnp.concatenate([q3, k3], axis=1).reshape(G * 2 * N, D)
    qk = jnp.pad(qk, ((0, 0), (0, Dp - D)))
    v2 = jnp.pad(values.reshape(B * S, D), ((0, 0), (0, Dp - D)))

    def const_spec(shape):
        # Grid-invariant weights: single-buffered (index_map is constant anyway).
        if single_buffer_weights:
            return pl.BlockSpec(shape, lambda b: (0,) * len(shape),
                                pipeline_mode=pl.Buffered(1))
        return pl.BlockSpec(shape, lambda b: (0,) * len(shape))

    qk_spec = pl.BlockSpec((2 * N, Dp), lambda b: (b, 0))
    v_spec = pl.BlockSpec((N, Dp), lambda b: (b, 0))
    out_spec = pl.BlockSpec((N, Dp), lambda b: (b, 0))

    in_specs = [
        qk_spec, v_spec,
        const_spec((Dp, Dp)), const_spec((1, Dp)),     # k_linear
        const_spec((Dp, Dp)), const_spec((1, Dp)),     # v_linear
        const_spec((D, Dp)),  const_spec((1, Dp)),     # out_proj
        const_spec((1, Dp)),  const_spec((1, Dp)),     # layer_norm1
        const_spec((Dp, Fp)), const_spec((1, Fp)),     # linear1
        const_spec((Fp, Dp)), const_spec((1, Dp)),     # linear2
        const_spec((1, Dp)),  const_spec((1, Dp)),     # layer_norm2
    ]

    kernel = functools.partial(transformer_layer_kernel,
                               n_heads=n_heads, d_k=d_k, d_model=D, seq_len=S,
                               compute_dtype=cdt)

    out2 = pl.pallas_call(
        kernel,
        out_shape=jax.ShapeDtypeStruct((B * S, Dp), jnp.float32),
        grid=(G,),
        in_specs=in_specs,
        out_specs=out_spec,
        compiler_params=pltpu.CompilerParams(
            dimension_semantics=("parallel",),
            vmem_limit_bytes=vmem_limit,
        ),
    )(qk, v2, wk_p, bk_p, wv_p, bv_p, wo_p, bo_p,
      ln1w_p, ln1b_p, w1_p, b1_p, w2_p, b2_p, ln2w_p, ln2b_p)

    return out2[:, :D].reshape(B, S, D)


# ------------------------------ reference & demo ------------------------------

def reference_transformer_layer(query, key, values, params, *, n_heads, eps=1e-5):
    """Pure-JAX reference mirroring the PyTorch forward (eval mode)."""
    B, S, D = query.shape
    d_k = D // n_heads
    lin = lambda x, w, b: x @ w.T + b[0]
    k = lin(key, params["wk"], params["bk"]).reshape(B, S, n_heads, d_k).transpose(0, 2, 1, 3)
    q = lin(query, params["wk"], params["bk"]).reshape(B, S, n_heads, d_k).transpose(0, 2, 1, 3)
    v = lin(values, params["wv"], params["bv"]).reshape(B, S, n_heads, d_k).transpose(0, 2, 1, 3)
    scores = jnp.einsum("bhid,bhjd->bhij", q, k) / math.sqrt(d_k)
    row = jnp.arange(S)[:, None]
    col = jnp.arange(S)[None, :]
    scores = jnp.where((col < row)[None, None], scores, -1e32)
    scores = jax.nn.softmax(scores, axis=-1)
    scores = scores * (row > 0)[None, None].astype(scores.dtype)
    out = jnp.einsum("bhij,bhjd->bhid", scores, v).transpose(0, 2, 1, 3).reshape(B, S, D)
    out = lin(out, params["wo"], params["bo"])
    x = query + out
    ln = lambda x, w, b: (x - x.mean(-1, keepdims=True)) \
        / jnp.sqrt(x.var(-1, keepdims=True) + eps) * w[0] + b[0]
    x = ln(x, params["ln1w"], params["ln1b"])
    ff = lin(jax.nn.relu(lin(x, params["w1"], params["b1"])), params["w2"], params["b2"])
    return ln(x + ff, params["ln2w"], params["ln2b"])


def init_params(key, d_model, d_ff):
    """Deterministic synthetic parameters (xavier-uniform weights, zero biases for the
    attention projections, per the module's _reset_parameters)."""
    ks = jax.random.split(key, 6)

    def xavier(k, shape):
        fan_out, fan_in = shape
        bound = math.sqrt(6.0 / (fan_in + fan_out))
        return jax.random.uniform(k, shape, jnp.float32, -bound, bound)

    return {
        "wk": xavier(ks[0], (d_model, d_model)),
        "bk": jnp.zeros((1, d_model), jnp.float32),
        "wv": xavier(ks[1], (d_model, d_model)),
        "bv": jnp.zeros((1, d_model), jnp.float32),
        "wo": xavier(ks[2], (d_model, d_model)),
        "bo": jnp.zeros((1, d_model), jnp.float32),
        "ln1w": jnp.ones((1, d_model), jnp.float32),
        "ln1b": jnp.zeros((1, d_model), jnp.float32),
        "w1": xavier(ks[3], (d_ff, d_model)),
        "b1": 0.01 * jax.random.normal(ks[4], (1, d_ff), jnp.float32),
        "w2": xavier(ks[5], (d_model, d_ff)),
        "b2": jnp.zeros((1, d_model), jnp.float32),
        "ln2w": jnp.ones((1, d_model), jnp.float32),
        "ln2b": jnp.zeros((1, d_model), jnp.float32),
    }


if __name__ == "__main__":
    B, S, D = 4, 16, 32         # batch, seqlen, d_model
    n_heads, d_ff = 4, 64       # d_feature = d_model // n_heads = 8

    root = jax.random.PRNGKey(0)
    kq, kk, kv, kp = jax.random.split(root, 4)
    query = jax.random.normal(kq, (B, S, D), jnp.float32)
    key_in = jax.random.normal(kk, (B, S, D), jnp.float32)
    values = jax.random.normal(kv, (B, S, D), jnp.float32)
    params = init_params(kp, D, d_ff)

    ref = reference_transformer_layer(query, key_in, values, params, n_heads=n_heads)

    def run(mm_dtype, single_buffer):
        fwd = jax.jit(functools.partial(transformer_layer, n_heads=n_heads,
                                        matmul_dtype=mm_dtype,
                                        single_buffer_weights=single_buffer))
        return jax.block_until_ready(fwd(query, key_in, values, params))

    # Default bf16 MXU path (weights + dot operands bf16; softmax/LN/residual f32).
    single_buffer = True
    try:
        out_bf16 = run(jnp.bfloat16, single_buffer)
    except Exception:
        # TODO(synk): pl.Buffered(1) single-buffered weight blocks unsupported on this
        # JAX build; fall back to default double-buffered weights.
        single_buffer = False
        out_bf16 = run(jnp.bfloat16, single_buffer)

    assert out_bf16.shape == (B, S, D)
    err_bf16 = float(jnp.max(jnp.abs(out_bf16 - ref)))
    assert err_bf16 < 0.25, f"bf16 max abs err {err_bf16}"

    # f32 accuracy-flagged path (tight check against the PyTorch-equivalent reference).
    out_f32 = run(jnp.float32, single_buffer)
    assert out_f32.shape == (B, S, D)
    assert jnp.allclose(out_f32, ref, atol=5e-4, rtol=5e-4), \
        f"f32 max abs err {float(jnp.max(jnp.abs(out_f32 - ref)))}"

    print("KERNEL_OK")
</pallas_src>

<mosaic_0001>
module attributes {stable_mosaic.version = 11 : i64} {
  func.func @transformer_layer_kernel(%arg0: i32, %arg1: memref<64x128xf32, #tpu.memory_space<vmem>>, %arg2: memref<32x128xf32, #tpu.memory_space<vmem>>, %arg3: memref<128x128xbf16, #tpu.memory_space<vmem>>, %arg4: memref<1x128xf32, #tpu.memory_space<vmem>>, %arg5: memref<128x128xbf16, #tpu.memory_space<vmem>>, %arg6: memref<1x128xf32, #tpu.memory_space<vmem>>, %arg7: memref<32x128xbf16, #tpu.memory_space<vmem>>, %arg8: memref<1x128xf32, #tpu.memory_space<vmem>>, %arg9: memref<1x128xf32, #tpu.memory_space<vmem>>, %arg10: memref<1x128xf32, #tpu.memory_space<vmem>>, %arg11: memref<128x128xbf16, #tpu.memory_space<vmem>>, %arg12: memref<1x128xf32, #tpu.memory_space<vmem>>, %arg13: memref<128x128xbf16, #tpu.memory_space<vmem>>, %arg14: memref<1x128xf32, #tpu.memory_space<vmem>>, %arg15: memref<1x128xf32, #tpu.memory_space<vmem>>, %arg16: memref<1x128xf32, #tpu.memory_space<vmem>>, %arg17: memref<32x128xf32, #tpu.memory_space<vmem>>) attributes {dimension_semantics = [#tpu.dimension_semantics<parallel>], iteration_bounds = array<i64: 2>, scalar_prefetch = 0 : i64, scratch_operands = 0 : i64, tpu.core_type = #tpu.core_type<tc>, window_params = [{transform_indices = @transform_0, window_bounds = array<i64: 64, 128>}, {transform_indices = @transform_1, window_bounds = array<i64: 32, 128>}, {pipeline_mode = #tpu.pipeline_mode<synchronous>, transform_indices = @transform_2, window_bounds = array<i64: 128, 128>}, {pipeline_mode = #tpu.pipeline_mode<synchronous>, transform_indices = @transform_3, window_bounds = array<i64: 1, 128>}, {pipeline_mode = #tpu.pipeline_mode<synchronous>, transform_indices = @transform_4, window_bounds = array<i64: 128, 128>}, {pipeline_mode = #tpu.pipeline_mode<synchronous>, transform_indices = @transform_5, window_bounds = array<i64: 1, 128>}, {pipeline_mode = #tpu.pipeline_mode<synchronous>, transform_indices = @transform_6, window_bounds = array<i64: 32, 128>}, {pipeline_mode = #tpu.pipeline_mode<synchronous>, transform_indices = @transform_7, window_bounds = array<i64: 1, 128>}, {pipeline_mode = #tpu.pipeline_mode<synchronous>, transform_indices = @transform_8, window_bounds = array<i64: 1, 128>}, {pipeline_mode = #tpu.pipeline_mode<synchronous>, transform_indices = @transform_9, window_bounds = array<i64: 1, 128>}, {pipeline_mode = #tpu.pipeline_mode<synchronous>, transform_indices = @transform_10, window_bounds = array<i64: 128, 128>}, {pipeline_mode = #tpu.pipeline_mode<synchronous>, transform_indices = @transform_11, window_bounds = array<i64: 1, 128>}, {pipeline_mode = #tpu.pipeline_mode<synchronous>, transform_indices = @transform_12, window_bounds = array<i64: 128, 128>}, {pipeline_mode = #tpu.pipeline_mode<synchronous>, transform_indices = @transform_13, window_bounds = array<i64: 1, 128>}, {pipeline_mode = #tpu.pipeline_mode<synchronous>, transform_indices = @transform_14, window_bounds = array<i64: 1, 128>}, {pipeline_mode = #tpu.pipeline_mode<synchronous>, transform_indices = @transform_15, window_bounds = array<i64: 1, 128>}, {transform_indices = @transform_16, window_bounds = array<i64: 32, 128>}]} {
    %c0 = arith.constant 0 : index
    %c0_0 = arith.constant 0 : index
    %0 = vector.load %arg1[%c0, %c0_0] : memref<64x128xf32, #tpu.memory_space<vmem>>, vector<64x128xf32>
    %1 = vector.extract_strided_slice %0 {offsets = [0, 0], sizes = [32, 128], strides = [1, 1]} : vector<64x128xf32> to vector<32x128xf32>
    %2 = arith.truncf %0 : vector<64x128xf32> to vector<64x128xbf16>
    %c0_1 = arith.constant 0 : index
    %c0_2 = arith.constant 0 : index
    %3 = vector.load %arg3[%c0_1, %c0_2] : memref<128x128xbf16, #tpu.memory_space<vmem>>, vector<128x128xbf16>
    %cst = arith.constant dense<0.000000e+00> : vector<64x128xf32>
    %4 = tpu.matmul %2, %3, %cst {dimension_numbers = #tpu.dot_dimension_numbers<[1], [0], [0], [1], [0, 0, 1, 1], [], []>} : vector<64x128xbf16>, vector<128x128xbf16>, vector<64x128xf32> -> vector<64x128xf32>
    %c0_3 = arith.constant 0 : index
    %c0_4 = arith.constant 0 : index
    %5 = vector.load %arg4[%c0_3, %c0_4] : memref<1x128xf32, #tpu.memory_space<vmem>>, vector<1x128xf32>
    %6 = vector.broadcast %5 : vector<1x128xf32> to vector<64x128xf32>
    %7 = arith.addf %4, %6 : vector<64x128xf32>
    %c0_5 = arith.constant 0 : index
    %c0_6 = arith.constant 0 : index
    %8 = vector.load %arg2[%c0_5, %c0_6] : memref<32x128xf32, #tpu.memory_space<vmem>>, vector<32x128xf32>
    %9 = arith.truncf %8 : vector<32x128xf32> to vector<32x128xbf16>
    %c0_7 = arith.constant 0 : index
    %c0_8 = arith.constant 0 : index
    %10 = vector.load %arg5[%c0_7, %c0_8] : memref<128x128xbf16, #tpu.memory_space<vmem>>, vector<128x128xbf16>
    %cst_9 = arith.constant dense<0.000000e+00> : vector<32x128xf32>
    %11 = tpu.matmul %9, %10, %cst_9 {dimension_numbers = #tpu.dot_dimension_numbers<[1], [0], [0], [1], [0, 0, 1, 1], [], []>} : vector<32x128xbf16>, vector<128x128xbf16>, vector<32x128xf32> -> vector<32x128xf32>
    %c0_10 = arith.constant 0 : index
    %c0_11 = arith.constant 0 : index
    %12 = vector.load %arg6[%c0_10, %c0_11] : memref<1x128xf32, #tpu.memory_space<vmem>>, vector<1x128xf32>
    %13 = vector.broadcast %12 : vector<1x128xf32> to vector<32x128xf32>
    %14 = arith.addf %11, %13 : vector<32x128xf32>
    %15 = vector.extract_strided_slice %7 {offsets = [0, 0], sizes = [32, 128], strides = [1, 1]} : vector<64x128xf32> to vector<32x128xf32>
    %cst_12 = arith.constant 0.353553385 : f32
    %16 = vector.broadcast %cst_12 : f32 to vector<32x128xf32>
    %17 = arith.mulf %15, %16 : vector<32x128xf32>
    %18 = vector.extract_strided_slice %7 {offsets = [32, 0], sizes = [32, 128], strides = [1, 1]} : vector<64x128xf32> to vector<32x128xf32>
    %19 = tpu.iota {dimensions = array<i32: 1>} : vector<1x16x16xi32>
    %20 = tpu.iota {dimensions = array<i32: 2>} : vector<1x16x16xi32>
    %21 = arith.cmpi slt, %20, %19 : vector<1x16x16xi32>
    %c0_i32 = arith.constant 0 : i32
    %22 = vector.broadcast %c0_i32 : i32 to vector<1x16x16xi32>
    %23 = arith.cmpi sgt, %19, %22 : vector<1x16x16xi32>
    %24 = vector.extract_strided_slice %17 {offsets = [0, 0], sizes = [32, 8], strides = [1, 1]} : vector<32x128xf32> to vector<32x8xf32>
    %25 = vector.shape_cast %24 : vector<32x8xf32> to vector<2x16x8xf32>
    %26 = arith.truncf %25 : vector<2x16x8xf32> to vector<2x16x8xbf16>
    %27 = vector.extract_strided_slice %18 {offsets = [0, 0], sizes = [32, 8], strides = [1, 1]} : vector<32x128xf32> to vector<32x8xf32>
    %28 = vector.shape_cast %27 : vector<32x8xf32> to vector<2x16x8xf32>
    %29 = arith.truncf %28 : vector<2x16x8xf32> to vector<2x16x8xbf16>
    %30 = vector.extract_strided_slice %14 {offsets = [0, 0], sizes = [32, 8], strides = [1, 1]} : vector<32x128xf32> to vector<32x8xf32>
    %31 = vector.shape_cast %30 : vector<32x8xf32> to vector<2x16x8xf32>
    %32 = arith.truncf %31 : vector<2x16x8xf32> to vector<2x16x8xbf16>
    "tpu.trace_start"() <{level = 10 : i32, message = "bqd,bkd->bqk"}> : () -> ()
    %cst_13 = arith.constant dense<0.000000e+00> : vector<2x16x16xf32>
    %33 = tpu.matmul %26, %29, %cst_13 {dimension_numbers = #tpu.dot_dimension_numbers<[2], [2], [1], [1], [0, 0, 0, 1, 1, 1], [0], [0]>} : vector<2x16x8xbf16>, vector<2x16x8xbf16>, vector<2x16x16xf32> -> vector<2x16x16xf32>
    %cst_14 = arith.constant -1.000000e+32 : f32
    "tpu.trace_stop"() : () -> ()
    %34 = vector.shape_cast %21 : vector<1x16x16xi1> to vector<1x16x16xi1>
    %35 = vector.broadcast %34 : vector<1x16x16xi1> to vector<2x16x16xi1>
    %36 = vector.broadcast %cst_14 : f32 to vector<2x16x16xf32>
    %37 = arith.select %35, %33, %36 : vector<2x16x16xi1>, vector<2x16x16xf32>
    %cst_15 = arith.constant dense<0xFF800000> : vector<2x16xf32>
    %38 = vector.multi_reduction <maximumf>, %37, %cst_15 [2] : vector<2x16x16xf32> to vector<2x16xf32>
    %39 = vector.shape_cast %38 : vector<2x16xf32> to vector<2x16x1xf32>
    %40 = vector.broadcast %39 : vector<2x16x1xf32> to vector<2x16x16xf32>
    %41 = arith.subf %37, %40 : vector<2x16x16xf32>
    %42 = math.exp %41 : vector<2x16x16xf32>
    %cst_16 = arith.constant dense<0.000000e+00> : vector<2x16xf32>
    %43 = vector.multi_reduction <add>, %42, %cst_16 [2] : vector<2x16x16xf32> to vector<2x16xf32>
    %44 = vector.shape_cast %43 : vector<2x16xf32> to vector<2x16x1xf32>
    %45 = tpu.reciprocal %44 {approx = true} : vector<2x16x1xf32> -> vector<2x16x1xf32>
    %46 = arith.mulf %44, %45 : vector<2x16x1xf32>
    %cst_17 = arith.constant 2.000000e+00 : f32
    %47 = vector.broadcast %cst_17 : f32 to vector<2x16x1xf32>
    %48 = arith.subf %47, %46 : vector<2x16x1xf32>
    %49 = arith.mulf %45, %48 : vector<2x16x1xf32>
    %50 = vector.broadcast %49 : vector<2x16x1xf32> to vector<2x16x16xf32>
    %51 = arith.mulf %42, %50 : vector<2x16x16xf32>
    %cst_18 = arith.constant 0.000000e+00 : f32
    %52 = vector.shape_cast %23 : vector<1x16x16xi1> to vector<1x16x16xi1>
    %53 = vector.broadcast %52 : vector<1x16x16xi1> to vector<2x16x16xi1>
    %54 = vector.broadcast %cst_18 : f32 to vector<2x16x16xf32>
    %55 = arith.select %53, %51, %54 : vector<2x16x16xi1>, vector<2x16x16xf32>
    %56 = arith.truncf %55 : vector<2x16x16xf32> to vector<2x16x16xbf16>
    "tpu.trace_start"() <{level = 10 : i32, message = "bqk,bkd->bqd"}> : () -> ()
    %cst_19 = arith.constant dense<0.000000e+00> : vector<2x16x8xf32>
    %57 = tpu.matmul %56, %32, %cst_19 {dimension_numbers = #tpu.dot_dimension_numbers<[2], [1], [1], [2], [0, 0, 0, 1, 1, 2], [0], [0]>} : vector<2x16x16xbf16>, vector<2x16x8xbf16>, vector<2x16x8xf32> -> vector<2x16x8xf32>
    "tpu.trace_stop"() : () -> ()
    %58 = vector.shape_cast %57 : vector<2x16x8xf32> to vector<32x8xf32>
    %59 = vector.extract_strided_slice %17 {offsets = [0, 8], sizes = [32, 8], strides = [1, 1]} : vector<32x128xf32> to vector<32x8xf32>
    %60 = vector.shape_cast %59 : vector<32x8xf32> to vector<2x16x8xf32>
    %61 = arith.truncf %60 : vector<2x16x8xf32> to vector<2x16x8xbf16>
    %62 = vector.extract_strided_slice %18 {offsets = [0, 8], sizes = [32, 8], strides = [1, 1]} : vector<32x128xf32> to vector<32x8xf32>
    %63 = vector.shape_cast %62 : vector<32x8xf32> to vector<2x16x8xf32>
    %64 = arith.truncf %63 : vector<2x16x8xf32> to vector<2x16x8xbf16>
    %65 = vector.extract_strided_slice %14 {offsets = [0, 8], sizes = [32, 8], strides = [1, 1]} : vector<32x128xf32> to vector<32x8xf32>
    %66 = vector.shape_cast %65 : vector<32x8xf32> to vector<2x16x8xf32>
    %67 = arith.truncf %66 : vector<2x16x8xf32> to vector<2x16x8xbf16>
    "tpu.trace_start"() <{level = 10 : i32, message = "bqd,bkd->bqk"}> : () -> ()
    %cst_20 = arith.constant dense<0.000000e+00> : vector<2x16x16xf32>
    %68 = tpu.matmul %61, %64, %cst_20 {dimension_numbers = #tpu.dot_dimension_numbers<[2], [2], [1], [1], [0, 0, 0, 1, 1, 1], [0], [0]>} : vector<2x16x8xbf16>, vector<2x16x8xbf16>, vector<2x16x16xf32> -> vector<2x16x16xf32>
    %cst_21 = arith.constant -1.000000e+32 : f32
    "tpu.trace_stop"() : () -> ()
    %69 = vector.shape_cast %21 : vector<1x16x16xi1> to vector<1x16x16xi1>
    %70 = vector.broadcast %69 : vector<1x16x16xi1> to vector<2x16x16xi1>
    %71 = vector.broadcast %cst_21 : f32 to vector<2x16x16xf32>
    %72 = arith.select %70, %68, %71 : vector<2x16x16xi1>, vector<2x16x16xf32>
    %cst_22 = arith.constant dense<0xFF800000> : vector<2x16xf32>
    %73 = vector.multi_reduction <maximumf>, %72, %cst_22 [2] : vector<2x16x16xf32> to vector<2x16xf32>
    %74 = vector.shape_cast %73 : vector<2x16xf32> to vector<2x16x1xf32>
    %75 = vector.broadcast %74 : vector<2x16x1xf32> to vector<2x16x16xf32>
    %76 = arith.subf %72, %75 : vector<2x16x16xf32>
    %77 = math.exp %76 : vector<2x16x16xf32>
    %cst_23 = arith.constant dense<0.000000e+00> : vector<2x16xf32>
    %78 = vector.multi_reduction <add>, %77, %cst_23 [2] : vector<2x16x16xf32> to vector<2x16xf32>
    %79 = vector.shape_cast %78 : vector<2x16xf32> to vector<2x16x1xf32>
    %80 = tpu.reciprocal %79 {approx = true} : vector<2x16x1xf32> -> vector<2x16x1xf32>
    %81 = arith.mulf %79, %80 : vector<2x16x1xf32>
    %cst_24 = arith.constant 2.000000e+00 : f32
    %82 = vector.broadcast %cst_24 : f32 to vector<2x16x1xf32>
    %83 = arith.subf %82, %81 : vector<2x16x1xf32>
    %84 = arith.mulf %80, %83 : vector<2x16x1xf32>
    %85 = vector.broadcast %84 : vector<2x16x1xf32> to vector<2x16x16xf32>
    %86 = arith.mulf %77, %85 : vector<2x16x16xf32>
    %cst_25 = arith.constant 0.000000e+00 : f32
    %87 = vector.shape_cast %23 : vector<1x16x16xi1> to vector<1x16x16xi1>
    %88 = vector.broadcast %87 : vector<1x16x16xi1> to vector<2x16x16xi1>
    %89 = vector.broadcast %cst_25 : f32 to vector<2x16x16xf32>
    %90 = arith.select %88, %86, %89 : vector<2x16x16xi1>, vector<2x16x16xf32>
    %91 = arith.truncf %90 : vector<2x16x16xf32> to vector<2x16x16xbf16>
    "tpu.trace_start"() <{level = 10 : i32, message = "bqk,bkd->bqd"}> : () -> ()
    %cst_26 = arith.constant dense<0.000000e+00> : vector<2x16x8xf32>
    %92 = tpu.matmul %91, %67, %cst_26 {dimension_numbers = #tpu.dot_dimension_numbers<[2], [1], [1], [2], [0, 0, 0, 1, 1, 2], [0], [0]>} : vector<2x16x16xbf16>, vector<2x16x8xbf16>, vector<2x16x8xf32> -> vector<2x16x8xf32>
    "tpu.trace_stop"() : () -> ()
    %93 = vector.shape_cast %92 : vector<2x16x8xf32> to vector<32x8xf32>
    %94 = vector.extract_strided_slice %17 {offsets = [0, 16], sizes = [32, 8], strides = [1, 1]} : vector<32x128xf32> to vector<32x8xf32>
    %95 = vector.shape_cast %94 : vector<32x8xf32> to vector<2x16x8xf32>
    %96 = arith.truncf %95 : vector<2x16x8xf32> to vector<2x16x8xbf16>
    %97 = vector.extract_strided_slice %18 {offsets = [0, 16], sizes = [32, 8], strides = [1, 1]} : vector<32x128xf32> to vector<32x8xf32>
    %98 = vector.shape_cast %97 : vector<32x8xf32> to vector<2x16x8xf32>
    %99 = arith.truncf %98 : vector<2x16x8xf32> to vector<2x16x8xbf16>
    %100 = vector.extract_strided_slice %14 {offsets = [0, 16], sizes = [32, 8], strides = [1, 1]} : vector<32x128xf32> to vector<32x8xf32>
    %101 = vector.shape_cast %100 : vector<32x8xf32> to vector<2x16x8xf32>
    %102 = arith.truncf %101 : vector<2x16x8xf32> to vector<2x16x8xbf16>
    "tpu.trace_start"() <{level = 10 : i32, message = "bqd,bkd->bqk"}> : () -> ()
    %cst_27 = arith.constant dense<0.000000e+00> : vector<2x16x16xf32>
    %103 = tpu.matmul %96, %99, %cst_27 {dimension_numbers = #tpu.dot_dimension_numbers<[2], [2], [1], [1], [0, 0, 0, 1, 1, 1], [0], [0]>} : vector<2x16x8xbf16>, vector<2x16x8xbf16>, vector<2x16x16xf32> -> vector<2x16x16xf32>
    %cst_28 = arith.constant -1.000000e+32 : f32
    "tpu.trace_stop"() : () -> ()
    %104 = vector.shape_cast %21 : vector<1x16x16xi1> to vector<1x16x16xi1>
    %105 = vector.broadcast %104 : vector<1x16x16xi1> to vector<2x16x16xi1>
    %106 = vector.broadcast %cst_28 : f32 to vector<2x16x16xf32>
    %107 = arith.select %105, %103, %106 : vector<2x16x16xi1>, vector<2x16x16xf32>
    %cst_29 = arith.constant dense<0xFF800000> : vector<2x16xf32>
    %108 = vector.multi_reduction <maximumf>, %107, %cst_29 [2] : vector<2x16x16xf32> to vector<2x16xf32>
    %109 = vector.shape_cast %108 : vector<2x16xf32> to vector<2x16x1xf32>
    %110 = vector.broadcast %109 : vector<2x16x1xf32> to vector<2x16x16xf32>
    %111 = arith.subf %107, %110 : vector<2x16x16xf32>
    %112 = math.exp %111 : vector<2x16x16xf32>
    %cst_30 = arith.constant dense<0.000000e+00> : vector<2x16xf32>
    %113 = vector.multi_reduction <add>, %112, %cst_30 [2] : vector<2x16x16xf32> to vector<2x16xf32>
    %114 = vector.shape_cast %113 : vector<2x16xf32> to vector<2x16x1xf32>
    %115 = tpu.reciprocal %114 {approx = true} : vector<2x16x1xf32> -> vector<2x16x1xf32>
    %116 = arith.mulf %114, %115 : vector<2x16x1xf32>
    %cst_31 = arith.constant 2.000000e+00 : f32
    %117 = vector.broadcast %cst_31 : f32 to vector<2x16x1xf32>
    %118 = arith.subf %117, %116 : vector<2x16x1xf32>
    %119 = arith.mulf %115, %118 : vector<2x16x1xf32>
    %120 = vector.broadcast %119 : vector<2x16x1xf32> to vector<2x16x16xf32>
    %121 = arith.mulf %112, %120 : vector<2x16x16xf32>
    %cst_32 = arith.constant 0.000000e+00 : f32
    %122 = vector.shape_cast %23 : vector<1x16x16xi1> to vector<1x16x16xi1>
    %123 = vector.broadcast %122 : vector<1x16x16xi1> to vector<2x16x16xi1>
    %124 = vector.broadcast %cst_32 : f32 to vector<2x16x16xf32>
    %125 = arith.select %123, %121, %124 : vector<2x16x16xi1>, vector<2x16x16xf32>
    %126 = arith.truncf %125 : vector<2x16x16xf32> to vector<2x16x16xbf16>
    "tpu.trace_start"() <{level = 10 : i32, message = "bqk,bkd->bqd"}> : () -> ()
    %cst_33 = arith.constant dense<0.000000e+00> : vector<2x16x8xf32>
    %127 = tpu.matmul %126, %102, %cst_33 {dimension_numbers = #tpu.dot_dimension_numbers<[2], [1], [1], [2], [0, 0, 0, 1, 1, 2], [0], [0]>} : vector<2x16x16xbf16>, vector<2x16x8xbf16>, vector<2x16x8xf32> -> vector<2x16x8xf32>
    "tpu.trace_stop"() : () -> ()
    %128 = vector.shape_cast %127 : vector<2x16x8xf32> to vector<32x8xf32>
    %129 = vector.extract_strided_slice %17 {offsets = [0, 24], sizes = [32, 8], strides = [1, 1]} : vector<32x128xf32> to vector<32x8xf32>
    %130 = vector.shape_cast %129 : vector<32x8xf32> to vector<2x16x8xf32>
    %131 = arith.truncf %130 : vector<2x16x8xf32> to vector<2x16x8xbf16>
    %132 = vector.extract_strided_slice %18 {offsets = [0, 24], sizes = [32, 8], strides = [1, 1]} : vector<32x128xf32> to vector<32x8xf32>
    %133 = vector.shape_cast %132 : vector<32x8xf32> to vector<2x16x8xf32>
    %134 = arith.truncf %133 : vector<2x16x8xf32> to vector<2x16x8xbf16>
    %135 = vector.extract_strided_slice %14 {offsets = [0, 24], sizes = [32, 8], strides = [1, 1]} : vector<32x128xf32> to vector<32x8xf32>
    %136 = vector.shape_cast %135 : vector<32x8xf32> to vector<2x16x8xf32>
    %137 = arith.truncf %136 : vector<2x16x8xf32> to vector<2x16x8xbf16>
    "tpu.trace_start"() <{level = 10 : i32, message = "bqd,bkd->bqk"}> : () -> ()
    %cst_34 = arith.constant dense<0.000000e+00> : vector<2x16x16xf32>
    %138 = tpu.matmul %131, %134, %cst_34 {dimension_numbers = #tpu.dot_dimension_numbers<[2], [2], [1], [1], [0, 0, 0, 1, 1, 1], [0], [0]>} : vector<2x16x8xbf16>, vector<2x16x8xbf16>, vector<2x16x16xf32> -> vector<2x16x16xf32>
    %cst_35 = arith.constant -1.000000e+32 : f32
    "tpu.trace_stop"() : () -> ()
    %139 = vector.shape_cast %21 : vector<1x16x16xi1> to vector<1x16x16xi1>
    %140 = vector.broadcast %139 : vector<1x16x16xi1> to vector<2x16x16xi1>
    %141 = vector.broadcast %cst_35 : f32 to vector<2x16x16xf32>
    %142 = arith.select %140, %138, %141 : vector<2x16x16xi1>, vector<2x16x16xf32>
    %cst_36 = arith.constant dense<0xFF800000> : vector<2x16xf32>
    %143 = vector.multi_reduction <maximumf>, %142, %cst_36 [2] : vector<2x16x16xf32> to vector<2x16xf32>
    %144 = vector.shape_cast %143 : vector<2x16xf32> to vector<2x16x1xf32>
    %145 = vector.broadcast %144 : vector<2x16x1xf32> to vector<2x16x16xf32>
    %146 = arith.subf %142, %145 : vector<2x16x16xf32>
    %147 = math.exp %146 : vector<2x16x16xf32>
    %cst_37 = arith.constant dense<0.000000e+00> : vector<2x16xf32>
    %148 = vector.multi_reduction <add>, %147, %cst_37 [2] : vector<2x16x16xf32> to vector<2x16xf32>
    %149 = vector.shape_cast %148 : vector<2x16xf32> to vector<2x16x1xf32>
    %150 = tpu.reciprocal %149 {approx = true} : vector<2x16x1xf32> -> vector<2x16x1xf32>
    %151 = arith.mulf %149, %150 : vector<2x16x1xf32>
    %cst_38 = arith.constant 2.000000e+00 : f32
    %152 = vector.broadcast %cst_38 : f32 to vector<2x16x1xf32>
    %153 = arith.subf %152, %151 : vector<2x16x1xf32>
    %154 = arith.mulf %150, %153 : vector<2x16x1xf32>
    %155 = vector.broadcast %154 : vector<2x16x1xf32> to vector<2x16x16xf32>
    %156 = arith.mulf %147, %155 : vector<2x16x16xf32>
    %cst_39 = arith.constant 0.000000e+00 : f32
    %157 = vector.shape_cast %23 : vector<1x16x16xi1> to vector<1x16x16xi1>
    %158 = vector.broadcast %157 : vector<1x16x16xi1> to vector<2x16x16xi1>
    %159 = vector.broadcast %cst_39 : f32 to vector<2x16x16xf32>
    %160 = arith.select %158, %156, %159 : vector<2x16x16xi1>, vector<2x16x16xf32>
    %161 = arith.truncf %160 : vector<2x16x16xf32> to vector<2x16x16xbf16>
    "tpu.trace_start"() <{level = 10 : i32, message = "bqk,bkd->bqd"}> : () -> ()
    %cst_40 = arith.constant dense<0.000000e+00> : vector<2x16x8xf32>
    %162 = tpu.matmul %161, %137, %cst_40 {dimension_numbers = #tpu.dot_dimension_numbers<[2], [1], [1], [2], [0, 0, 0, 1, 1, 2], [0], [0]>} : vector<2x16x16xbf16>, vector<2x16x8xbf16>, vector<2x16x8xf32> -> vector<2x16x8xf32>
    "tpu.trace_stop"() : () -> ()
    %163 = vector.shape_cast %162 : vector<2x16x8xf32> to vector<32x8xf32>
    %164 = tpu.concatenate %58, %93, %128, %163 in 1 : vector<32x8xf32>, vector<32x8xf32>, vector<32x8xf32>, vector<32x8xf32> -> vector<32x32xf32>
    %165 = arith.truncf %164 : vector<32x32xf32> to vector<32x32xbf16>
    %c0_41 = arith.constant 0 : index
    %c0_42 = arith.constant 0 : index
    %166 = vector.load %arg7[%c0_41, %c0_42] : memref<32x128xbf16, #tpu.memory_space<vmem>>, vector<32x128xbf16>
    %cst_43 = arith.constant dense<0.000000e+00> : vector<32x128xf32>
    %167 = tpu.matmul %165, %166, %cst_43 {dimension_numbers = #tpu.dot_dimension_numbers<[1], [0], [0], [1], [0, 0, 1, 1], [], []>} : vector<32x32xbf16>, vector<32x128xbf16>, vector<32x128xf32> -> vector<32x128xf32>
    %c0_44 = arith.constant 0 : index
    %c0_45 = arith.constant 0 : index
    %168 = vector.load %arg8[%c0_44, %c0_45] : memref<1x128xf32, #tpu.memory_space<vmem>>, vector<1x128xf32>
    %169 = vector.broadcast %168 : vector<1x128xf32> to vector<32x128xf32>
    %170 = arith.addf %167, %169 : vector<32x128xf32>
    %171 = tpu.iota {dimensions = array<i32: 1>} : vector<1x128xi32>
    %c32_i32 = arith.constant 32 : i32
    %172 = vector.broadcast %c32_i32 : i32 to vector<1x128xi32>
    %173 = arith.cmpi slt, %171, %172 : vector<1x128xi32>
    %174 = arith.extui %173 : vector<1x128xi1> to vector<1x128xi32>
    %175 = arith.sitofp %174 : vector<1x128xi32> to vector<1x128xf32>
    %176 = arith.addf %1, %170 : vector<32x128xf32>
    %c0_46 = arith.constant 0 : index
    %c0_47 = arith.constant 0 : index
    %177 = vector.load %arg9[%c0_46, %c0_47] : memref<1x128xf32, #tpu.memory_space<vmem>>, vector<1x128xf32>
    %c0_48 = arith.constant 0 : index
    %c0_49 = arith.constant 0 : index
    %178 = vector.load %arg10[%c0_48, %c0_49] : memref<1x128xf32, #tpu.memory_space<vmem>>, vector<1x128xf32>
    %cst_50 = arith.constant dense<0.000000e+00> : vector<32xf32>
    %179 = vector.multi_reduction <add>, %176, %cst_50 [1] : vector<32x128xf32> to vector<32xf32>
    %180 = vector.shape_cast %179 : vector<32xf32> to vector<32x1xf32>
    %cst_51 = arith.constant 3.125000e-02 : f32
    %181 = vector.broadcast %cst_51 : f32 to vector<32x1xf32>
    %182 = arith.mulf %180, %181 : vector<32x1xf32>
    %183 = vector.broadcast %182 : vector<32x1xf32> to vector<32x128xf32>
    %184 = arith.subf %176, %183 : vector<32x128xf32>
    %185 = arith.mulf %184, %184 : vector<32x128xf32>
    %186 = vector.broadcast %175 : vector<1x128xf32> to vector<32x128xf32>
    %187 = arith.mulf %185, %186 : vector<32x128xf32>
    %cst_52 = arith.constant dense<0.000000e+00> : vector<32xf32>
    %188 = vector.multi_reduction <add>, %187, %cst_52 [1] : vector<32x128xf32> to vector<32xf32>
    %189 = vector.shape_cast %188 : vector<32xf32> to vector<32x1xf32>
    %cst_53 = arith.constant 3.125000e-02 : f32
    %190 = vector.broadcast %cst_53 : f32 to vector<32x1xf32>
    %191 = arith.mulf %189, %190 : vector<32x1xf32>
    %cst_54 = arith.constant 9.99999974E-6 : f32
    %192 = vector.broadcast %cst_54 : f32 to vector<32x1xf32>
    %193 = arith.addf %191, %192 : vector<32x1xf32>
    %194 = math.rsqrt %193 : vector<32x1xf32>
    %195 = vector.broadcast %194 : vector<32x1xf32> to vector<32x128xf32>
    %196 = arith.mulf %184, %195 : vector<32x128xf32>
    %197 = vector.broadcast %177 : vector<1x128xf32> to vector<32x128xf32>
    %198 = arith.mulf %196, %197 : vector<32x128xf32>
    %199 = vector.broadcast %178 : vector<1x128xf32> to vector<32x128xf32>
    %200 = arith.addf %198, %199 : vector<32x128xf32>
    %201 = arith.truncf %200 : vector<32x128xf32> to vector<32x128xbf16>
    %c0_55 = arith.constant 0 : index
    %c0_56 = arith.constant 0 : index
    %202 = vector.load %arg11[%c0_55, %c0_56] : memref<128x128xbf16, #tpu.memory_space<vmem>>, vector<128x128xbf16>
    %cst_57 = arith.constant dense<0.000000e+00> : vector<32x128xf32>
    %203 = tpu.matmul %201, %202, %cst_57 {dimension_numbers = #tpu.dot_dimension_numbers<[1], [0], [0], [1], [0, 0, 1, 1], [], []>} : vector<32x128xbf16>, vector<128x128xbf16>, vector<32x128xf32> -> vector<32x128xf32>
    %c0_58 = arith.constant 0 : index
    %c0_59 = arith.constant 0 : index
    %204 = vector.load %arg12[%c0_58, %c0_59] : memref<1x128xf32, #tpu.memory_space<vmem>>, vector<1x128xf32>
    %205 = vector.broadcast %204 : vector<1x128xf32> to vector<32x128xf32>
    %206 = arith.addf %203, %205 : vector<32x128xf32>
    %cst_60 = arith.constant 0.000000e+00 : f32
    %207 = vector.broadcast %cst_60 : f32 to vector<32x128xf32>
    %208 = arith.maximumf %206, %207 : vector<32x128xf32>
    %209 = arith.truncf %208 : vector<32x128xf32> to vector<32x128xbf16>
    %c0_61 = arith.constant 0 : index
    %c0_62 = arith.constant 0 : index
    %210 = vector.load %arg13[%c0_61, %c0_62] : memref<128x128xbf16, #tpu.memory_space<vmem>>, vector<128x128xbf16>
    %cst_63 = arith.constant dense<0.000000e+00> : vector<32x128xf32>
    %211 = tpu.matmul %209, %210, %cst_63 {dimension_numbers = #tpu.dot_dimension_numbers<[1], [0], [0], [1], [0, 0, 1, 1], [], []>} : vector<32x128xbf16>, vector<128x128xbf16>, vector<32x128xf32> -> vector<32x128xf32>
    %c0_64 = arith.constant 0 : index
    %c0_65 = arith.constant 0 : index
    %212 = vector.load %arg14[%c0_64, %c0_65] : memref<1x128xf32, #tpu.memory_space<vmem>>, vector<1x128xf32>
    %213 = vector.broadcast %212 : vector<1x128xf32> to vector<32x128xf32>
    %214 = arith.addf %211, %213 : vector<32x128xf32>
    %215 = arith.addf %200, %214 : vector<32x128xf32>
    %c0_66 = arith.constant 0 : index
    %c0_67 = arith.constant 0 : index
    %216 = vector.load %arg15[%c0_66, %c0_67] : memref<1x128xf32, #tpu.memory_space<vmem>>, vector<1x128xf32>
    %c0_68 = arith.constant 0 : index
    %c0_69 = arith.constant 0 : index
    %217 = vector.load %arg16[%c0_68, %c0_69] : memref<1x128xf32, #tpu.memory_space<vmem>>, vector<1x128xf32>
    %cst_70 = arith.constant dense<0.000000e+00> : vector<32xf32>
    %218 = vector.multi_reduction <add>, %215, %cst_70 [1] : vector<32x128xf32> to vector<32xf32>
    %219 = vector.shape_cast %218 : vector<32xf32> to vector<32x1xf32>
    %cst_71 = arith.constant 3.125000e-02 : f32
    %220 = vector.broadcast %cst_71 : f32 to vector<32x1xf32>
    %221 = arith.mulf %219, %220 : vector<32x1xf32>
    %222 = vector.broadcast %221 : vector<32x1xf32> to vector<32x128xf32>
    %223 = arith.subf %215, %222 : vector<32x128xf32>
    %224 = arith.mulf %223, %223 : vector<32x128xf32>
    %225 = vector.broadcast %175 : vector<1x128xf32> to vector<32x128xf32>
    %226 = arith.mulf %224, %225 : vector<32x128xf32>
    %cst_72 = arith.constant dense<0.000000e+00> : vector<32xf32>
    %227 = vector.multi_reduction <add>, %226, %cst_72 [1] : vector<32x128xf32> to vector<32xf32>
    %228 = vector.shape_cast %227 : vector<32xf32> to vector<32x1xf32>
    %cst_73 = arith.constant 3.125000e-02 : f32
    %229 = vector.broadcast %cst_73 : f32 to vector<32x1xf32>
    %230 = arith.mulf %228, %229 : vector<32x1xf32>
    %cst_74 = arith.constant 9.99999974E-6 : f32
    %231 = vector.broadcast %cst_74 : f32 to vector<32x1xf32>
    %232 = arith.addf %230, %231 : vector<32x1xf32>
    %233 = math.rsqrt %232 : vector<32x1xf32>
    %234 = vector.broadcast %233 : vector<32x1xf32> to vector<32x128xf32>
    %235 = arith.mulf %223, %234 : vector<32x128xf32>
    %236 = vector.broadcast %216 : vector<1x128xf32> to vector<32x128xf32>
    %237 = arith.mulf %235, %236 : vector<32x128xf32>
    %238 = vector.broadcast %217 : vector<1x128xf32> to vector<32x128xf32>
    %239 = arith.addf %237, %238 : vector<32x128xf32>
    %c0_75 = arith.constant 0 : index
    %c0_76 = arith.constant 0 : index
    %240 = vector.load %arg17[%c0_75, %c0_76] : memref<32x128xf32, #tpu.memory_space<vmem>>, vector<32x128xf32>
    tpu.vector_store %arg17[%c0_75, %c0_76], %239 {strides = array<i32>} : memref<32x128xf32, #tpu.memory_space<vmem>>, vector<32x128xf32>,
    return
  }
  func.func @transform_0(%arg0: i32) -> (i32, i32) {
    %c0_i32 = arith.constant 0 : i32
    %c0_i32_0 = arith.constant 0 : i32
    return %arg0, %c0_i32 : i32, i32
  }
  func.func @transform_1(%arg0: i32) -> (i32, i32) {
    %c0_i32 = arith.constant 0 : i32
    %c0_i32_0 = arith.constant 0 : i32
    return %arg0, %c0_i32 : i32, i32
  }
  func.func @transform_2(%arg0: i32) -> (i32, i32) {
    %c0_i32 = arith.constant 0 : i32
    %c0_i32_0 = arith.constant 0 : i32
    %c0_i32_1 = arith.constant 0 : i32
    return %c0_i32, %c0_i32_0 : i32, i32
  }
  func.func @transform_3(%arg0: i32) -> (i32, i32) {
    %c0_i32 = arith.constant 0 : i32
    %c0_i32_0 = arith.constant 0 : i32
    %c0_i32_1 = arith.constant 0 : i32
    return %c0_i32, %c0_i32_0 : i32, i32
  }
  func.func @transform_4(%arg0: i32) -> (i32, i32) {
    %c0_i32 = arith.constant 0 : i32
    %c0_i32_0 = arith.constant 0 : i32
    %c0_i32_1 = arith.constant 0 : i32
    return %c0_i32, %c0_i32_0 : i32, i32
  }
  func.func @transform_5(%arg0: i32) -> (i32, i32) {
    %c0_i32 = arith.constant 0 : i32
    %c0_i32_0 = arith.constant 0 : i32
    %c0_i32_1 = arith.constant 0 : i32
    return %c0_i32, %c0_i32_0 : i32, i32
  }
  func.func @transform_6(%arg0: i32) -> (i32, i32) {
    %c0_i32 = arith.constant 0 : i32
    %c0_i32_0 = arith.constant 0 : i32
    %c0_i32_1 = arith.constant 0 : i32
    return %c0_i32, %c0_i32_0 : i32, i32
  }
  func.func @transform_7(%arg0: i32) -> (i32, i32) {
    %c0_i32 = arith.constant 0 : i32
    %c0_i32_0 = arith.constant 0 : i32
    %c0_i32_1 = arith.constant 0 : i32
    return %c0_i32, %c0_i32_0 : i32, i32
  }
  func.func @transform_8(%arg0: i32) -> (i32, i32) {
    %c0_i32 = arith.constant 0 : i32
    %c0_i32_0 = arith.constant 0 : i32
    %c0_i32_1 = arith.constant 0 : i32
    return %c0_i32, %c0_i32_0 : i32, i32
  }
  func.func @transform_9(%arg0: i32) -> (i32, i32) {
    %c0_i32 = arith.constant 0 : i32
    %c0_i32_0 = arith.constant 0 : i32
    %c0_i32_1 = arith.constant 0 : i32
    return %c0_i32, %c0_i32_0 : i32, i32
  }
  func.func @transform_10(%arg0: i32) -> (i32, i32) {
    %c0_i32 = arith.constant 0 : i32
    %c0_i32_0 = arith.constant 0 : i32
    %c0_i32_1 = arith.constant 0 : i32
    return %c0_i32, %c0_i32_0 : i32, i32
  }
  func.func @transform_11(%arg0: i32) -> (i32, i32) {
    %c0_i32 = arith.constant 0 : i32
    %c0_i32_0 = arith.constant 0 : i32
    %c0_i32_1 = arith.constant 0 : i32
    return %c0_i32, %c0_i32_0 : i32, i32
  }
  func.func @transform_12(%arg0: i32) -> (i32, i32) {
    %c0_i32 = arith.constant 0 : i32
    %c0_i32_0 = arith.constant 0 : i32
    %c0_i32_1 = arith.constant 0 : i32
    return %c0_i32, %c0_i32_0 : i32, i32
  }
  func.func @transform_13(%arg0: i32) -> (i32, i32) {
    %c0_i32 = arith.constant 0 : i32
    %c0_i32_0 = arith.constant 0 : i32
    %c0_i32_1 = arith.constant 0 : i32
    return %c0_i32, %c0_i32_0 : i32, i32
  }
  func.func @transform_14(%arg0: i32) -> (i32, i32) {
    %c0_i32 = arith.constant 0 : i32
    %c0_i32_0 = arith.constant 0 : i32
    %c0_i32_1 = arith.constant 0 : i32
    return %c0_i32, %c0_i32_0 : i32, i32
  }
  func.func @transform_15(%arg0: i32) -> (i32, i32) {
    %c0_i32 = arith.constant 0 : i32
    %c0_i32_0 = arith.constant 0 : i32
    %c0_i32_1 = arith.constant 0 : i32
    return %c0_i32, %c0_i32_0 : i32, i32
  }
  func.func @transform_16(%arg0: i32) -> (i32, i32) {
    %c0_i32 = arith.constant 0 : i32
    %c0_i32_0 = arith.constant 0 : i32
    return %arg0, %c0_i32 : i32, i32
  }
}

module attributes {stable_mosaic.version = 11 : i64} {
  func.func @transformer_layer_kernel(%arg0: i32, %arg1: memref<64x128xf32, #tpu.memory_space<vmem>>, %arg2: memref<32x128xf32, #tpu.memory_space<vmem>>, %arg3: memref<128x128xbf16, #tpu.memory_space<vmem>>, %arg4: memref<1x128xf32, #tpu.memory_space<vmem>>, %arg5: memref<128x128xbf16, #tpu.memory_space<vmem>>, %arg6: memref<1x128xf32, #tpu.memory_space<vmem>>, %arg7: memref<32x128xbf16, #tpu.memory_space<vmem>>, %arg8: memref<1x128xf32, #tpu.memory_space<vmem>>, %arg9: memref<1x128xf32, #tpu.memory_space<vmem>>, %arg10: memref<1x128xf32, #tpu.memory_space<vmem>>, %arg11: memref<128x128xbf16, #tpu.memory_space<vmem>>, %arg12: memref<1x128xf32, #tpu.memory_space<vmem>>, %arg13: memref<128x128xbf16, #tpu.memory_space<vmem>>, %arg14: memref<1x128xf32, #tpu.memory_space<vmem>>, %arg15: memref<1x128xf32, #tpu.memory_space<vmem>>, %arg16: memref<1x128xf32, #tpu.memory_space<vmem>>, %arg17: memref<32x128xf32, #tpu.memory_space<vmem>>) attributes {dimension_semantics = [#tpu.dimension_semantics<parallel>], iteration_bounds = array<i64: 2>, scalar_prefetch = 0 : i64, scratch_operands = 0 : i64, tpu.core_type = #tpu.core_type<tc>, window_params = [{transform_indices = @transform_0, window_bounds = array<i64: 64, 128>}, {transform_indices = @transform_1, window_bounds = array<i64: 32, 128>}, {pipeline_mode = #tpu.pipeline_mode<synchronous>, transform_indices = @transform_2, window_bounds = array<i64: 128, 128>}, {pipeline_mode = #tpu.pipeline_mode<synchronous>, transform_indices = @transform_3, window_bounds = array<i64: 1, 128>}, {pipeline_mode = #tpu.pipeline_mode<synchronous>, transform_indices = @transform_4, window_bounds = array<i64: 128, 128>}, {pipeline_mode = #tpu.pipeline_mode<synchronous>, transform_indices = @transform_5, window_bounds = array<i64: 1, 128>}, {pipeline_mode = #tpu.pipeline_mode<synchronous>, transform_indices = @transform_6, window_bounds = array<i64: 32, 128>}, {pipeline_mode = #tpu.pipeline_mode<synchronous>, transform_indices = @transform_7, window_bounds = array<i64: 1, 128>}, {pipeline_mode = #tpu.pipeline_mode<synchronous>, transform_indices = @transform_8, window_bounds = array<i64: 1, 128>}, {pipeline_mode = #tpu.pipeline_mode<synchronous>, transform_indices = @transform_9, window_bounds = array<i64: 1, 128>}, {pipeline_mode = #tpu.pipeline_mode<synchronous>, transform_indices = @transform_10, window_bounds = array<i64: 128, 128>}, {pipeline_mode = #tpu.pipeline_mode<synchronous>, transform_indices = @transform_11, window_bounds = array<i64: 1, 128>}, {pipeline_mode = #tpu.pipeline_mode<synchronous>, transform_indices = @transform_12, window_bounds = array<i64: 128, 128>}, {pipeline_mode = #tpu.pipeline_mode<synchronous>, transform_indices = @transform_13, window_bounds = array<i64: 1, 128>}, {pipeline_mode = #tpu.pipeline_mode<synchronous>, transform_indices = @transform_14, window_bounds = array<i64: 1, 128>}, {pipeline_mode = #tpu.pipeline_mode<synchronous>, transform_indices = @transform_15, window_bounds = array<i64: 1, 128>}, {transform_indices = @transform_16, window_bounds = array<i64: 32, 128>}]} {
    %c0 = arith.constant 0 : index
    %c0_0 = arith.constant 0 : index
    %0 = vector.load %arg1[%c0, %c0_0] : memref<64x128xf32, #tpu.memory_space<vmem>>, vector<64x128xf32>
    %1 = vector.extract_strided_slice %0 {offsets = [0, 0], sizes = [32, 128], strides = [1, 1]} : vector<64x128xf32> to vector<32x128xf32>
    %2 = arith.truncf %0 : vector<64x128xf32> to vector<64x128xbf16>
    %c0_1 = arith.constant 0 : index
    %c0_2 = arith.constant 0 : index
    %3 = vector.load %arg3[%c0_1, %c0_2] : memref<128x128xbf16, #tpu.memory_space<vmem>>, vector<128x128xbf16>
    %cst = arith.constant dense<0.000000e+00> : vector<64x128xf32>
    %4 = tpu.matmul %2, %3, %cst {dimension_numbers = #tpu.dot_dimension_numbers<[1], [0], [0], [1], [0, 0, 1, 1], [], []>} : vector<64x128xbf16>, vector<128x128xbf16>, vector<64x128xf32> -> vector<64x128xf32>
    %c0_3 = arith.constant 0 : index
    %c0_4 = arith.constant 0 : index
    %5 = vector.load %arg4[%c0_3, %c0_4] : memref<1x128xf32, #tpu.memory_space<vmem>>, vector<1x128xf32>
    %6 = vector.broadcast %5 : vector<1x128xf32> to vector<64x128xf32>
    %7 = arith.addf %4, %6 : vector<64x128xf32>
    %c0_5 = arith.constant 0 : index
    %c0_6 = arith.constant 0 : index
    %8 = vector.load %arg2[%c0_5, %c0_6] : memref<32x128xf32, #tpu.memory_space<vmem>>, vector<32x128xf32>
    %9 = arith.truncf %8 : vector<32x128xf32> to vector<32x128xbf16>
    %c0_7 = arith.constant 0 : index
    %c0_8 = arith.constant 0 : index
    %10 = vector.load %arg5[%c0_7, %c0_8] : memref<128x128xbf16, #tpu.memory_space<vmem>>, vector<128x128xbf16>
    %cst_9 = arith.constant dense<0.000000e+00> : vector<32x128xf32>
    %11 = tpu.matmul %9, %10, %cst_9 {dimension_numbers = #tpu.dot_dimension_numbers<[1], [0], [0], [1], [0, 0, 1, 1], [], []>} : vector<32x128xbf16>, vector<128x128xbf16>, vector<32x128xf32> -> vector<32x128xf32>
    %c0_10 = arith.constant 0 : index
    %c0_11 = arith.constant 0 : index
    %12 = vector.load %arg6[%c0_10, %c0_11] : memref<1x128xf32, #tpu.memory_space<vmem>>, vector<1x128xf32>
    %13 = vector.broadcast %12 : vector<1x128xf32> to vector<32x128xf32>
    %14 = arith.addf %11, %13 : vector<32x128xf32>
    %15 = vector.extract_strided_slice %7 {offsets = [0, 0], sizes = [32, 128], strides = [1, 1]} : vector<64x128xf32> to vector<32x128xf32>
    %cst_12 = arith.constant 0.353553385 : f32
    %16 = vector.broadcast %cst_12 : f32 to vector<32x128xf32>
    %17 = arith.mulf %15, %16 : vector<32x128xf32>
    %18 = vector.extract_strided_slice %7 {offsets = [32, 0], sizes = [32, 128], strides = [1, 1]} : vector<64x128xf32> to vector<32x128xf32>
    %19 = tpu.iota {dimensions = array<i32: 1>} : vector<1x16x16xi32>
    %20 = tpu.iota {dimensions = array<i32: 2>} : vector<1x16x16xi32>
    %21 = arith.cmpi slt, %20, %19 : vector<1x16x16xi32>
    %c0_i32 = arith.constant 0 : i32
    %22 = vector.broadcast %c0_i32 : i32 to vector<1x16x16xi32>
    %23 = arith.cmpi sgt, %19, %22 : vector<1x16x16xi32>
    %24 = vector.extract_strided_slice %17 {offsets = [0, 0], sizes = [32, 8], strides = [1, 1]} : vector<32x128xf32> to vector<32x8xf32>
    %25 = vector.shape_cast %24 : vector<32x8xf32> to vector<2x16x8xf32>
    %26 = arith.truncf %25 : vector<2x16x8xf32> to vector<2x16x8xbf16>
    %27 = vector.extract_strided_slice %18 {offsets = [0, 0], sizes = [32, 8], strides = [1, 1]} : vector<32x128xf32> to vector<32x8xf32>
    %28 = vector.shape_cast %27 : vector<32x8xf32> to vector<2x16x8xf32>
    %29 = arith.truncf %28 : vector<2x16x8xf32> to vector<2x16x8xbf16>
    %30 = vector.extract_strided_slice %14 {offsets = [0, 0], sizes = [32, 8], strides = [1, 1]} : vector<32x128xf32> to vector<32x8xf32>
    %31 = vector.shape_cast %30 : vector<32x8xf32> to vector<2x16x8xf32>
    %32 = arith.truncf %31 : vector<2x16x8xf32> to vector<2x16x8xbf16>
    "tpu.trace_start"() <{level = 10 : i32, message = "bqd,bkd->bqk"}> : () -> ()
    %cst_13 = arith.constant dense<0.000000e+00> : vector<2x16x16xf32>
    %33 = tpu.matmul %26, %29, %cst_13 {dimension_numbers = #tpu.dot_dimension_numbers<[2], [2], [1], [1], [0, 0, 0, 1, 1, 1], [0], [0]>} : vector<2x16x8xbf16>, vector<2x16x8xbf16>, vector<2x16x16xf32> -> vector<2x16x16xf32>
    %cst_14 = arith.constant -1.000000e+32 : f32
    "tpu.trace_stop"() : () -> ()
    %34 = vector.shape_cast %21 : vector<1x16x16xi1> to vector<1x16x16xi1>
    %35 = vector.broadcast %34 : vector<1x16x16xi1> to vector<2x16x16xi1>
    %36 = vector.broadcast %cst_14 : f32 to vector<2x16x16xf32>
    %37 = arith.select %35, %33, %36 : vector<2x16x16xi1>, vector<2x16x16xf32>
    %cst_15 = arith.constant dense<0xFF800000> : vector<2x16xf32>
    %38 = vector.multi_reduction <maximumf>, %37, %cst_15 [2] : vector<2x16x16xf32> to vector<2x16xf32>
    %39 = vector.shape_cast %38 : vector<2x16xf32> to vector<2x16x1xf32>
    %40 = vector.broadcast %39 : vector<2x16x1xf32> to vector<2x16x16xf32>
    %41 = arith.subf %37, %40 : vector<2x16x16xf32>
    %42 = math.exp %41 : vector<2x16x16xf32>
    %cst_16 = arith.constant dense<0.000000e+00> : vector<2x16xf32>
    %43 = vector.multi_reduction <add>, %42, %cst_16 [2] : vector<2x16x16xf32> to vector<2x16xf32>
    %44 = vector.shape_cast %43 : vector<2x16xf32> to vector<2x16x1xf32>
    %45 = tpu.reciprocal %44 {approx = true} : vector<2x16x1xf32> -> vector<2x16x1xf32>
    %46 = arith.mulf %44, %45 : vector<2x16x1xf32>
    %cst_17 = arith.constant 2.000000e+00 : f32
    %47 = vector.broadcast %cst_17 : f32 to vector<2x16x1xf32>
    %48 = arith.subf %47, %46 : vector<2x16x1xf32>
    %49 = arith.mulf %45, %48 : vector<2x16x1xf32>
    %50 = vector.broadcast %49 : vector<2x16x1xf32> to vector<2x16x16xf32>
    %51 = arith.mulf %42, %50 : vector<2x16x16xf32>
    %cst_18 = arith.constant 0.000000e+00 : f32
    %52 = vector.shape_cast %23 : vector<1x16x16xi1> to vector<1x16x16xi1>
    %53 = vector.broadcast %52 : vector<1x16x16xi1> to vector<2x16x16xi1>
    %54 = vector.broadcast %cst_18 : f32 to vector<2x16x16xf32>
    %55 = arith.select %53, %51, %54 : vector<2x16x16xi1>, vector<2x16x16xf32>
    %56 = arith.truncf %55 : vector<2x16x16xf32> to vector<2x16x16xbf16>
    "tpu.trace_start"() <{level = 10 : i32, message = "bqk,bkd->bqd"}> : () -> ()
    %cst_19 = arith.constant dense<0.000000e+00> : vector<2x16x8xf32>
    %57 = tpu.matmul %56, %32, %cst_19 {dimension_numbers = #tpu.dot_dimension_numbers<[2], [1], [1], [2], [0, 0, 0, 1, 1, 2], [0], [0]>} : vector<2x16x16xbf16>, vector<2x16x8xbf16>, vector<2x16x8xf32> -> vector<2x16x8xf32>
    "tpu.trace_stop"() : () -> ()
    %58 = vector.shape_cast %57 : vector<2x16x8xf32> to vector<32x8xf32>
    %59 = vector.extract_strided_slice %17 {offsets = [0, 8], sizes = [32, 8], strides = [1, 1]} : vector<32x128xf32> to vector<32x8xf32>
    %60 = vector.shape_cast %59 : vector<32x8xf32> to vector<2x16x8xf32>
    %61 = arith.truncf %60 : vector<2x16x8xf32> to vector<2x16x8xbf16>
    %62 = vector.extract_strided_slice %18 {offsets = [0, 8], sizes = [32, 8], strides = [1, 1]} : vector<32x128xf32> to vector<32x8xf32>
    %63 = vector.shape_cast %62 : vector<32x8xf32> to vector<2x16x8xf32>
    %64 = arith.truncf %63 : vector<2x16x8xf32> to vector<2x16x8xbf16>
    %65 = vector.extract_strided_slice %14 {offsets = [0, 8], sizes = [32, 8], strides = [1, 1]} : vector<32x128xf32> to vector<32x8xf32>
    %66 = vector.shape_cast %65 : vector<32x8xf32> to vector<2x16x8xf32>
    %67 = arith.truncf %66 : vector<2x16x8xf32> to vector<2x16x8xbf16>
    "tpu.trace_start"() <{level = 10 : i32, message = "bqd,bkd->bqk"}> : () -> ()
    %cst_20 = arith.constant dense<0.000000e+00> : vector<2x16x16xf32>
    %68 = tpu.matmul %61, %64, %cst_20 {dimension_numbers = #tpu.dot_dimension_numbers<[2], [2], [1], [1], [0, 0, 0, 1, 1, 1], [0], [0]>} : vector<2x16x8xbf16>, vector<2x16x8xbf16>, vector<2x16x16xf32> -> vector<2x16x16xf32>
    %cst_21 = arith.constant -1.000000e+32 : f32
    "tpu.trace_stop"() : () -> ()
    %69 = vector.shape_cast %21 : vector<1x16x16xi1> to vector<1x16x16xi1>
    %70 = vector.broadcast %69 : vector<1x16x16xi1> to vector<2x16x16xi1>
    %71 = vector.broadcast %cst_21 : f32 to vector<2x16x16xf32>
    %72 = arith.select %70, %68, %71 : vector<2x16x16xi1>, vector<2x16x16xf32>
    %cst_22 = arith.constant dense<0xFF800000> : vector<2x16xf32>
    %73 = vector.multi_reduction <maximumf>, %72, %cst_22 [2] : vector<2x16x16xf32> to vector<2x16xf32>
    %74 = vector.shape_cast %73 : vector<2x16xf32> to vector<2x16x1xf32>
    %75 = vector.broadcast %74 : vector<2x16x1xf32> to vector<2x16x16xf32>
    %76 = arith.subf %72, %75 : vector<2x16x16xf32>
    %77 = math.exp %76 : vector<2x16x16xf32>
    %cst_23 = arith.constant dense<0.000000e+00> : vector<2x16xf32>
    %78 = vector.multi_reduction <add>, %77, %cst_23 [2] : vector<2x16x16xf32> to vector<2x16xf32>
    %79 = vector.shape_cast %78 : vector<2x16xf32> to vector<2x16x1xf32>
    %80 = tpu.reciprocal %79 {approx = true} : vector<2x16x1xf32> -> vector<2x16x1xf32>
    %81 = arith.mulf %79, %80 : vector<2x16x1xf32>
    %cst_24 = arith.constant 2.000000e+00 : f32
    %82 = vector.broadcast %cst_24 : f32 to vector<2x16x1xf32>
    %83 = arith.subf %82, %81 : vector<2x16x1xf32>
    %84 = arith.mulf %80, %83 : vector<2x16x1xf32>
    %85 = vector.broadcast %84 : vector<2x16x1xf32> to vector<2x16x16xf32>
    %86 = arith.mulf %77, %85 : vector<2x16x16xf32>
    %cst_25 = arith.constant 0.000000e+00 : f32
    %87 = vector.shape_cast %23 : vector<1x16x16xi1> to vector<1x16x16xi1>
    %88 = vector.broadcast %87 : vector<1x16x16xi1> to vector<2x16x16xi1>
    %89 = vector.broadcast %cst_25 : f32 to vector<2x16x16xf32>
    %90 = arith.select %88, %86, %89 : vector<2x16x16xi1>, vector<2x16x16xf32>
    %91 = arith.truncf %90 : vector<2x16x16xf32> to vector<2x16x16xbf16>
    "tpu.trace_start"() <{level = 10 : i32, message = "bqk,bkd->bqd"}> : () -> ()
    %cst_26 = arith.constant dense<0.000000e+00> : vector<2x16x8xf32>
    %92 = tpu.matmul %91, %67, %cst_26 {dimension_numbers = #tpu.dot_dimension_numbers<[2], [1], [1], [2], [0, 0, 0, 1, 1, 2], [0], [0]>} : vector<2x16x16xbf16>, vector<2x16x8xbf16>, vector<2x16x8xf32> -> vector<2x16x8xf32>
    "tpu.trace_stop"() : () -> ()
    %93 = vector.shape_cast %92 : vector<2x16x8xf32> to vector<32x8xf32>
    %94 = vector.extract_strided_slice %17 {offsets = [0, 16], sizes = [32, 8], strides = [1, 1]} : vector<32x128xf32> to vector<32x8xf32>
    %95 = vector.shape_cast %94 : vector<32x8xf32> to vector<2x16x8xf32>
    %96 = arith.truncf %95 : vector<2x16x8xf32> to vector<2x16x8xbf16>
    %97 = vector.extract_strided_slice %18 {offsets = [0, 16], sizes = [32, 8], strides = [1, 1]} : vector<32x128xf32> to vector<32x8xf32>
    %98 = vector.shape_cast %97 : vector<32x8xf32> to vector<2x16x8xf32>
    %99 = arith.truncf %98 : vector<2x16x8xf32> to vector<2x16x8xbf16>
    %100 = vector.extract_strided_slice %14 {offsets = [0, 16], sizes = [32, 8], strides = [1, 1]} : vector<32x128xf32> to vector<32x8xf32>
    %101 = vector.shape_cast %100 : vector<32x8xf32> to vector<2x16x8xf32>
    %102 = arith.truncf %101 : vector<2x16x8xf32> to vector<2x16x8xbf16>
    "tpu.trace_start"() <{level = 10 : i32, message = "bqd,bkd->bqk"}> : () -> ()
    %cst_27 = arith.constant dense<0.000000e+00> : vector<2x16x16xf32>
    %103 = tpu.matmul %96, %99, %cst_27 {dimension_numbers = #tpu.dot_dimension_numbers<[2], [2], [1], [1], [0, 0, 0, 1, 1, 1], [0], [0]>} : vector<2x16x8xbf16>, vector<2x16x8xbf16>, vector<2x16x16xf32> -> vector<2x16x16xf32>
    %cst_28 = arith.constant -1.000000e+32 : f32
    "tpu.trace_stop"() : () -> ()
    %104 = vector.shape_cast %21 : vector<1x16x16xi1> to vector<1x16x16xi1>
    %105 = vector.broadcast %104 : vector<1x16x16xi1> to vector<2x16x16xi1>
    %106 = vector.broadcast %cst_28 : f32 to vector<2x16x16xf32>
    %107 = arith.select %105, %103, %106 : vector<2x16x16xi1>, vector<2x16x16xf32>
    %cst_29 = arith.constant dense<0xFF800000> : vector<2x16xf32>
    %108 = vector.multi_reduction <maximumf>, %107, %cst_29 [2] : vector<2x16x16xf32> to vector<2x16xf32>
    %109 = vector.shape_cast %108 : vector<2x16xf32> to vector<2x16x1xf32>
    %110 = vector.broadcast %109 : vector<2x16x1xf32> to vector<2x16x16xf32>
    %111 = arith.subf %107, %110 : vector<2x16x16xf32>
    %112 = math.exp %111 : vector<2x16x16xf32>
    %cst_30 = arith.constant dense<0.000000e+00> : vector<2x16xf32>
    %113 = vector.multi_reduction <add>, %112, %cst_30 [2] : vector<2x16x16xf32> to vector<2x16xf32>
    %114 = vector.shape_cast %113 : vector<2x16xf32> to vector<2x16x1xf32>
    %115 = tpu.reciprocal %114 {approx = true} : vector<2x16x1xf32> -> vector<2x16x1xf32>
    %116 = arith.mulf %114, %115 : vector<2x16x1xf32>
    %cst_31 = arith.constant 2.000000e+00 : f32
    %117 = vector.broadcast %cst_31 : f32 to vector<2x16x1xf32>
    %118 = arith.subf %117, %116 : vector<2x16x1xf32>
    %119 = arith.mulf %115, %118 : vector<2x16x1xf32>
    %120 = vector.broadcast %119 : vector<2x16x1xf32> to vector<2x16x16xf32>
    %121 = arith.mulf %112, %120 : vector<2x16x16xf32>
    %cst_32 = arith.constant 0.000000e+00 : f32
    %122 = vector.shape_cast %23 : vector<1x16x16xi1> to vector<1x16x16xi1>
    %123 = vector.broadcast %122 : vector<1x16x16xi1> to vector<2x16x16xi1>
    %124 = vector.broadcast %cst_32 : f32 to vector<2x16x16xf32>
    %125 = arith.select %123, %121, %124 : vector<2x16x16xi1>, vector<2x16x16xf32>
    %126 = arith.truncf %125 : vector<2x16x16xf32> to vector<2x16x16xbf16>
    "tpu.trace_start"() <{level = 10 : i32, message = "bqk,bkd->bqd"}> : () -> ()
    %cst_33 = arith.constant dense<0.000000e+00> : vector<2x16x8xf32>
    %127 = tpu.matmul %126, %102, %cst_33 {dimension_numbers = #tpu.dot_dimension_numbers<[2], [1], [1], [2], [0, 0, 0, 1, 1, 2], [0], [0]>} : vector<2x16x16xbf16>, vector<2x16x8xbf16>, vector<2x16x8xf32> -> vector<2x16x8xf32>
    "tpu.trace_stop"() : () -> ()
    %128 = vector.shape_cast %127 : vector<2x16x8xf32> to vector<32x8xf32>
    %129 = vector.extract_strided_slice %17 {offsets = [0, 24], sizes = [32, 8], strides = [1, 1]} : vector<32x128xf32> to vector<32x8xf32>
    %130 = vector.shape_cast %129 : vector<32x8xf32> to vector<2x16x8xf32>
    %131 = arith.truncf %130 : vector<2x16x8xf32> to vector<2x16x8xbf16>
    %132 = vector.extract_strided_slice %18 {offsets = [0, 24], sizes = [32, 8], strides = [1, 1]} : vector<32x128xf32> to vector<32x8xf32>
    %133 = vector.shape_cast %132 : vector<32x8xf32> to vector<2x16x8xf32>
    %134 = arith.truncf %133 : vector<2x16x8xf32> to vector<2x16x8xbf16>
    %135 = vector.extract_strided_slice %14 {offsets = [0, 24], sizes = [32, 8], strides = [1, 1]} : vector<32x128xf32> to vector<32x8xf32>
    %136 = vector.shape_cast %135 : vector<32x8xf32> to vector<2x16x8xf32>
    %137 = arith.truncf %136 : vector<2x16x8xf32> to vector<2x16x8xbf16>
    "tpu.trace_start"() <{level = 10 : i32, message = "bqd,bkd->bqk"}> : () -> ()
    %cst_34 = arith.constant dense<0.000000e+00> : vector<2x16x16xf32>
    %138 = tpu.matmul %131, %134, %cst_34 {dimension_numbers = #tpu.dot_dimension_numbers<[2], [2], [1], [1], [0, 0, 0, 1, 1, 1], [0], [0]>} : vector<2x16x8xbf16>, vector<2x16x8xbf16>, vector<2x16x16xf32> -> vector<2x16x16xf32>
    %cst_35 = arith.constant -1.000000e+32 : f32
    "tpu.trace_stop"() : () -> ()
    %139 = vector.shape_cast %21 : vector<1x16x16xi1> to vector<1x16x16xi1>
    %140 = vector.broadcast %139 : vector<1x16x16xi1> to vector<2x16x16xi1>
    %141 = vector.broadcast %cst_35 : f32 to vector<2x16x16xf32>
    %142 = arith.select %140, %138, %141 : vector<2x16x16xi1>, vector<2x16x16xf32>
    %cst_36 = arith.constant dense<0xFF800000> : vector<2x16xf32>
    %143 = vector.multi_reduction <maximumf>, %142, %cst_36 [2] : vector<2x16x16xf32> to vector<2x16xf32>
    %144 = vector.shape_cast %143 : vector<2x16xf32> to vector<2x16x1xf32>
    %145 = vector.broadcast %144 : vector<2x16x1xf32> to vector<2x16x16xf32>
    %146 = arith.subf %142, %145 : vector<2x16x16xf32>
    %147 = math.exp %146 : vector<2x16x16xf32>
    %cst_37 = arith.constant dense<0.000000e+00> : vector<2x16xf32>
    %148 = vector.multi_reduction <add>, %147, %cst_37 [2] : vector<2x16x16xf32> to vector<2x16xf32>
    %149 = vector.shape_cast %148 : vector<2x16xf32> to vector<2x16x1xf32>
    %150 = tpu.reciprocal %149 {approx = true} : vector<2x16x1xf32> -> vector<2x16x1xf32>
    %151 = arith.mulf %149, %150 : vector<2x16x1xf32>
    %cst_38 = arith.constant 2.000000e+00 : f32
    %152 = vector.broadcast %cst_38 : f32 to vector<2x16x1xf32>
    %153 = arith.subf %152, %151 : vector<2x16x1xf32>
    %154 = arith.mulf %150, %153 : vector<2x16x1xf32>
    %155 = vector.broadcast %154 : vector<2x16x1xf32> to vector<2x16x16xf32>
    %156 = arith.mulf %147, %155 : vector<2x16x16xf32>
    %cst_39 = arith.constant 0.000000e+00 : f32
    %157 = vector.shape_cast %23 : vector<1x16x16xi1> to vector<1x16x16xi1>
    %158 = vector.broadcast %157 : vector<1x16x16xi1> to vector<2x16x16xi1>
    %159 = vector.broadcast %cst_39 : f32 to vector<2x16x16xf32>
    %160 = arith.select %158, %156, %159 : vector<2x16x16xi1>, vector<2x16x16xf32>
    %161 = arith.truncf %160 : vector<2x16x16xf32> to vector<2x16x16xbf16>
    "tpu.trace_start"() <{level = 10 : i32, message = "bqk,bkd->bqd"}> : () -> ()
    %cst_40 = arith.constant dense<0.000000e+00> : vector<2x16x8xf32>
    %162 = tpu.matmul %161, %137, %cst_40 {dimension_numbers = #tpu.dot_dimension_numbers<[2], [1], [1], [2], [0, 0, 0, 1, 1, 2], [0], [0]>} : vector<2x16x16xbf16>, vector<2x16x8xbf16>, vector<2x16x8xf32> -> vector<2x16x8xf32>
    "tpu.trace_stop"() : () -> ()
    %163 = vector.shape_cast %162 : vector<2x16x8xf32> to vector<32x8xf32>
    %164 = tpu.concatenate %58, %93, %128, %163 in 1 : vector<32x8xf32>, vector<32x8xf32>, vector<32x8xf32>, vector<32x8xf32> -> vector<32x32xf32>
    %165 = arith.truncf %164 : vector<32x32xf32> to vector<32x32xbf16>
    %c0_41 = arith.constant 0 : index
    %c0_42 = arith.constant 0 : index
    %166 = vector.load %arg7[%c0_41, %c0_42] : memref<32x128xbf16, #tpu.memory_space<vmem>>, vector<32x128xbf16>
    %cst_43 = arith.constant dense<0.000000e+00> : vector<32x128xf32>
    %167 = tpu.matmul %165, %166, %cst_43 {dimension_numbers = #tpu.dot_dimension_numbers<[1], [0], [0], [1], [0, 0, 1, 1], [], []>} : vector<32x32xbf16>, vector<32x128xbf16>, vector<32x128xf32> -> vector<32x128xf32>
    %c0_44 = arith.constant 0 : index
    %c0_45 = arith.constant 0 : index
    %168 = vector.load %arg8[%c0_44, %c0_45] : memref<1x128xf32, #tpu.memory_space<vmem>>, vector<1x128xf32>
    %169 = vector.broadcast %168 : vector<1x128xf32> to vector<32x128xf32>
    %170 = arith.addf %167, %169 : vector<32x128xf32>
    %171 = tpu.iota {dimensions = array<i32: 1>} : vector<1x128xi32>
    %c32_i32 = arith.constant 32 : i32
    %172 = vector.broadcast %c32_i32 : i32 to vector<1x128xi32>
    %173 = arith.cmpi slt, %171, %172 : vector<1x128xi32>
    %174 = arith.extui %173 : vector<1x128xi1> to vector<1x128xi32>
    %175 = arith.sitofp %174 : vector<1x128xi32> to vector<1x128xf32>
    %176 = arith.addf %1, %170 : vector<32x128xf32>
    %c0_46 = arith.constant 0 : index
    %c0_47 = arith.constant 0 : index
    %177 = vector.load %arg9[%c0_46, %c0_47] : memref<1x128xf32, #tpu.memory_space<vmem>>, vector<1x128xf32>
    %c0_48 = arith.constant 0 : index
    %c0_49 = arith.constant 0 : index
    %178 = vector.load %arg10[%c0_48, %c0_49] : memref<1x128xf32, #tpu.memory_space<vmem>>, vector<1x128xf32>
    %cst_50 = arith.constant dense<0.000000e+00> : vector<32xf32>
    %179 = vector.multi_reduction <add>, %176, %cst_50 [1] : vector<32x128xf32> to vector<32xf32>
    %180 = vector.shape_cast %179 : vector<32xf32> to vector<32x1xf32>
    %cst_51 = arith.constant 3.125000e-02 : f32
    %181 = vector.broadcast %cst_51 : f32 to vector<32x1xf32>
    %182 = arith.mulf %180, %181 : vector<32x1xf32>
    %183 = vector.broadcast %182 : vector<32x1xf32> to vector<32x128xf32>
    %184 = arith.subf %176, %183 : vector<32x128xf32>
    %185 = arith.mulf %184, %184 : vector<32x128xf32>
    %186 = vector.broadcast %175 : vector<1x128xf32> to vector<32x128xf32>
    %187 = arith.mulf %185, %186 : vector<32x128xf32>
    %cst_52 = arith.constant dense<0.000000e+00> : vector<32xf32>
    %188 = vector.multi_reduction <add>, %187, %cst_52 [1] : vector<32x128xf32> to vector<32xf32>
    %189 = vector.shape_cast %188 : vector<32xf32> to vector<32x1xf32>
    %cst_53 = arith.constant 3.125000e-02 : f32
    %190 = vector.broadcast %cst_53 : f32 to vector<32x1xf32>
    %191 = arith.mulf %189, %190 : vector<32x1xf32>
    %cst_54 = arith.constant 9.99999974E-6 : f32
    %192 = vector.broadcast %cst_54 : f32 to vector<32x1xf32>
    %193 = arith.addf %191, %192 : vector<32x1xf32>
    %194 = math.rsqrt %193 : vector<32x1xf32>
    %195 = vector.broadcast %194 : vector<32x1xf32> to vector<32x128xf32>
    %196 = arith.mulf %184, %195 : vector<32x128xf32>
    %197 = vector.broadcast %177 : vector<1x128xf32> to vector<32x128xf32>
    %198 = arith.mulf %196, %197 : vector<32x128xf32>
    %199 = vector.broadcast %178 : vector<1x128xf32> to vector<32x128xf32>
    %200 = arith.addf %198, %199 : vector<32x128xf32>
    %201 = arith.truncf %200 : vector<32x128xf32> to vector<32x128xbf16>
    %c0_55 = arith.constant 0 : index
    %c0_56 = arith.constant 0 : index
    %202 = vector.load %arg11[%c0_55, %c0_56] : memref<128x128xbf16, #tpu.memory_space<vmem>>, vector<128x128xbf16>
    %cst_57 = arith.constant dense<0.000000e+00> : vector<32x128xf32>
    %203 = tpu.matmul %201, %202, %cst_57 {dimension_numbers = #tpu.dot_dimension_numbers<[1], [0], [0], [1], [0, 0, 1, 1], [], []>} : vector<32x128xbf16>, vector<128x128xbf16>, vector<32x128xf32> -> vector<32x128xf32>
    %c0_58 = arith.constant 0 : index
    %c0_59 = arith.constant 0 : index
    %204 = vector.load %arg12[%c0_58, %c0_59] : memref<1x128xf32, #tpu.memory_space<vmem>>, vector<1x128xf32>
    %205 = vector.broadcast %204 : vector<1x128xf32> to vector<32x128xf32>
    %206 = arith.addf %203, %205 : vector<32x128xf32>
    %cst_60 = arith.constant 0.000000e+00 : f32
    %207 = vector.broadcast %cst_60 : f32 to vector<32x128xf32>
    %208 = arith.maximumf %206, %207 : vector<32x128xf32>
    %209 = arith.truncf %208 : vector<32x128xf32> to vector<32x128xbf16>
    %c0_61 = arith.constant 0 : index
    %c0_62 = arith.constant 0 : index
    %210 = vector.load %arg13[%c0_61, %c0_62] : memref<128x128xbf16, #tpu.memory_space<vmem>>, vector<128x128xbf16>
    %cst_63 = arith.constant dense<0.000000e+00> : vector<32x128xf32>
    %211 = tpu.matmul %209, %210, %cst_63 {dimension_numbers = #tpu.dot_dimension_numbers<[1], [0], [0], [1], [0, 0, 1, 1], [], []>} : vector<32x128xbf16>, vector<128x128xbf16>, vector<32x128xf32> -> vector<32x128xf32>
    %c0_64 = arith.constant 0 : index
    %c0_65 = arith.constant 0 : index
    %212 = vector.load %arg14[%c0_64, %c0_65] : memref<1x128xf32, #tpu.memory_space<vmem>>, vector<1x128xf32>
    %213 = vector.broadcast %212 : vector<1x128xf32> to vector<32x128xf32>
    %214 = arith.addf %211, %213 : vector<32x128xf32>
    %215 = arith.addf %200, %214 : vector<32x128xf32>
    %c0_66 = arith.constant 0 : index
    %c0_67 = arith.constant 0 : index
    %216 = vector.load %arg15[%c0_66, %c0_67] : memref<1x128xf32, #tpu.memory_space<vmem>>, vector<1x128xf32>
    %c0_68 = arith.constant 0 : index
    %c0_69 = arith.constant 0 : index
    %217 = vector.load %arg16[%c0_68, %c0_69] : memref<1x128xf32, #tpu.memory_space<vmem>>, vector<1x128xf32>
    %cst_70 = arith.constant dense<0.000000e+00> : vector<32xf32>
    %218 = vector.multi_reduction <add>, %215, %cst_70 [1] : vector<32x128xf32> to vector<32xf32>
    %219 = vector.shape_cast %218 : vector<32xf32> to vector<32x1xf32>
    %cst_71 = arith.constant 3.125000e-02 : f32
    %220 = vector.broadcast %cst_71 : f32 to vector<32x1xf32>
    %221 = arith.mulf %219, %220 : vector<32x1xf32>
    %222 = vector.broadcast %221 : vector<32x1xf32> to vector<32x128xf32>
    %223 = arith.subf %215, %222 : vector<32x128xf32>
    %224 = arith.mulf %223, %223 : vector<32x128xf32>
    %225 = vector.broadcast %175 : vector<1x128xf32> to vector<32x128xf32>
    %226 = arith.mulf %224, %225 : vector<32x128xf32>
    %cst_72 = arith.constant dense<0.000000e+00> : vector<32xf32>
    %227 = vector.multi_reduction <add>, %226, %cst_72 [1] : vector<32x128xf32> to vector<32xf32>
    %228 = vector.shape_cast %227 : vector<32xf32> to vector<32x1xf32>
    %cst_73 = arith.constant 3.125000e-02 : f32
    %229 = vector.broadcast %cst_73 : f32 to vector<32x1xf32>
    %230 = arith.mulf %228, %229 : vector<32x1xf32>
    %cst_74 = arith.constant 9.99999974E-6 : f32
    %231 = vector.broadcast %cst_74 : f32 to vector<32x1xf32>
    %232 = arith.addf %230, %231 : vector<32x1xf32>
    %233 = math.rsqrt %232 : vector<32x1xf32>
    %234 = vector.broadcast %233 : vector<32x1xf32> to vector<32x128xf32>
    %235 = arith.mulf %223, %234 : vector<32x128xf32>
    %236 = vector.broadcast %216 : vector<1x128xf32> to vector<32x128xf32>
    %237 = arith.mulf %235, %236 : vector<32x128xf32>
    %238 = vector.broadcast %217 : vector<1x128xf32> to vector<32x128xf32>
    %239 = arith.addf %237, %238 : vector<32x128xf32>
    %c0_75 = arith.constant 0 : index
    %c0_76 = arith.constant 0 : index
    %240 = vector.load %arg17[%c0_75, %c0_76] : memref<32x128xf32, #tpu.memory_space<vmem>>, vector<32x128xf32>
    tpu.vector_store %arg17[%c0_75, %c0_76], %239 {strides = array<i32>} : memref<32x128xf32, #tpu.memory_space<vmem>>, vector<32x128xf32>,
    return
  }
  func.func @transform_0(%arg0: i32) -> (i32, i32) {
    %c0_i32 = arith.constant 0 : i32
    %c0_i32_0 = arith.constant 0 : i32
    return %arg0, %c0_i32 : i32, i32
  }
  func.func @transform_1(%arg0: i32) -> (i32, i32) {
    %c0_i32 = arith.constant 0 : i32
    %c0_i32_0 = arith.constant 0 : i32
    return %arg0, %c0_i32 : i32, i32
  }
  func.func @transform_2(%arg0: i32) -> (i32, i32) {
    %c0_i32 = arith.constant 0 : i32
    %c0_i32_0 = arith.constant 0 : i32
    %c0_i32_1 = arith.constant 0 : i32
    return %c0_i32, %c0_i32_0 : i32, i32
  }
  func.func @transform_3(%arg0: i32) -> (i32, i32) {
    %c0_i32 = arith.constant 0 : i32
    %c0_i32_0 = arith.constant 0 : i32
    %c0_i32_1 = arith.constant 0 : i32
    return %c0_i32, %c0_i32_0 : i32, i32
  }
  func.func @transform_4(%arg0: i32) -> (i32, i32) {
    %c0_i32 = arith.constant 0 : i32
    %c0_i32_0 = arith.constant 0 : i32
    %c0_i32_1 = arith.constant 0 : i32
    return %c0_i32, %c0_i32_0 : i32, i32
  }
  func.func @transform_5(%arg0: i32) -> (i32, i32) {
    %c0_i32 = arith.constant 0 : i32
    %c0_i32_0 = arith.constant 0 : i32
    %c0_i32_1 = arith.constant 0 : i32
    return %c0_i32, %c0_i32_0 : i32, i32
  }
  func.func @transform_6(%arg0: i32) -> (i32, i32) {
    %c0_i32 = arith.constant 0 : i32
    %c0_i32_0 = arith.constant 0 : i32
    %c0_i32_1 = arith.constant 0 : i32
    return %c0_i32, %c0_i32_0 : i32, i32
  }
  func.func @transform_7(%arg0: i32) -> (i32, i32) {
    %c0_i32 = arith.constant 0 : i32
    %c0_i32_0 = arith.constant 0 : i32
    %c0_i32_1 = arith.constant 0 : i32
    return %c0_i32, %c0_i32_0 : i32, i32
  }
  func.func @transform_8(%arg0: i32) -> (i32, i32) {
    %c0_i32 = arith.constant 0 : i32
    %c0_i32_0 = arith.constant 0 : i32
    %c0_i32_1 = arith.constant 0 : i32
    return %c0_i32, %c0_i32_0 : i32, i32
  }
  func.func @transform_9(%arg0: i32) -> (i32, i32) {
    %c0_i32 = arith.constant 0 : i32
    %c0_i32_0 = arith.constant 0 : i32
    %c0_i32_1 = arith.constant 0 : i32
    return %c0_i32, %c0_i32_0 : i32, i32
  }
  func.func @transform_10(%arg0: i32) -> (i32, i32) {
    %c0_i32 = arith.constant 0 : i32
    %c0_i32_0 = arith.constant 0 : i32
    %c0_i32_1 = arith.constant 0 : i32
    return %c0_i32, %c0_i32_0 : i32, i32
  }
  func.func @transform_11(%arg0: i32) -> (i32, i32) {
    %c0_i32 = arith.constant 0 : i32
    %c0_i32_0 = arith.constant 0 : i32
    %c0_i32_1 = arith.constant 0 : i32
    return %c0_i32, %c0_i32_0 : i32, i32
  }
  func.func @transform_12(%arg0: i32) -> (i32, i32) {
    %c0_i32 = arith.constant 0 : i32
    %c0_i32_0 = arith.constant 0 : i32
    %c0_i32_1 = arith.constant 0 : i32
    return %c0_i32, %c0_i32_0 : i32, i32
  }
  func.func @transform_13(%arg0: i32) -> (i32, i32) {
    %c0_i32 = arith.constant 0 : i32
    %c0_i32_0 = arith.constant 0 : i32
    %c0_i32_1 = arith.constant 0 : i32
    return %c0_i32, %c0_i32_0 : i32, i32
  }
  func.func @transform_14(%arg0: i32) -> (i32, i32) {
    %c0_i32 = arith.constant 0 : i32
    %c0_i32_0 = arith.constant 0 : i32
    %c0_i32_1 = arith.constant 0 : i32
    return %c0_i32, %c0_i32_0 : i32, i32
  }
  func.func @transform_15(%arg0: i32) -> (i32, i32) {
    %c0_i32 = arith.constant 0 : i32
    %c0_i32_0 = arith.constant 0 : i32
    %c0_i32_1 = arith.constant 0 : i32
    return %c0_i32, %c0_i32_0 : i32, i32
  }
  func.func @transform_16(%arg0: i32) -> (i32, i32) {
    %c0_i32 = arith.constant 0 : i32
    %c0_i32_0 = arith.constant 0 : i32
    return %arg0, %c0_i32 : i32, i32
  }
}

</mosaic_0001>

<llo_original>
// kernel: transformer_layer.1
$region0: #{transformer_layer.1}
  #allocation0 [shape = 'u32[]', space=smem, size = 0x4, offset = 0x4, fixed_abs, tag = 'smem constant byte address 0x4 - core index']
  #allocation1 [shape = 'u32[72,128]{1,0:T(1,128)}', space=vmem, size = 0x9000, scoped, tag = 'internal scratch']
  %s0 = inlined_call_operand.vmem [shape: f32[128,128], index: 0, kind: input, shape index: {}]
  %s1 = inlined_call_operand.vmem [shape: f32[64,128], index: 1, kind: input, shape index: {}]
  %s2 = inlined_call_operand.vmem [shape: bf16[128,128], index: 2, kind: input, shape index: {}]
  %s3 = inlined_call_operand.vmem [shape: f32[1,128], index: 3, kind: input, shape index: {}]
  %s4 = inlined_call_operand.vmem [shape: bf16[128,128], index: 4, kind: input, shape index: {}]
  %s5 = inlined_call_operand.vmem [shape: f32[1,128], index: 5, kind: input, shape index: {}]
  %s6 = inlined_call_operand.vmem [shape: bf16[32,128], index: 6, kind: input, shape index: {}]
  %s7 = inlined_call_operand.vmem [shape: f32[1,128], index: 7, kind: input, shape index: {}]
  %s8 = inlined_call_operand.vmem [shape: f32[1,128], index: 8, kind: input, shape index: {}]
  %s9 = inlined_call_operand.vmem [shape: f32[1,128], index: 9, kind: input, shape index: {}]
  %s10 = inlined_call_operand.vmem [shape: bf16[128,128], index: 10, kind: input, shape index: {}]
  %s11 = inlined_call_operand.vmem [shape: f32[1,128], index: 11, kind: input, shape index: {}]
  %s12 = inlined_call_operand.vmem [shape: bf16[128,128], index: 12, kind: input, shape index: {}]
  %s13 = inlined_call_operand.vmem [shape: f32[1,128], index: 13, kind: input, shape index: {}]
  %s14 = inlined_call_operand.vmem [shape: f32[1,128], index: 14, kind: input, shape index: {}]
  %s15 = inlined_call_operand.vmem [shape: f32[1,128], index: 15, kind: input, shape index: {}]
  %s16 = inlined_call_operand.hbm [shape: f32[64,128], index: 16, kind: output, shape index: {}]
  %s17 = sld [smem:[#allocation0]]
  $region97: #{transformer_layer.1} parent=0
    _
  %s19 = ssub.s32 1, %s17
  %s20 = scalar_select 0, %s19, %s17
  $region1: #{transformer_layer.1} parent=0
    #allocation2 [shape = 'u8[32768]{0}', space=vmem, size = 0x8000, scoped, tag = 'output window, operand 0']
    #allocation3 [shape = 's32[2]{0}', space=sflag, size = 0x8, scoped, tag = 'scoped memory for transformer_layer.1']
    %21 = vsyncpa [#allocation3], 0
    %s22 = scalar_lea.sflag [#allocation3], 1
    %23 = vsyncpa %s22, 0
    loop: start=0, step=1, limit=4
    $region2: #{transformer_layer.1} parent=1 // loop_pre_header
      _
    $region3: #{transformer_layer.1} parent=1 // loop_header
      %s25 = sphi 0, %s29
      %p26 = scmp.ge.s32.totalorder %s25, 4
      %s35 = sphi 0, %s37
      %s38 = sphi 0, %s35
      %s39 = sphi 0, %s38
      %s55 = sphi 0, %s39
      %s61 = sphi 0, %s63
      %s64 = sphi 0, %s61
      %s65 = sphi 0, %s64
      %s81 = sphi 0, %s65
      %s85 = sphi 0, %s85
      %s87 = sphi 0, %s85
      %s88 = sphi 0, %s87
      %s102 = sphi 0, %s88
      %s106 = sphi 0, %s106
      %s108 = sphi 0, %s106
      %s109 = sphi 0, %s108
      %s123 = sphi 0, %s109
      %s127 = sphi 0, %s127
      %s129 = sphi 0, %s127
      %s130 = sphi 0, %s129
      %s144 = sphi 0, %s130
      %s148 = sphi 0, %s148
      %s150 = sphi 0, %s148
      %s151 = sphi 0, %s150
      %s165 = sphi 0, %s151
      %s169 = sphi 0, %s169
      %s171 = sphi 0, %s169
      %s172 = sphi 0, %s171
      %s186 = sphi 0, %s172
      %s190 = sphi 0, %s190
      %s192 = sphi 0, %s190
      %s193 = sphi 0, %s192
      %s207 = sphi 0, %s193
      %s211 = sphi 0, %s211
      %s213 = sphi 0, %s211
      %s214 = sphi 0, %s213
      %s228 = sphi 0, %s214
      %s232 = sphi 0, %s232
      %s234 = sphi 0, %s232
      %s235 = sphi 0, %s234
      %s249 = sphi 0, %s235
      %s253 = sphi 0, %s253
      %s255 = sphi 0, %s253
      %s256 = sphi 0, %s255
      %s270 = sphi 0, %s256
      %s274 = sphi 0, %s274
      %s276 = sphi 0, %s274
      %s277 = sphi 0, %s276
      %s291 = sphi 0, %s277
      %s295 = sphi 0, %s295
      %s297 = sphi 0, %s295
      %s298 = sphi 0, %s297
      %s312 = sphi 0, %s298
      %s316 = sphi 0, %s316
      %s318 = sphi 0, %s316
      %s319 = sphi 0, %s318
      %s333 = sphi 0, %s319
      %s337 = sphi 0, %s337
      %s339 = sphi 0, %s337
      %s340 = sphi 0, %s339
      %s354 = sphi 0, %s340
      %s358 = sphi 0, %s358
      %s360 = sphi 0, %s358
      %s361 = sphi 0, %s360
      %s375 = sphi 0, %s361
      %s381 = sphi 0, %s383
      %s384 = sphi 0, %s381
      %s385 = sphi 0, %s384
      %s401 = sphi 0, %s385
    $region4: #{transformer_layer.1} parent=1 // loop_header_branch
      %28 = sbr.rel (%p26) target = $region8
    $region5: #{transformer_layer.1} parent=1 // loop_body
      %s30 = ssub.s32 %s25, 1
      %s31 = ssub.s32 %s25, 2
      %s32 = sadd.s32 %s25, 1
      %s33 = ssub.s32 %s25, %s32
      %p34 = scmp.eq.s32.totalorder %s33, 0
      %s36 = sadd.s32 %s35, 1
      %s37 = scalar_select %p34, %s35, %s36
      %p40 = pneg %p34
      %p41 = scmp.eq.s32.totalorder %s25, 1
      %p42 = por %p40, %p41
      %p43 = scmp.ne.s32.totalorder %s35, %s38
      %p44 = scmp.eq.s32.totalorder %s25, 0
      %p45 = por %p43, %p44
      %p46 = scmp.ne.s32.totalorder %s35, %s38
      %p47 = scmp.eq.s32.totalorder %s30, 1
      %p48 = por %p46, %p47
      %p49 = scmp.ne.s32.totalorder %s38, %s39
      %p50 = scmp.eq.s32.totalorder %s30, 0
      %p51 = por %p49, %p50
      %p52 = scmp.ne.s32.totalorder %s38, %s39
      %p53 = scmp.eq.s32.totalorder %s31, 1
      %p54 = por %p52, %p53
      %p56 = scmp.ne.s32.totalorder %s39, %s55
      %p57 = scmp.eq.s32.totalorder %s31, 0
      %p58 = por %p56, %p57
      %s59 = ssub.s32 %s25, %s32
      %p60 = scmp.eq.s32.totalorder %s59, 0
      %s62 = sadd.s32 %s61, 1
      %s63 = scalar_select %p60, %s61, %s62
      %p66 = pneg %p60
      %p67 = scmp.eq.s32.totalorder %s25, 1
      %p68 = por %p66, %p67
      %p69 = scmp.ne.s32.totalorder %s61, %s64
      %p70 = scmp.eq.s32.totalorder %s25, 0
      %p71 = por %p69, %p70
      %p72 = scmp.ne.s32.totalorder %s61, %s64
      %p73 = scmp.eq.s32.totalorder %s30, 1
      %p74 = por %p72, %p73
      %p75 = scmp.ne.s32.totalorder %s64, %s65
      %p76 = scmp.eq.s32.totalorder %s30, 0
      %p77 = por %p75, %p76
      %p78 = scmp.ne.s32.totalorder %s64, %s65
      %p79 = scmp.eq.s32.totalorder %s31, 1
      %p80 = por %p78, %p79
      %p82 = scmp.ne.s32.totalorder %s65, %s81
      %p83 = scmp.eq.s32.totalorder %s31, 0
      %p84 = por %p82, %p83
      %s86 = sadd.s32 %s85, 1
      %p89 = scmp.eq.s32.totalorder %s25, 1
      %p90 = scmp.ne.s32.totalorder %s85, %s87
      %p91 = scmp.eq.s32.totalorder %s25, 0
      %p92 = por %p90, %p91
      %p93 = scmp.ne.s32.totalorder %s85, %s87
      %p94 = scmp.eq.s32.totalorder %s30, 1
      %p95 = por %p93, %p94
      %p96 = scmp.ne.s32.totalorder %s87, %s88
      %p97 = scmp.eq.s32.totalorder %s30, 0
      %p98 = por %p96, %p97
      %p99 = scmp.ne.s32.totalorder %s87, %s88
      %p100 = scmp.eq.s32.totalorder %s31, 1
      %p101 = por %p99, %p100
      %p103 = scmp.ne.s32.totalorder %s88, %s102
      %p104 = scmp.eq.s32.totalorder %s31, 0
      %p105 = por %p103, %p104
      %s107 = sadd.s32 %s106, 1
      %p110 = scmp.eq.s32.totalorder %s25, 1
      %p111 = scmp.ne.s32.totalorder %s106, %s108
      %p112 = scmp.eq.s32.totalorder %s25, 0
      %p113 = por %p111, %p112
      %p114 = scmp.ne.s32.totalorder %s106, %s108
      %p115 = scmp.eq.s32.totalorder %s30, 1
      %p116 = por %p114, %p115
      %p117 = scmp.ne.s32.totalorder %s108, %s109
      %p118 = scmp.eq.s32.totalorder %s30, 0
      %p119 = por %p117, %p118
      %p120 = scmp.ne.s32.totalorder %s108, %s109
      %p121 = scmp.eq.s32.totalorder %s31, 1
      %p122 = por %p120, %p121
      %p124 = scmp.ne.s32.totalorder %s109, %s123
      %p125 = scmp.eq.s32.totalorder %s31, 0
      %p126 = por %p124, %p125
      %s128 = sadd.s32 %s127, 1
      %p131 = scmp.eq.s32.totalorder %s25, 1
      %p132 = scmp.ne.s32.totalorder %s127, %s129
      %p133 = scmp.eq.s32.totalorder %s25, 0
      %p134 = por %p132, %p133
      %p135 = scmp.ne.s32.totalorder %s127, %s129
      %p136 = scmp.eq.s32.totalorder %s30, 1
      %p137 = por %p135, %p136
      %p138 = scmp.ne.s32.totalorder %s129, %s130
      %p139 = scmp.eq.s32.totalorder %s30, 0
      %p140 = por %p138, %p139
      %p141 = scmp.ne.s32.totalorder %s129, %s130
      %p142 = scmp.eq.s32.totalorder %s31, 1
      %p143 = por %p141, %p142
      %p145 = scmp.ne.s32.totalorder %s130, %s144
      %p146 = scmp.eq.s32.totalorder %s31, 0
      %p147 = por %p145, %p146
      %s149 = sadd.s32 %s148, 1
      %p152 = scmp.eq.s32.totalorder %s25, 1
      %p153 = scmp.ne.s32.totalorder %s148, %s150
      %p154 = scmp.eq.s32.totalorder %s25, 0
      %p155 = por %p153, %p154
      %p156 = scmp.ne.s32.totalorder %s148, %s150
      %p157 = scmp.eq.s32.totalorder %s30, 1
      %p158 = por %p156, %p157
      %p159 = scmp.ne.s32.totalorder %s150, %s151
      %p160 = scmp.eq.s32.totalorder %s30, 0
      %p161 = por %p159, %p160
      %p162 = scmp.ne.s32.totalorder %s150, %s151
      %p163 = scmp.eq.s32.totalorder %s31, 1
      %p164 = por %p162, %p163
      %p166 = scmp.ne.s32.totalorder %s151, %s165
      %p167 = scmp.eq.s32.totalorder %s31, 0
      %p168 = por %p166, %p167
      %s170 = sadd.s32 %s169, 1
      %p173 = scmp.eq.s32.totalorder %s25, 1
      %p174 = scmp.ne.s32.totalorder %s169, %s171
      %p175 = scmp.eq.s32.totalorder %s25, 0
      %p176 = por %p174, %p175
      %p177 = scmp.ne.s32.totalorder %s169, %s171
      %p178 = scmp.eq.s32.totalorder %s30, 1
      %p179 = por %p177, %p178
      %p180 = scmp.ne.s32.totalorder %s171, %s172
      %p181 = scmp.eq.s32.totalorder %s30, 0
      %p182 = por %p180, %p181
      %p183 = scmp.ne.s32.totalorder %s171, %s172
      %p184 = scmp.eq.s32.totalorder %s31, 1
      %p185 = por %p183, %p184
      %p187 = scmp.ne.s32.totalorder %s172, %s186
      %p188 = scmp.eq.s32.totalorder %s31, 0
      %p189 = por %p187, %p188
      %s191 = sadd.s32 %s190, 1
      %p194 = scmp.eq.s32.totalorder %s25, 1
      %p195 = scmp.ne.s32.totalorder %s190, %s192
      %p196 = scmp.eq.s32.totalorder %s25, 0
      %p197 = por %p195, %p196
      %p198 = scmp.ne.s32.totalorder %s190, %s192
      %p199 = scmp.eq.s32.totalorder %s30, 1
      %p200 = por %p198, %p199
      %p201 = scmp.ne.s32.totalorder %s192, %s193
      %p202 = scmp.eq.s32.totalorder %s30, 0
      %p203 = por %p201, %p202
      %p204 = scmp.ne.s32.totalorder %s192, %s193
      %p205 = scmp.eq.s32.totalorder %s31, 1
      %p206 = por %p204, %p205
      %p208 = scmp.ne.s32.totalorder %s193, %s207
      %p209 = scmp.eq.s32.totalorder %s31, 0
      %p210 = por %p208, %p209
      %s212 = sadd.s32 %s211, 1
      %p215 = scmp.eq.s32.totalorder %s25, 1
      %p216 = scmp.ne.s32.totalorder %s211, %s213
      %p217 = scmp.eq.s32.totalorder %s25, 0
      %p218 = por %p216, %p217
      %p219 = scmp.ne.s32.totalorder %s211, %s213
      %p220 = scmp.eq.s32.totalorder %s30, 1
      %p221 = por %p219, %p220
      %p222 = scmp.ne.s32.totalorder %s213, %s214
      %p223 = scmp.eq.s32.totalorder %s30, 0
      %p224 = por %p222, %p223
      %p225 = scmp.ne.s32.totalorder %s213, %s214
      %p226 = scmp.eq.s32.totalorder %s31, 1
      %p227 = por %p225, %p226
      %p229 = scmp.ne.s32.totalorder %s214, %s228
      %p230 = scmp.eq.s32.totalorder %s31, 0
      %p231 = por %p229, %p230
      %s233 = sadd.s32 %s232, 1
      %p236 = scmp.eq.s32.totalorder %s25, 1
      %p237 = scmp.ne.s32.totalorder %s232, %s234
      %p238 = scmp.eq.s32.totalorder %s25, 0
      %p239 = por %p237, %p238
      %p240 = scmp.ne.s32.totalorder %s232, %s234
      %p241 = scmp.eq.s32.totalorder %s30, 1
      %p242 = por %p240, %p241
      %p243 = scmp.ne.s32.totalorder %s234, %s235
      %p244 = scmp.eq.s32.totalorder %s30, 0
      %p245 = por %p243, %p244
      %p246 = scmp.ne.s32.totalorder %s234, %s235
      %p247 = scmp.eq.s32.totalorder %s31, 1
      %p248 = por %p246, %p247
      %p250 = scmp.ne.s32.totalorder %s235, %s249
      %p251 = scmp.eq.s32.totalorder %s31, 0
      %p252 = por %p250, %p251
      %s254 = sadd.s32 %s253, 1
      %p257 = scmp.eq.s32.totalorder %s25, 1
      %p258 = scmp.ne.s32.totalorder %s253, %s255
      %p259 = scmp.eq.s32.totalorder %s25, 0
      %p260 = por %p258, %p259
      %p261 = scmp.ne.s32.totalorder %s253, %s255
      %p262 = scmp.eq.s32.totalorder %s30, 1
      %p263 = por %p261, %p262
      %p264 = scmp.ne.s32.totalorder %s255, %s256
      %p265 = scmp.eq.s32.totalorder %s30, 0
      %p266 = por %p264, %p265
      %p267 = scmp.ne.s32.totalorder %s255, %s256
      %p268 = scmp.eq.s32.totalorder %s31, 1
      %p269 = por %p267, %p268
      %p271 = scmp.ne.s32.totalorder %s256, %s270
      %p272 = scmp.eq.s32.totalorder %s31, 0
      %p273 = por %p271, %p272
      %s275 = sadd.s32 %s274, 1
      %p278 = scmp.eq.s32.totalorder %s25, 1
      %p279 = scmp.ne.s32.totalorder %s274, %s276
      %p280 = scmp.eq.s32.totalorder %s25, 0
      %p281 = por %p279, %p280
      %p282 = scmp.ne.s32.totalorder %s274, %s276
      %p283 = scmp.eq.s32.totalorder %s30, 1
      %p284 = por %p282, %p283
      %p285 = scmp.ne.s32.totalorder %s276, %s277
      %p286 = scmp.eq.s32.totalorder %s30, 0
      %p287 = por %p285, %p286
      %p288 = scmp.ne.s32.totalorder %s276, %s277
      %p289 = scmp.eq.s32.totalorder %s31, 1
      %p290 = por %p288, %p289
      %p292 = scmp.ne.s32.totalorder %s277, %s291
      %p293 = scmp.eq.s32.totalorder %s31, 0
      %p294 = por %p292, %p293
      %s296 = sadd.s32 %s295, 1
      %p299 = scmp.eq.s32.totalorder %s25, 1
      %p300 = scmp.ne.s32.totalorder %s295, %s297
      %p301 = scmp.eq.s32.totalorder %s25, 0
      %p302 = por %p300, %p301
      %p303 = scmp.ne.s32.totalorder %s295, %s297
      %p304 = scmp.eq.s32.totalorder %s30, 1
      %p305 = por %p303, %p304
      %p306 = scmp.ne.s32.totalorder %s297, %s298
      %p307 = scmp.eq.s32.totalorder %s30, 0
      %p308 = por %p306, %p307
      %p309 = scmp.ne.s32.totalorder %s297, %s298
      %p310 = scmp.eq.s32.totalorder %s31, 1
      %p311 = por %p309, %p310
      %p313 = scmp.ne.s32.totalorder %s298, %s312
      %p314 = scmp.eq.s32.totalorder %s31, 0
      %p315 = por %p313, %p314
      %s317 = sadd.s32 %s316, 1
      %p320 = scmp.eq.s32.totalorder %s25, 1
      %p321 = scmp.ne.s32.totalorder %s316, %s318
      %p322 = scmp.eq.s32.totalorder %s25, 0
      %p323 = por %p321, %p322
      %p324 = scmp.ne.s32.totalorder %s316, %s318
      %p325 = scmp.eq.s32.totalorder %s30, 1
      %p326 = por %p324, %p325
      %p327 = scmp.ne.s32.totalorder %s318, %s319
      %p328 = scmp.eq.s32.totalorder %s30, 0
      %p329 = por %p327, %p328
      %p330 = scmp.ne.s32.totalorder %s318, %s319
      %p331 = scmp.eq.s32.totalorder %s31, 1
      %p332 = por %p330, %p331
      %p334 = scmp.ne.s32.totalorder %s319, %s333
      %p335 = scmp.eq.s32.totalorder %s31, 0
      %p336 = por %p334, %p335
      %s338 = sadd.s32 %s337, 1
      %p341 = scmp.eq.s32.totalorder %s25, 1
      %p342 = scmp.ne.s32.totalorder %s337, %s339
      %p343 = scmp.eq.s32.totalorder %s25, 0
      %p344 = por %p342, %p343
      %p345 = scmp.ne.s32.totalorder %s337, %s339
      %p346 = scmp.eq.s32.totalorder %s30, 1
      %p347 = por %p345, %p346
      %p348 = scmp.ne.s32.totalorder %s339, %s340
      %p349 = scmp.eq.s32.totalorder %s30, 0
      %p350 = por %p348, %p349
      %p351 = scmp.ne.s32.totalorder %s339, %s340
      %p352 = scmp.eq.s32.totalorder %s31, 1
      %p353 = por %p351, %p352
      %p355 = scmp.ne.s32.totalorder %s340, %s354
      %p356 = scmp.eq.s32.totalorder %s31, 0
      %p357 = por %p355, %p356
      %s359 = sadd.s32 %s358, 1
      %p362 = scmp.eq.s32.totalorder %s25, 1
      %p363 = scmp.ne.s32.totalorder %s358, %s360
      %p364 = scmp.eq.s32.totalorder %s25, 0
      %p365 = por %p363, %p364
      %p366 = scmp.ne.s32.totalorder %s358, %s360
      %p367 = scmp.eq.s32.totalorder %s30, 1
      %p368 = por %p366, %p367
      %p369 = scmp.ne.s32.totalorder %s360, %s361
      %p370 = scmp.eq.s32.totalorder %s30, 0
      %p371 = por %p369, %p370
      %p372 = scmp.ne.s32.totalorder %s360, %s361
      %p373 = scmp.eq.s32.totalorder %s31, 1
      %p374 = por %p372, %p373
      %p376 = scmp.ne.s32.totalorder %s361, %s375
      %p377 = scmp.eq.s32.totalorder %s31, 0
      %p378 = por %p376, %p377
      %s379 = ssub.s32 %s25, %s32
      %p380 = scmp.eq.s32.totalorder %s379, 0
      %s382 = sadd.s32 %s381, 1
      %s383 = scalar_select %p380, %s381, %s382
      %p386 = pneg %p380
      %p387 = scmp.eq.s32.totalorder %s25, 1
      %p388 = por %p386, %p387
      %p389 = scmp.ne.s32.totalorder %s381, %s384
      %p390 = scmp.eq.s32.totalorder %s25, 0
      %p391 = por %p389, %p390
      %p392 = scmp.ne.s32.totalorder %s381, %s384
      %p393 = scmp.eq.s32.totalorder %s30, 1
      %p394 = por %p392, %p393
      %p395 = scmp.ne.s32.totalorder %s384, %s385
      %p396 = scmp.eq.s32.totalorder %s30, 0
      %p397 = por %p395, %p396
      %p398 = scmp.ne.s32.totalorder %s384, %s385
      %p399 = scmp.eq.s32.totalorder %s31, 1
      %p400 = por %p398, %p399
      %p402 = scmp.ne.s32.totalorder %s385, %s401
      %p403 = scmp.eq.s32.totalorder %s31, 0
      %p404 = por %p402, %p403
      %p405 = scmp.le.s32.totalorder 1, %s25
      %p406 = scmp.lt.s32.totalorder %s25, 3
      %p407 = pnand %p405, %p406
      %p408 = pneg %p407
      // Predicated region
      $region9: #{transformer_layer.1} parent=5 // pred_check
        _
      $region10: #{transformer_layer.1} parent=5 // pred_check_branch
        %410 = sbr.rel (%p407) target = $region12
      $region11: #{transformer_layer.1} parent=5 // pred_region
        %s411 = ssub.s32 %s25, 1
        // Predicated region
        $region13: #{transformer_layer.1} parent=11 // pred_check
          %p412 = pneg %p98
        $region14: #{transformer_layer.1} parent=11 // pred_check_branch
          %414 = sbr.rel (%p412) target = $region16
        $region15: #{transformer_layer.1} parent=11 // pred_region
          _
        $region16: #{transformer_layer.1} parent=11 // pred_fallthru
          _
        // Predicated region
        $region17: #{transformer_layer.1} parent=11 // pred_check
          %p415 = pneg %p119
        $region18: #{transformer_layer.1} parent=11 // pred_check_branch
          %417 = sbr.rel (%p415) target = $region20
        $region19: #{transformer_layer.1} parent=11 // pred_region
          _
        $region20: #{transformer_layer.1} parent=11 // pred_fallthru
          _
        // Predicated region
        $region21: #{transformer_layer.1} parent=11 // pred_check
          %p418 = pneg %p140
        $region22: #{transformer_layer.1} parent=11 // pred_check_branch
          %420 = sbr.rel (%p418) target = $region24
        $region23: #{transformer_layer.1} parent=11 // pred_region
          _
        $region24: #{transformer_layer.1} parent=11 // pred_fallthru
          _
        // Predicated region
        $region25: #{transformer_layer.1} parent=11 // pred_check
          %p421 = pneg %p161
        $region26: #{transformer_layer.1} parent=11 // pred_check_branch
          %423 = sbr.rel (%p421) target = $region28
        $region27: #{transformer_layer.1} parent=11 // pred_region
          _
        $region28: #{transformer_layer.1} parent=11 // pred_fallthru
          _
        // Predicated region
        $region29: #{transformer_layer.1} parent=11 // pred_check
          %p424 = pneg %p182
        $region30: #{transformer_layer.1} parent=11 // pred_check_branch
          %426 = sbr.rel (%p424) target = $region32
        $region31: #{transformer_layer.1} parent=11 // pred_region
          _
        $region32: #{transformer_layer.1} parent=11 // pred_fallthru
          _
        // Predicated region
        $region33: #{transformer_layer.1} parent=11 // pred_check
          %p427 = pneg %p203
        $region34: #{transformer_layer.1} parent=11 // pred_check_branch
          %429 = sbr.rel (%p427) target = $region36
        $region35: #{transformer_layer.1} parent=11 // pred_region
          _
        $region36: #{transformer_layer.1} parent=11 // pred_fallthru
          _
        // Predicated region
        $region37: #{transformer_layer.1} parent=11 // pred_check
          %p430 = pneg %p224
        $region38: #{transformer_layer.1} parent=11 // pred_check_branch
          %432 = sbr.rel (%p430) target = $region40
        $region39: #{transformer_layer.1} parent=11 // pred_region
          _
        $region40: #{transformer_layer.1} parent=11 // pred_fallthru
          _
        // Predicated region
        $region41: #{transformer_layer.1} parent=11 // pred_check
          %p433 = pneg %p245
        $region42: #{transformer_layer.1} parent=11 // pred_check_branch
          %435 = sbr.rel (%p433) target = $region44
        $region43: #{transformer_layer.1} parent=11 // pred_region
          _
        $region44: #{transformer_layer.1} parent=11 // pred_fallthru
          _
        // Predicated region
        $region45: #{transformer_layer.1} parent=11 // pred_check
          %p436 = pneg %p266
        $region46: #{transformer_layer.1} parent=11 // pred_check_branch
          %438 = sbr.rel (%p436) target = $region48
        $region47: #{transformer_layer.1} parent=11 // pred_region
          _
        $region48: #{transformer_layer.1} parent=11 // pred_fallthru
          _
        // Predicated region
        $region49: #{transformer_layer.1} parent=11 // pred_check
          %p439 = pneg %p287
        $region50: #{transformer_layer.1} parent=11 // pred_check_branch
          %441 = sbr.rel (%p439) target = $region52
        $region51: #{transformer_layer.1} parent=11 // pred_region
          _
        $region52: #{transformer_layer.1} parent=11 // pred_fallthru
          _
        // Predicated region
        $region53: #{transformer_layer.1} parent=11 // pred_check
          %p442 = pneg %p308
        $region54: #{transformer_layer.1} parent=11 // pred_check_branch
          %444 = sbr.rel (%p442) target = $region56
        $region55: #{transformer_layer.1} parent=11 // pred_region
          _
        $region56: #{transformer_layer.1} parent=11 // pred_fallthru
          _
        // Predicated region
        $region57: #{transformer_layer.1} parent=11 // pred_check
          %p445 = pneg %p329
        $region58: #{transformer_layer.1} parent=11 // pred_check_branch
          %447 = sbr.rel (%p445) target = $region60
        $region59: #{transformer_layer.1} parent=11 // pred_region
          _
        $region60: #{transformer_layer.1} parent=11 // pred_fallthru
          _
        // Predicated region
        $region61: #{transformer_layer.1} parent=11 // pred_check
          %p448 = pneg %p350
        $region62: #{transformer_layer.1} parent=11 // pred_check_branch
          %450 = sbr.rel (%p448) target = $region64
        $region63: #{transformer_layer.1} parent=11 // pred_region
          _
        $region64: #{transformer_layer.1} parent=11 // pred_fallthru
          _
        // Predicated region
        $region65: #{transformer_layer.1} parent=11 // pred_check
          %p451 = pneg %p371
        $region66: #{transformer_layer.1} parent=11 // pred_check_branch
          %453 = sbr.rel (%p451) target = $region68
        $region67: #{transformer_layer.1} parent=11 // pred_region
          _
        $region68: #{transformer_layer.1} parent=11 // pred_fallthru
          _
      $region12: #{transformer_layer.1} parent=5 // pred_fallthru
        _
      %p454 = scmp.lt.s32.totalorder %s25, 2
      // Predicated region
      $region69: #{transformer_layer.1} parent=5 // pred_check
        %p455 = pneg %p454
      $region70: #{transformer_layer.1} parent=5 // pred_check_branch
        %457 = sbr.rel (%p455) target = $region72
      $region71: #{transformer_layer.1} parent=5 // pred_region
        // Predicated region
        $region73: #{transformer_layer.1} parent=71 // pred_check
          %p458 = pneg %p45
        $region74: #{transformer_layer.1} parent=71 // pred_check_branch
          %460 = sbr.rel (%p458) target = $region76
        $region75: #{transformer_layer.1} parent=71 // pred_region
          %s461 = smul.u32 8, %s25
          %p462 = scmp.lt.s32.totalorder %s461, 15
          %s463 = scalar_select %p462, %s461, 15
          %s464 = smul.addr %s463, 8
          %s465 = scalar_lea.vmem %s0, %s464
          %s466 = smul.u32 8, %s25
        $region76: #{transformer_layer.1} parent=71 // pred_fallthru
          _
        // Predicated region
        $region77: #{transformer_layer.1} parent=71 // pred_check
          %p467 = pneg %p71
        $region78: #{transformer_layer.1} parent=71 // pred_check_branch
          %469 = sbr.rel (%p467) target = $region80
        $region79: #{transformer_layer.1} parent=71 // pred_region
          %s470 = smul.u32 4, %s25
          %p471 = scmp.lt.s32.totalorder %s470, 7
          %s472 = scalar_select %p471, %s470, 7
          %s473 = smul.addr %s472, 8
          %s474 = scalar_lea.vmem %s1, %s473
          %s475 = smul.u32 4, %s25
        $region80: #{transformer_layer.1} parent=71 // pred_fallthru
          _
      $region72: #{transformer_layer.1} parent=5 // pred_fallthru
        _
      %p476 = scmp.le.s32.totalorder 1, %s25
      %p477 = scmp.lt.s32.totalorder %s25, 3
      %p478 = pnand %p476, %p477
      %p479 = pneg %p478
      // Predicated region
      $region81: #{transformer_layer.1} parent=5 // pred_check
        _
      $region82: #{transformer_layer.1} parent=5 // pred_check_branch
        %481 = sbr.rel (%p478) target = $region84
      $region83: #{transformer_layer.1} parent=5 // pred_region
        %s482 = ssub.s32 %s25, 1
        %s483 = smul.u32 8, %s30
        %p484 = scmp.lt.s32.totalorder %s483, 15
        %s485 = scalar_select %p484, %s483, 15
        %s486 = smul.addr %s485, 8
        %s487 = scalar_lea.vmem %s0, %s486
        %p488 = pneg %p51
        %p489 = pneg %p48
        %s490 = smul.u32 4, %s30
        %p491 = scmp.lt.s32.totalorder %s490, 7
        %s492 = scalar_select %p491, %s490, 7
        %s493 = smul.addr %s492, 8
        %s494 = scalar_lea.vmem %s1, %s493
        %p495 = pneg %p77
        %p496 = pneg %p74
        %p497 = pneg %p98
        %p498 = pneg %p95
        %p499 = pneg %p119
        %p500 = pneg %p116
        %p501 = pneg %p140
        %p502 = pneg %p137
        %p503 = pneg %p161
        %p504 = pneg %p158
        %p505 = pneg %p182
        %p506 = pneg %p179
        %p507 = pneg %p203
        %p508 = pneg %p200
        %p509 = pneg %p224
        %p510 = pneg %p221
        %p511 = pneg %p245
        %p512 = pneg %p242
        %p513 = pneg %p266
        %p514 = pneg %p263
        %p515 = pneg %p287
        %p516 = pneg %p284
        %p517 = pneg %p308
        %p518 = pneg %p305
        %p519 = pneg %p329
        %p520 = pneg %p326
        %p521 = pneg %p350
        %p522 = pneg %p347
        %p523 = pneg %p371
        %p524 = pneg %p368
        %p525 = pneg %p397
        %p526 = pneg %p394
        %s527 = sand.u32 %s384, 1
        %s528 = scalar_lea.sflag [#allocation3], %s527
        %s529 = sand.u32 %s384, 1
        %s530 = smul.addr %s529, 32
        %s531 = scalar_lea.vmem [#allocation2], %s530
        %s532 = smul.u32 8, %s30
        %p533 = scmp.lt.s32.totalorder %s532, 15
        %s534 = scalar_select %p533, %s532, 15
        %s535 = smul.addr %s534, 8
        %s536 = scalar_lea.vmem %s0, %s535
        %s537 = smul.u32 8, %s30
        %s538 = smul.u32 4, %s30
        %p539 = scmp.lt.s32.totalorder %s538, 7
        %s540 = scalar_select %p539, %s538, 7
        %s541 = smul.addr %s540, 8
        %s542 = scalar_lea.vmem %s1, %s541
        %s543 = smul.u32 4, %s30
        %s544 = smul.u32 4, %s30
        %v546 = vld [vmem:[%s536] sm:$0xff]
        %v547 = vld [vmem:[%s536 + $0x8] sm:$0xff]
        %v548 = vld [vmem:[%s536 + $0x10] sm:$0xff]
        %v549 = vld [vmem:[%s536 + $0x18] sm:$0xff]
        %v550 = vld [vmem:[%s536 + $0x20] sm:$0xff]
        %v551 = vld [vmem:[%s536 + $0x28] sm:$0xff]
        %v552 = vld [vmem:[%s536 + $0x30] sm:$0xff]
        %v553 = vld [vmem:[%s536 + $0x38] sm:$0xff]
        %v554 = vpack.c.bf16 %v547, %v546
        %v555 = vpack.c.bf16 %v549, %v548
        %v556 = vpack.c.bf16 %v551, %v550
        %v557 = vpack.c.bf16 %v553, %v552
        %v558 = vld [vmem:[%s2] sm:$0xf]
        %v559 = vld [vmem:[%s2 + $0x4] sm:$0xf]
        %v560 = vld [vmem:[%s2 + $0x8] sm:$0xf]
        %v561 = vld [vmem:[%s2 + $0xc] sm:$0xf]
        %v562 = vld [vmem:[%s2 + $0x10] sm:$0xf]
        %v563 = vld [vmem:[%s2 + $0x14] sm:$0xf]
        %v564 = vld [vmem:[%s2 + $0x18] sm:$0xf]
        %v565 = vld [vmem:[%s2 + $0x1c] sm:$0xf]
        %v566 = vld [vmem:[%s2 + $0x20] sm:$0xf]
        %v567 = vld [vmem:[%s2 + $0x24] sm:$0xf]
        %v568 = vld [vmem:[%s2 + $0x28] sm:$0xf]
        %v569 = vld [vmem:[%s2 + $0x2c] sm:$0xf]
        %v570 = vld [vmem:[%s2 + $0x30] sm:$0xf]
        %v571 = vld [vmem:[%s2 + $0x34] sm:$0xf]
        %v572 = vld [vmem:[%s2 + $0x38] sm:$0xf]
        %v573 = vld [vmem:[%s2 + $0x3c] sm:$0xf]
        %v574 = vld [vmem:[%s3] sm:$0x1]
        %v576 = vperm.slane %v574, 0
        %v594 = vunpack.c.l.b16 %v558
        %v595 = vunpack.c.l.b16 %v559
        %v596 = vunpack.c.l.b16 %v560
        %v597 = vunpack.c.l.b16 %v561
        %v598 = vunpack.c.l.b16 %v562
        %v599 = vunpack.c.l.b16 %v563
        %v600 = vunpack.c.l.b16 %v564
        %v601 = vunpack.c.l.b16 %v565
        %v602 = vunpack.c.l.b16 %v566
        %v603 = vunpack.c.l.b16 %v567
        %v604 = vunpack.c.l.b16 %v568
        %v605 = vunpack.c.l.b16 %v569
        %v606 = vunpack.c.l.b16 %v570
        %v607 = vunpack.c.l.b16 %v571
        %v608 = vunpack.c.l.b16 %v572
        %v609 = vunpack.c.l.b16 %v573
        %v610 = vpack.c.b16 %v595, %v594
        %v611 = vpack.c.b16 %v597, %v596
        %v612 = vpack.c.b16 %v599, %v598
        %v613 = vpack.c.b16 %v601, %v600
        %v614 = vpack.c.b16 %v603, %v602
        %v615 = vpack.c.b16 %v605, %v604
        %v616 = vpack.c.b16 %v607, %v606
        %v617 = vpack.c.b16 %v609, %v608
        %626 = vmatpush.bf16.msra.mxu0 %v617
        %627 = vmatpush.bf16.msra.mxu0 %v616
        %628 = vmatpush.bf16.msra.mxu0 %v615
        %629 = vmatpush.bf16.msra.mxu0 %v614
        %630 = vmatpush.bf16.msra.mxu0 %v613
        %631 = vmatpush.bf16.msra.mxu0 %v612
        %632 = vmatpush.bf16.msra.mxu0 %v611
        %633 = vmatpush.bf16.msra.mxu0 %v610
        %634 = vmatmul.bf16.gmra.mxu0 %v554
        %v635 = vpop.f32.mrf.mxu0
        %v636 = vadd.f32 %v576, %v635
        %v637 = vpop.f32.mrf.mxu0
        %v638 = vadd.f32 %v576, %v637
        %639 = vmatmul.bf16.gmra.mxu0 %v555
        %v640 = vpop.f32.mrf.mxu0
        %v641 = vadd.f32 %v576, %v640
        %v642 = vpop.f32.mrf.mxu0
        %v643 = vadd.f32 %v576, %v642
        %644 = vmatmul.bf16.gmra.mxu0 %v556
        %v645 = vpop.f32.mrf.mxu0
        %v646 = vadd.f32 %v576, %v645
        %v647 = vpop.f32.mrf.mxu0
        %v648 = vadd.f32 %v576, %v647
        %649 = vmatmul.bf16.gmra.mxu0 %v557
        %v650 = vpop.f32.mrf.mxu0
        %v651 = vadd.f32 %v576, %v650
        %v652 = vpop.f32.mrf.mxu0
        %v653 = vadd.f32 %v576, %v652
        %654 = vdwg.mxu0
        %v655 = vld [vmem:[%s542] sm:$0xff]
        %v656 = vld [vmem:[%s542 + $0x8] sm:$0xff]
        %v657 = vld [vmem:[%s542 + $0x10] sm:$0xff]
        %v658 = vld [vmem:[%s542 + $0x18] sm:$0xff]
        %v659 = vpack.c.bf16 %v656, %v655
        %v660 = vpack.c.bf16 %v658, %v657
        %v661 = vld [vmem:[%s4] sm:$0xf]
        %v662 = vld [vmem:[%s4 + $0x4] sm:$0xf]
        %v663 = vld [vmem:[%s4 + $0x8] sm:$0xf]
        %v664 = vld [vmem:[%s4 + $0xc] sm:$0xf]
        %v665 = vld [vmem:[%s4 + $0x10] sm:$0xf]
        %v666 = vld [vmem:[%s4 + $0x14] sm:$0xf]
        %v667 = vld [vmem:[%s4 + $0x18] sm:$0xf]
        %v668 = vld [vmem:[%s4 + $0x1c] sm:$0xf]
        %v669 = vld [vmem:[%s4 + $0x20] sm:$0xf]
        %v670 = vld [vmem:[%s4 + $0x24] sm:$0xf]
        %v671 = vld [vmem:[%s4 + $0x28] sm:$0xf]
        %v672 = vld [vmem:[%s4 + $0x2c] sm:$0xf]
        %v673 = vld [vmem:[%s4 + $0x30] sm:$0xf]
        %v674 = vld [vmem:[%s4 + $0x34] sm:$0xf]
        %v675 = vld [vmem:[%s4 + $0x38] sm:$0xf]
        %v676 = vld [vmem:[%s4 + $0x3c] sm:$0xf]
        %v677 = vld [vmem:[%s5] sm:$0x1]
        %v679 = vperm.slane %v677, 0
        %v697 = vunpack.c.l.b16 %v661
        %v698 = vunpack.c.l.b16 %v662
        %v699 = vunpack.c.l.b16 %v663
        %v700 = vunpack.c.l.b16 %v664
        %v701 = vunpack.c.l.b16 %v665
        %v702 = vunpack.c.l.b16 %v666
        %v703 = vunpack.c.l.b16 %v667
        %v704 = vunpack.c.l.b16 %v668
        %v705 = vunpack.c.l.b16 %v669
        %v706 = vunpack.c.l.b16 %v670
        %v707 = vunpack.c.l.b16 %v671
        %v708 = vunpack.c.l.b16 %v672
        %v709 = vunpack.c.l.b16 %v673
        %v710 = vunpack.c.l.b16 %v674
        %v711 = vunpack.c.l.b16 %v675
        %v712 = vunpack.c.l.b16 %v676
        %v713 = vpack.c.b16 %v698, %v697
        %v714 = vpack.c.b16 %v700, %v699
        %v715 = vpack.c.b16 %v702, %v701
        %v716 = vpack.c.b16 %v704, %v703
        %v717 = vpack.c.b16 %v706, %v705
        %v718 = vpack.c.b16 %v708, %v707
        %v719 = vpack.c.b16 %v710, %v709
        %v720 = vpack.c.b16 %v712, %v711
        %729 = vmatpush.bf16.msra.mxu0 %v720
        %730 = vmatpush.bf16.msra.mxu0 %v719
        %731 = vmatpush.bf16.msra.mxu0 %v718
        %732 = vmatpush.bf16.msra.mxu0 %v717
        %733 = vmatpush.bf16.msra.mxu0 %v716
        %734 = vmatpush.bf16.msra.mxu0 %v715
        %735 = vmatpush.bf16.msra.mxu0 %v714
        %736 = vmatpush.bf16.msra.mxu0 %v713
        %737 = vmatmul.bf16.gmra.mxu0 %v659
        %v738 = vpop.f32.mrf.mxu0
        %v739 = vadd.f32 %v679, %v738
        %v740 = vpop.f32.mrf.mxu0
        %v741 = vadd.f32 %v679, %v740
        %742 = vmatmul.bf16.gmra.mxu0 %v660
        %v743 = vpop.f32.mrf.mxu0
        %v744 = vadd.f32 %v679, %v743
        %v745 = vpop.f32.mrf.mxu0
        %v746 = vadd.f32 %v679, %v745
        %747 = vdwg.mxu0
        %v748 = vmul.f32 %v636, 0.35355338
        %v749 = vmul.f32 %v638, 0.35355338
        %v750 = vmul.f32 %v641, 0.35355338
        %v751 = vmul.f32 %v643, 0.35355338
        %v752 = vlaneseq
        %v753 = vshrl.u32 %v752, 7
        %v754 = vadd.s32 %v753, 8
        %v755 = vlaneseq
        %v756 = vand.u32 %v755, 127
        %vm757 = vcmp.lt.s32.totalorder %v756, %v753
        %vm758 = vcmp.lt.s32.totalorder %v756, %v754
        %vm759 = vcmp.gt.s32.totalorder %v753, 0
        %vm760 = vcmp.gt.s32.totalorder %v754, 0
        %v761 = vpack.c.bf16 %v748, %v748
        %v762 = vpack.c.bf16 %v749, %v749
        %v763 = vpack.c.bf16 %v750, %v750
        %v764 = vpack.c.bf16 %v751, %v751
        %v765 = vpack.c.bf16 %v646, %v646
        %v766 = vpack.c.bf16 %v648, %v648
        %v767 = vpack.c.bf16 %v651, %v651
        %v768 = vpack.c.bf16 %v653, %v653
        %v769 = vpack.c.bf16 %v739, %v739
        %v770 = vpack.c.bf16 %v741, %v741
        %v771 = vpack.c.bf16 %v744, %v744
        %v772 = vpack.c.bf16 %v746, %v746
        %v775 = vunpack.c.l.b16 %v761
        %v776 = vunpack.c.l.b16 %v762
        %v777 = vpack.c.b16 %v776, %v775
        %v780 = vunpack.c.l.b16 %v765
        %v781 = vunpack.c.l.b16 %v766
        %v782 = vpack.c.b16 %v781, %v780
        %vm783 = vcmask 64512
        %v785 = vsel %vm783, %v777, 0
        %v788 = vsel %vm783, %v782, 0
        %790 = vmatpush.bf16.xpose.msra.mxu0 0
        %791 = vmatpush.bf16.xpose.msra.mxu0 0
        %792 = vmatpush.bf16.xpose.msra.mxu0 0
        %793 = vmatpush.bf16.xpose.msra.mxu0 0
        %794 = vmatpush.bf16.xpose.msra.mxu0 0
        %795 = vmatpush.bf16.xpose.msra.mxu0 0
        %796 = vmatpush.bf16.xpose.msra.mxu0 0
        %797 = vmatpush.bf16.xpose.msra.mxu0 %v788
        %798 = vmatmul.bf16.gmra.mxu0 %v785
        %v799 = vpop.f32.mrf.mxu0
        %v800 = vadd.f32 0.0, %v799
        %v801 = vpop.f32.mrf.mxu0
        %v802 = vadd.f32 0.0, %v801
        %803 = vdwg.mxu0
        %v806 = vunpack.c.l.b16 %v763
        %v807 = vunpack.c.l.b16 %v764
        %v808 = vpack.c.b16 %v807, %v806
        %v811 = vunpack.c.l.b16 %v767
        %v812 = vunpack.c.l.b16 %v768
        %v813 = vpack.c.b16 %v812, %v811
        %v815 = vsel %vm783, %v808, 0
        %v818 = vsel %vm783, %v813, 0
        %820 = vmatpush.bf16.xpose.msra.mxu0 0
        %821 = vmatpush.bf16.xpose.msra.mxu0 0
        %822 = vmatpush.bf16.xpose.msra.mxu0 0
        %823 = vmatpush.bf16.xpose.msra.mxu0 0
        %824 = vmatpush.bf16.xpose.msra.mxu0 0
        %825 = vmatpush.bf16.xpose.msra.mxu0 0
        %826 = vmatpush.bf16.xpose.msra.mxu0 0
        %827 = vmatpush.bf16.xpose.msra.mxu0 %v818
        %828 = vmatmul.bf16.gmra.mxu0 %v815
        %v829 = vpop.f32.mrf.mxu0
        %v830 = vadd.f32 0.0, %v829
        %v831 = vpop.f32.mrf.mxu0
        %v832 = vadd.f32 0.0, %v831
        %833 = vdwg.mxu0
        %v834 = vsel %vm757, 1, 0
        %v835 = vsel %vm758, 1, 0
        %vm836 = vcmp.eq.s32.totalorder %v834, 1
        %vm837 = vcmp.eq.s32.totalorder %v835, 1
        %v838 = vsel %vm836, %v800, -1e+32
        %v839 = vsel %vm837, %v802, -1e+32
        %v840 = vsel %vm836, %v830, -1e+32
        %v841 = vsel %vm837, %v832, -1e+32
        %vm842 = vcmask 130048
        %v843 = vsel %vm842, %v838, -inf
        %844 = vmax.xlane.f32.xlu0 %v843
        %v845 = vpop.xlane.xlu0 %844
        %v846 = vsel %vm842, %v839, -inf
        %847 = vmax.xlane.f32.xlu0 %v846
        %v848 = vpop.xlane.xlu0 %847
        %v849 = vsel %vm842, %v840, -inf
        %850 = vmax.xlane.f32.xlu0 %v849
        %v851 = vpop.xlane.xlu0 %850
        %v852 = vsel %vm842, %v841, -inf
        %853 = vmax.xlane.f32.xlu0 %v852
        %v854 = vpop.xlane.xlu0 %853
        %v855 = vsub.f32 %v838, %v845
        %v856 = vsub.f32 %v839, %v848
        %v857 = vsub.f32 %v840, %v851
        %v858 = vsub.f32 %v841, %v854
        %v859 = vmul.f32 %v855, 1.442695
        %v860 = vpow.pop %v859
        %v861 = vmul.f32 %v856, 1.442695
        %v862 = vpow.pop %v861
        %v863 = vmul.f32 %v857, 1.442695
        %v864 = vpow.pop %v863
        %v865 = vmul.f32 %v858, 1.442695
        %v866 = vpow.pop %v865
        %v867 = vsel %vm842, %v860, 0.0
        %868 = vadd.xlane.f32.xlu0 %v867
        %v869 = vpop.xlane.xlu0 %868
        %v870 = vsel %vm842, %v862, 0.0
        %871 = vadd.xlane.f32.xlu0 %v870
        %v872 = vpop.xlane.xlu0 %871
        %v873 = vsel %vm842, %v864, 0.0
        %874 = vadd.xlane.f32.xlu0 %v873
        %v875 = vpop.xlane.xlu0 %874
        %v876 = vsel %vm842, %v866, 0.0
        %877 = vadd.xlane.f32.xlu0 %v876
        %v878 = vpop.xlane.xlu0 %877
        %v879 = vrcp.pop %v869
        %v880 = vrcp.pop %v872
        %v881 = vrcp.pop %v875
        %v882 = vrcp.pop %v878
        %v883 = vmul.f32 %v869, %v879
        %v884 = vmul.f32 %v872, %v880
        %v885 = vmul.f32 %v875, %v881
        %v886 = vmul.f32 %v878, %v882
        %v887 = vsub.f32 2.0, %v883
        %v888 = vsub.f32 2.0, %v884
        %v889 = vsub.f32 2.0, %v885
        %v890 = vsub.f32 2.0, %v886
        %v891 = vmul.f32 %v879, %v887
        %v892 = vmul.f32 %v880, %v888
        %v893 = vmul.f32 %v881, %v889
        %v894 = vmul.f32 %v882, %v890
        %v895 = vmul.f32 %v860, %v891
        %v896 = vmul.f32 %v862, %v892
        %v897 = vmul.f32 %v864, %v893
        %v898 = vmul.f32 %v866, %v894
        %v899 = vsel %vm759, 1, 0
        %v900 = vsel %vm760, 1, 0
        %vm901 = vcmp.eq.s32.totalorder %v899, 1
        %vm902 = vcmp.eq.s32.totalorder %v900, 1
        %v903 = vsel %vm901, %v895, 0.0
        %v904 = vsel %vm902, %v896, 0.0
        %v905 = vsel %vm901, %v897, 0.0
        %v906 = vsel %vm902, %v898, 0.0
        %v907 = vpack.c.bf16 %v903, %v903
        %v908 = vpack.c.bf16 %v904, %v904
        %v909 = vpack.c.bf16 %v905, %v905
        %v910 = vpack.c.bf16 %v906, %v906
        %v913 = vunpack.c.l.b16 %v907
        %v914 = vunpack.c.l.b16 %v908
        %v915 = vpack.c.b16 %v914, %v913
        %v918 = vunpack.c.l.b16 %v769
        %v919 = vunpack.c.l.b16 %v770
        %v920 = vpack.c.b16 %v919, %v918
        %v923 = vsel %vm842, %v915, 0
        %925 = vmatpush.bf16.msra.mxu0 0
        %926 = vmatpush.bf16.msra.mxu0 0
        %927 = vmatpush.bf16.msra.mxu0 0
        %928 = vmatpush.bf16.msra.mxu0 0
        %929 = vmatpush.bf16.msra.mxu0 0
        %930 = vmatpush.bf16.msra.mxu0 0
        %931 = vmatpush.bf16.msra.mxu0 0
        %932 = vmatpush.bf16.msra.mxu0 %v920
        %933 = vmatmul.bf16.gmra.mxu0 %v923
        %v934 = vpop.f32.mrf.mxu0
        %v935 = vadd.f32 0.0, %v934
        %v936 = vpop.f32.mrf.mxu0
        %v937 = vadd.f32 0.0, %v936
        %938 = vdwg.mxu0
        %v941 = vunpack.c.l.b16 %v909
        %v942 = vunpack.c.l.b16 %v910
        %v943 = vpack.c.b16 %v942, %v941
        %v946 = vunpack.c.l.b16 %v771
        %v947 = vunpack.c.l.b16 %v772
        %v948 = vpack.c.b16 %v947, %v946
        %v951 = vsel %vm842, %v943, 0
        %953 = vmatpush.bf16.msra.mxu0 0
        %954 = vmatpush.bf16.msra.mxu0 0
        %955 = vmatpush.bf16.msra.mxu0 0
        %956 = vmatpush.bf16.msra.mxu0 0
        %957 = vmatpush.bf16.msra.mxu0 0
        %958 = vmatpush.bf16.msra.mxu0 0
        %959 = vmatpush.bf16.msra.mxu0 0
        %960 = vmatpush.bf16.msra.mxu0 %v948
        %961 = vmatmul.bf16.gmra.mxu0 %v951
        %v962 = vpop.f32.mrf.mxu0
        %v963 = vadd.f32 0.0, %v962
        %v964 = vpop.f32.mrf.mxu0
        %v965 = vadd.f32 0.0, %v964
        %966 = vdwg.mxu0
        %967 = vrot.lane.b32.xlu0 %v777, 120
        %v968 = vpop.permute.xlu0 %967
        %969 = vrot.lane.b32.xlu0 %v782, 120
        %v970 = vpop.permute.xlu0 %969
        %v972 = vsel %vm783, %v968, 0
        %v975 = vsel %vm783, %v970, 0
        %977 = vmatpush.bf16.xpose.msra.mxu0 0
        %978 = vmatpush.bf16.xpose.msra.mxu0 0
        %979 = vmatpush.bf16.xpose.msra.mxu0 0
        %980 = vmatpush.bf16.xpose.msra.mxu0 0
        %981 = vmatpush.bf16.xpose.msra.mxu0 0
        %982 = vmatpush.bf16.xpose.msra.mxu0 0
        %983 = vmatpush.bf16.xpose.msra.mxu0 0
        %984 = vmatpush.bf16.xpose.msra.mxu0 %v975
        %985 = vmatmul.bf16.gmra.mxu0 %v972
        %v986 = vpop.f32.mrf.mxu0
        %v987 = vadd.f32 0.0, %v986
        %v988 = vpop.f32.mrf.mxu0
        %v989 = vadd.f32 0.0, %v988
        %990 = vdwg.mxu0
        %991 = vrot.lane.b32.xlu0 %v808, 120
        %v992 = vpop.permute.xlu0 %991
        %993 = vrot.lane.b32.xlu0 %v813, 120
        %v994 = vpop.permute.xlu0 %993
        %v996 = vsel %vm783, %v992, 0
        %v999 = vsel %vm783, %v994, 0
        %1001 = vmatpush.bf16.xpose.msra.mxu0 0
        %1002 = vmatpush.bf16.xpose.msra.mxu0 0
        %1003 = vmatpush.bf16.xpose.msra.mxu0 0
        %1004 = vmatpush.bf16.xpose.msra.mxu0 0
        %1005 = vmatpush.bf16.xpose.msra.mxu0 0
        %1006 = vmatpush.bf16.xpose.msra.mxu0 0
        %1007 = vmatpush.bf16.xpose.msra.mxu0 0
        %1008 = vmatpush.bf16.xpose.msra.mxu0 %v999
        %1009 = vmatmul.bf16.gmra.mxu0 %v996
        %v1010 = vpop.f32.mrf.mxu0
        %v1011 = vadd.f32 0.0, %v1010
        %v1012 = vpop.f32.mrf.mxu0
        %v1013 = vadd.f32 0.0, %v1012
        %1014 = vdwg.mxu0
        %v1015 = vsel %vm836, %v987, -1e+32
        %v1016 = vsel %vm837, %v989, -1e+32
        %v1017 = vsel %vm836, %v1011, -1e+32
        %v1018 = vsel %vm837, %v1013, -1e+32
        %v1019 = vsel %vm842, %v1015, -inf
        %1020 = vmax.xlane.f32.xlu0 %v1019
        %v1021 = vpop.xlane.xlu0 %1020
        %v1022 = vsel %vm842, %v1016, -inf
        %1023 = vmax.xlane.f32.xlu0 %v1022
        %v1024 = vpop.xlane.xlu0 %1023
        %v1025 = vsel %vm842, %v1017, -inf
        %1026 = vmax.xlane.f32.xlu0 %v1025
        %v1027 = vpop.xlane.xlu0 %1026
        %v1028 = vsel %vm842, %v1018, -inf
        %1029 = vmax.xlane.f32.xlu0 %v1028
        %v1030 = vpop.xlane.xlu0 %1029
        %v1031 = vsub.f32 %v1015, %v1021
        %v1032 = vsub.f32 %v1016, %v1024
        %v1033 = vsub.f32 %v1017, %v1027
        %v1034 = vsub.f32 %v1018, %v1030
        %v1035 = vmul.f32 %v1031, 1.442695
        %v1036 = vpow.pop %v1035
        %v1037 = vmul.f32 %v1032, 1.442695
        %v1038 = vpow.pop %v1037
        %v1039 = vmul.f32 %v1033, 1.442695
        %v1040 = vpow.pop %v1039
        %v1041 = vmul.f32 %v1034, 1.442695
        %v1042 = vpow.pop %v1041
        %v1043 = vsel %vm842, %v1036, 0.0
        %1044 = vadd.xlane.f32.xlu0 %v1043
        %v1045 = vpop.xlane.xlu0 %1044
        %v1046 = vsel %vm842, %v1038, 0.0
        %1047 = vadd.xlane.f32.xlu0 %v1046
        %v1048 = vpop.xlane.xlu0 %1047
        %v1049 = vsel %vm842, %v1040, 0.0
        %1050 = vadd.xlane.f32.xlu0 %v1049
        %v1051 = vpop.xlane.xlu0 %1050
        %v1052 = vsel %vm842, %v1042, 0.0
        %1053 = vadd.xlane.f32.xlu0 %v1052
        %v1054 = vpop.xlane.xlu0 %1053
        %v1055 = vrcp.pop %v1045
        %v1056 = vrcp.pop %v1048
        %v1057 = vrcp.pop %v1051
        %v1058 = vrcp.pop %v1054
        %v1059 = vmul.f32 %v1045, %v1055
        %v1060 = vmul.f32 %v1048, %v1056
        %v1061 = vmul.f32 %v1051, %v1057
        %v1062 = vmul.f32 %v1054, %v1058
        %v1063 = vsub.f32 2.0, %v1059
        %v1064 = vsub.f32 2.0, %v1060
        %v1065 = vsub.f32 2.0, %v1061
        %v1066 = vsub.f32 2.0, %v1062
        %v1067 = vmul.f32 %v1055, %v1063
        %v1068 = vmul.f32 %v1056, %v1064
        %v1069 = vmul.f32 %v1057, %v1065
        %v1070 = vmul.f32 %v1058, %v1066
        %v1071 = vmul.f32 %v1036, %v1067
        %v1072 = vmul.f32 %v1038, %v1068
        %v1073 = vmul.f32 %v1040, %v1069
        %v1074 = vmul.f32 %v1042, %v1070
        %v1075 = vsel %vm901, %v1071, 0.0
        %v1076 = vsel %vm902, %v1072, 0.0
        %v1077 = vsel %vm901, %v1073, 0.0
        %v1078 = vsel %vm902, %v1074, 0.0
        %v1079 = vpack.c.bf16 %v1075, %v1075
        %v1080 = vpack.c.bf16 %v1076, %v1076
        %v1081 = vpack.c.bf16 %v1077, %v1077
        %v1082 = vpack.c.bf16 %v1078, %v1078
        %v1085 = vunpack.c.l.b16 %v1079
        %v1086 = vunpack.c.l.b16 %v1080
        %v1087 = vpack.c.b16 %v1086, %v1085
        %1088 = vrot.lane.b32.xlu0 %v920, 120
        %v1089 = vpop.permute.xlu0 %1088
        %v1092 = vsel %vm842, %v1087, 0
        %1094 = vmatpush.bf16.msra.mxu0 0
        %1095 = vmatpush.bf16.msra.mxu0 0
        %1096 = vmatpush.bf16.msra.mxu0 0
        %1097 = vmatpush.bf16.msra.mxu0 0
        %1098 = vmatpush.bf16.msra.mxu0 0
        %1099 = vmatpush.bf16.msra.mxu0 0
        %1100 = vmatpush.bf16.msra.mxu0 0
        %1101 = vmatpush.bf16.msra.mxu0 %v1089
        %1102 = vmatmul.bf16.gmra.mxu0 %v1092
        %v1103 = vpop.f32.mrf.mxu0
        %v1104 = vadd.f32 0.0, %v1103
        %v1105 = vpop.f32.mrf.mxu0
        %v1106 = vadd.f32 0.0, %v1105
        %1107 = vdwg.mxu0
        %v1110 = vunpack.c.l.b16 %v1081
        %v1111 = vunpack.c.l.b16 %v1082
        %v1112 = vpack.c.b16 %v1111, %v1110
        %1113 = vrot.lane.b32.xlu0 %v948, 120
        %v1114 = vpop.permute.xlu0 %1113
        %v1117 = vsel %vm842, %v1112, 0
        %1119 = vmatpush.bf16.msra.mxu0 0
        %1120 = vmatpush.bf16.msra.mxu0 0
        %1121 = vmatpush.bf16.msra.mxu0 0
        %1122 = vmatpush.bf16.msra.mxu0 0
        %1123 = vmatpush.bf16.msra.mxu0 0
        %1124 = vmatpush.bf16.msra.mxu0 0
        %1125 = vmatpush.bf16.msra.mxu0 0
        %1126 = vmatpush.bf16.msra.mxu0 %v1114
        %1127 = vmatmul.bf16.gmra.mxu0 %v1117
        %v1128 = vpop.f32.mrf.mxu0
        %v1129 = vadd.f32 0.0, %v1128
        %v1130 = vpop.f32.mrf.mxu0
        %v1131 = vadd.f32 0.0, %v1130
        %1132 = vdwg.mxu0
        %1133 = vrot.lane.b32.xlu0 %v777, 112
        %v1134 = vpop.permute.xlu0 %1133
        %1135 = vrot.lane.b32.xlu0 %v782, 112
        %v1136 = vpop.permute.xlu0 %1135
        %v1138 = vsel %vm783, %v1134, 0
        %v1141 = vsel %vm783, %v1136, 0
        %1143 = vmatpush.bf16.xpose.msra.mxu0 0
        %1144 = vmatpush.bf16.xpose.msra.mxu0 0
        %1145 = vmatpush.bf16.xpose.msra.mxu0 0
        %1146 = vmatpush.bf16.xpose.msra.mxu0 0
        %1147 = vmatpush.bf16.xpose.msra.mxu0 0
        %1148 = vmatpush.bf16.xpose.msra.mxu0 0
        %1149 = vmatpush.bf16.xpose.msra.mxu0 0
        %1150 = vmatpush.bf16.xpose.msra.mxu0 %v1141
        %1151 = vmatmul.bf16.gmra.mxu0 %v1138
        %v1152 = vpop.f32.mrf.mxu0
        %v1153 = vadd.f32 0.0, %v1152
        %v1154 = vpop.f32.mrf.mxu0
        %v1155 = vadd.f32 0.0, %v1154
        %1156 = vdwg.mxu0
        %1157 = vrot.lane.b32.xlu0 %v808, 112
        %v1158 = vpop.permute.xlu0 %1157
        %1159 = vrot.lane.b32.xlu0 %v813, 112
        %v1160 = vpop.permute.xlu0 %1159
        %v1162 = vsel %vm783, %v1158, 0
        %v1165 = vsel %vm783, %v1160, 0
        %1167 = vmatpush.bf16.xpose.msra.mxu0 0
        %1168 = vmatpush.bf16.xpose.msra.mxu0 0
        %1169 = vmatpush.bf16.xpose.msra.mxu0 0
        %1170 = vmatpush.bf16.xpose.msra.mxu0 0
        %1171 = vmatpush.bf16.xpose.msra.mxu0 0
        %1172 = vmatpush.bf16.xpose.msra.mxu0 0
        %1173 = vmatpush.bf16.xpose.msra.mxu0 0
        %1174 = vmatpush.bf16.xpose.msra.mxu0 %v1165
        %1175 = vmatmul.bf16.gmra.mxu0 %v1162
        %v1176 = vpop.f32.mrf.mxu0
        %v1177 = vadd.f32 0.0, %v1176
        %v1178 = vpop.f32.mrf.mxu0
        %v1179 = vadd.f32 0.0, %v1178
        %1180 = vdwg.mxu0
        %v1181 = vsel %vm836, %v1153, -1e+32
        %v1182 = vsel %vm837, %v1155, -1e+32
        %v1183 = vsel %vm836, %v1177, -1e+32
        %v1184 = vsel %vm837, %v1179, -1e+32
        %v1185 = vsel %vm842, %v1181, -inf
        %1186 = vmax.xlane.f32.xlu0 %v1185
        %v1187 = vpop.xlane.xlu0 %1186
        %v1188 = vsel %vm842, %v1182, -inf
        %1189 = vmax.xlane.f32.xlu0 %v1188
        %v1190 = vpop.xlane.xlu0 %1189
        %v1191 = vsel %vm842, %v1183, -inf
        %1192 = vmax.xlane.f32.xlu0 %v1191
        %v1193 = vpop.xlane.xlu0 %1192
        %v1194 = vsel %vm842, %v1184, -inf
        %1195 = vmax.xlane.f32.xlu0 %v1194
        %v1196 = vpop.xlane.xlu0 %1195
        %v1197 = vsub.f32 %v1181, %v1187
        %v1198 = vsub.f32 %v1182, %v1190
        %v1199 = vsub.f32 %v1183, %v1193
        %v1200 = vsub.f32 %v1184, %v1196
        %v1201 = vmul.f32 %v1197, 1.442695
        %v1202 = vpow.pop %v1201
        %v1203 = vmul.f32 %v1198, 1.442695
        %v1204 = vpow.pop %v1203
        %v1205 = vmul.f32 %v1199, 1.442695
        %v1206 = vpow.pop %v1205
        %v1207 = vmul.f32 %v1200, 1.442695
        %v1208 = vpow.pop %v1207
        %v1209 = vsel %vm842, %v1202, 0.0
        %1210 = vadd.xlane.f32.xlu0 %v1209
        %v1211 = vpop.xlane.xlu0 %1210
        %v1212 = vsel %vm842, %v1204, 0.0
        %1213 = vadd.xlane.f32.xlu0 %v1212
        %v1214 = vpop.xlane.xlu0 %1213
        %v1215 = vsel %vm842, %v1206, 0.0
        %1216 = vadd.xlane.f32.xlu0 %v1215
        %v1217 = vpop.xlane.xlu0 %1216
        %v1218 = vsel %vm842, %v1208, 0.0
        %1219 = vadd.xlane.f32.xlu0 %v1218
        %v1220 = vpop.xlane.xlu0 %1219
        %v1221 = vrcp.pop %v1211
        %v1222 = vrcp.pop %v1214
        %v1223 = vrcp.pop %v1217
        %v1224 = vrcp.pop %v1220
        %v1225 = vmul.f32 %v1211, %v1221
        %v1226 = vmul.f32 %v1214, %v1222
        %v1227 = vmul.f32 %v1217, %v1223
        %v1228 = vmul.f32 %v1220, %v1224
        %v1229 = vsub.f32 2.0, %v1225
        %v1230 = vsub.f32 2.0, %v1226
        %v1231 = vsub.f32 2.0, %v1227
        %v1232 = vsub.f32 2.0, %v1228
        %v1233 = vmul.f32 %v1221, %v1229
        %v1234 = vmul.f32 %v1222, %v1230
        %v1235 = vmul.f32 %v1223, %v1231
        %v1236 = vmul.f32 %v1224, %v1232
        %v1237 = vmul.f32 %v1202, %v1233
        %v1238 = vmul.f32 %v1204, %v1234
        %v1239 = vmul.f32 %v1206, %v1235
        %v1240 = vmul.f32 %v1208, %v1236
        %v1241 = vsel %vm901, %v1237, 0.0
        %v1242 = vsel %vm902, %v1238, 0.0
        %v1243 = vsel %vm901, %v1239, 0.0
        %v1244 = vsel %vm902, %v1240, 0.0
        %v1245 = vpack.c.bf16 %v1241, %v1241
        %v1246 = vpack.c.bf16 %v1242, %v1242
        %v1247 = vpack.c.bf16 %v1243, %v1243
        %v1248 = vpack.c.bf16 %v1244, %v1244
        %v1251 = vunpack.c.l.b16 %v1245
        %v1252 = vunpack.c.l.b16 %v1246
        %v1253 = vpack.c.b16 %v1252, %v1251
        %1254 = vrot.lane.b32.xlu0 %v920, 112
        %v1255 = vpop.permute.xlu0 %1254
        %v1258 = vsel %vm842, %v1253, 0
        %1260 = vmatpush.bf16.msra.mxu0 0
        %1261 = vmatpush.bf16.msra.mxu0 0
        %1262 = vmatpush.bf16.msra.mxu0 0
        %1263 = vmatpush.bf16.msra.mxu0 0
        %1264 = vmatpush.bf16.msra.mxu0 0
        %1265 = vmatpush.bf16.msra.mxu0 0
        %1266 = vmatpush.bf16.msra.mxu0 0
        %1267 = vmatpush.bf16.msra.mxu0 %v1255
        %1268 = vmatmul.bf16.gmra.mxu0 %v1258
        %v1269 = vpop.f32.mrf.mxu0
        %v1270 = vadd.f32 0.0, %v1269
        %v1271 = vpop.f32.mrf.mxu0
        %v1272 = vadd.f32 0.0, %v1271
        %1273 = vdwg.mxu0
        %v1276 = vunpack.c.l.b16 %v1247
        %v1277 = vunpack.c.l.b16 %v1248
        %v1278 = vpack.c.b16 %v1277, %v1276
        %1279 = vrot.lane.b32.xlu0 %v948, 112
        %v1280 = vpop.permute.xlu0 %1279
        %v1283 = vsel %vm842, %v1278, 0
        %1285 = vmatpush.bf16.msra.mxu0 0
        %1286 = vmatpush.bf16.msra.mxu0 0
        %1287 = vmatpush.bf16.msra.mxu0 0
        %1288 = vmatpush.bf16.msra.mxu0 0
        %1289 = vmatpush.bf16.msra.mxu0 0
        %1290 = vmatpush.bf16.msra.mxu0 0
        %1291 = vmatpush.bf16.msra.mxu0 0
        %1292 = vmatpush.bf16.msra.mxu0 %v1280
        %1293 = vmatmul.bf16.gmra.mxu0 %v1283
        %v1294 = vpop.f32.mrf.mxu0
        %v1295 = vadd.f32 0.0, %v1294
        %v1296 = vpop.f32.mrf.mxu0
        %v1297 = vadd.f32 0.0, %v1296
        %1298 = vdwg.mxu0
        %1299 = vrot.lane.b32.xlu0 %v777, 104
        %v1300 = vpop.permute.xlu0 %1299
        %1301 = vrot.lane.b32.xlu0 %v782, 104
        %v1302 = vpop.permute.xlu0 %1301
        %v1304 = vsel %vm783, %v1300, 0
        %v1307 = vsel %vm783, %v1302, 0
        %1309 = vmatpush.bf16.xpose.msra.mxu0 0
        %1310 = vmatpush.bf16.xpose.msra.mxu0 0
        %1311 = vmatpush.bf16.xpose.msra.mxu0 0
        %1312 = vmatpush.bf16.xpose.msra.mxu0 0
        %1313 = vmatpush.bf16.xpose.msra.mxu0 0
        %1314 = vmatpush.bf16.xpose.msra.mxu0 0
        %1315 = vmatpush.bf16.xpose.msra.mxu0 0
        %1316 = vmatpush.bf16.xpose.msra.mxu0 %v1307
        %1317 = vmatmul.bf16.gmra.mxu0 %v1304
        %v1318 = vpop.f32.mrf.mxu0
        %v1319 = vadd.f32 0.0, %v1318
        %v1320 = vpop.f32.mrf.mxu0
        %v1321 = vadd.f32 0.0, %v1320
        %1322 = vdwg.mxu0
        %1323 = vrot.lane.b32.xlu0 %v808, 104
        %v1324 = vpop.permute.xlu0 %1323
        %1325 = vrot.lane.b32.xlu0 %v813, 104
        %v1326 = vpop.permute.xlu0 %1325
        %v1328 = vsel %vm783, %v1324, 0
        %v1331 = vsel %vm783, %v1326, 0
        %1333 = vmatpush.bf16.xpose.msra.mxu0 0
        %1334 = vmatpush.bf16.xpose.msra.mxu0 0
        %1335 = vmatpush.bf16.xpose.msra.mxu0 0
        %1336 = vmatpush.bf16.xpose.msra.mxu0 0
        %1337 = vmatpush.bf16.xpose.msra.mxu0 0
        %1338 = vmatpush.bf16.xpose.msra.mxu0 0
        %1339 = vmatpush.bf16.xpose.msra.mxu0 0
        %1340 = vmatpush.bf16.xpose.msra.mxu0 %v1331
        %1341 = vmatmul.bf16.gmra.mxu0 %v1328
        %v1342 = vpop.f32.mrf.mxu0
        %v1343 = vadd.f32 0.0, %v1342
        %v1344 = vpop.f32.mrf.mxu0
        %v1345 = vadd.f32 0.0, %v1344
        %1346 = vdwg.mxu0
        %v1347 = vsel %vm836, %v1319, -1e+32
        %v1348 = vsel %vm837, %v1321, -1e+32
        %v1349 = vsel %vm836, %v1343, -1e+32
        %v1350 = vsel %vm837, %v1345, -1e+32
        %v1351 = vsel %vm842, %v1347, -inf
        %1352 = vmax.xlane.f32.xlu0 %v1351
        %v1353 = vpop.xlane.xlu0 %1352
        %v1354 = vsel %vm842, %v1348, -inf
        %1355 = vmax.xlane.f32.xlu0 %v1354
        %v1356 = vpop.xlane.xlu0 %1355
        %v1357 = vsel %vm842, %v1349, -inf
        %1358 = vmax.xlane.f32.xlu0 %v1357
        %v1359 = vpop.xlane.xlu0 %1358
        %v1360 = vsel %vm842, %v1350, -inf
        %1361 = vmax.xlane.f32.xlu0 %v1360
        %v1362 = vpop.xlane.xlu0 %1361
        %v1363 = vsub.f32 %v1347, %v1353
        %v1364 = vsub.f32 %v1348, %v1356
        %v1365 = vsub.f32 %v1349, %v1359
        %v1366 = vsub.f32 %v1350, %v1362
        %v1367 = vmul.f32 %v1363, 1.442695
        %v1368 = vpow.pop %v1367
        %v1369 = vmul.f32 %v1364, 1.442695
        %v1370 = vpow.pop %v1369
        %v1371 = vmul.f32 %v1365, 1.442695
        %v1372 = vpow.pop %v1371
        %v1373 = vmul.f32 %v1366, 1.442695
        %v1374 = vpow.pop %v1373
        %v1375 = vsel %vm842, %v1368, 0.0
        %1376 = vadd.xlane.f32.xlu0 %v1375
        %v1377 = vpop.xlane.xlu0 %1376
        %v1378 = vsel %vm842, %v1370, 0.0
        %1379 = vadd.xlane.f32.xlu0 %v1378
        %v1380 = vpop.xlane.xlu0 %1379
        %v1381 = vsel %vm842, %v1372, 0.0
        %1382 = vadd.xlane.f32.xlu0 %v1381
        %v1383 = vpop.xlane.xlu0 %1382
        %v1384 = vsel %vm842, %v1374, 0.0
        %1385 = vadd.xlane.f32.xlu0 %v1384
        %v1386 = vpop.xlane.xlu0 %1385
        %v1387 = vrcp.pop %v1377
        %v1388 = vrcp.pop %v1380
        %v1389 = vrcp.pop %v1383
        %v1390 = vrcp.pop %v1386
        %v1391 = vmul.f32 %v1377, %v1387
        %v1392 = vmul.f32 %v1380, %v1388
        %v1393 = vmul.f32 %v1383, %v1389
        %v1394 = vmul.f32 %v1386, %v1390
        %v1395 = vsub.f32 2.0, %v1391
        %v1396 = vsub.f32 2.0, %v1392
        %v1397 = vsub.f32 2.0, %v1393
        %v1398 = vsub.f32 2.0, %v1394
        %v1399 = vmul.f32 %v1387, %v1395
        %v1400 = vmul.f32 %v1388, %v1396
        %v1401 = vmul.f32 %v1389, %v1397
        %v1402 = vmul.f32 %v1390, %v1398
        %v1403 = vmul.f32 %v1368, %v1399
        %v1404 = vmul.f32 %v1370, %v1400
        %v1405 = vmul.f32 %v1372, %v1401
        %v1406 = vmul.f32 %v1374, %v1402
        %v1407 = vsel %vm901, %v1403, 0.0
        %v1408 = vsel %vm902, %v1404, 0.0
        %v1409 = vsel %vm901, %v1405, 0.0
        %v1410 = vsel %vm902, %v1406, 0.0
        %v1411 = vpack.c.bf16 %v1407, %v1407
        %v1412 = vpack.c.bf16 %v1408, %v1408
        %v1413 = vpack.c.bf16 %v1409, %v1409
        %v1414 = vpack.c.bf16 %v1410, %v1410
        %v1417 = vunpack.c.l.b16 %v1411
        %v1418 = vunpack.c.l.b16 %v1412
        %v1419 = vpack.c.b16 %v1418, %v1417
        %1420 = vrot.lane.b32.xlu0 %v920, 104
        %v1421 = vpop.permute.xlu0 %1420
        %v1424 = vsel %vm842, %v1419, 0
        %1426 = vmatpush.bf16.msra.mxu0 0
        %1427 = vmatpush.bf16.msra.mxu0 0
        %1428 = vmatpush.bf16.msra.mxu0 0
        %1429 = vmatpush.bf16.msra.mxu0 0
        %1430 = vmatpush.bf16.msra.mxu0 0
        %1431 = vmatpush.bf16.msra.mxu0 0
        %1432 = vmatpush.bf16.msra.mxu0 0
        %1433 = vmatpush.bf16.msra.mxu0 %v1421
        %1434 = vmatmul.bf16.gmra.mxu0 %v1424
        %v1435 = vpop.f32.mrf.mxu0
        %v1436 = vadd.f32 0.0, %v1435
        %v1437 = vpop.f32.mrf.mxu0
        %v1438 = vadd.f32 0.0, %v1437
        %1439 = vdwg.mxu0
        %v1442 = vunpack.c.l.b16 %v1413
        %v1443 = vunpack.c.l.b16 %v1414
        %v1444 = vpack.c.b16 %v1443, %v1442
        %1445 = vrot.lane.b32.xlu0 %v948, 104
        %v1446 = vpop.permute.xlu0 %1445
        %v1449 = vsel %vm842, %v1444, 0
        %1451 = vmatpush.bf16.msra.mxu0 0
        %1452 = vmatpush.bf16.msra.mxu0 0
        %1453 = vmatpush.bf16.msra.mxu0 0
        %1454 = vmatpush.bf16.msra.mxu0 0
        %1455 = vmatpush.bf16.msra.mxu0 0
        %1456 = vmatpush.bf16.msra.mxu0 0
        %1457 = vmatpush.bf16.msra.mxu0 0
        %1458 = vmatpush.bf16.msra.mxu0 %v1446
        %1459 = vmatmul.bf16.gmra.mxu0 %v1449
        %v1460 = vpop.f32.mrf.mxu0
        %v1461 = vadd.f32 0.0, %v1460
        %v1462 = vpop.f32.mrf.mxu0
        %v1463 = vadd.f32 0.0, %v1462
        %1464 = vdwg.mxu0
        %1469 = vrot.lane.b32.xlu0 %v1104, 8
        %v1470 = vpop.permute.xlu0 %1469
        %1471 = vrot.lane.b32.xlu0 %v1106, 8
        %v1472 = vpop.permute.xlu0 %1471
        %1473 = vrot.lane.b32.xlu0 %v1129, 8
        %v1474 = vpop.permute.xlu0 %1473
        %1475 = vrot.lane.b32.xlu0 %v1131, 8
        %v1476 = vpop.permute.xlu0 %1475
        %1485 = vrot.lane.b32.xlu0 %v1270, 16
        %v1486 = vpop.permute.xlu0 %1485
        %1487 = vrot.lane.b32.xlu0 %v1272, 16
        %v1488 = vpop.permute.xlu0 %1487
        %1489 = vrot.lane.b32.xlu0 %v1295, 16
        %v1490 = vpop.permute.xlu0 %1489
        %1491 = vrot.lane.b32.xlu0 %v1297, 16
        %v1492 = vpop.permute.xlu0 %1491
        %1501 = vrot.lane.b32.xlu0 %v1436, 24
        %v1502 = vpop.permute.xlu0 %1501
        %1503 = vrot.lane.b32.xlu0 %v1438, 24
        %v1504 = vpop.permute.xlu0 %1503
        %1505 = vrot.lane.b32.xlu0 %v1461, 24
        %v1506 = vpop.permute.xlu0 %1505
        %1507 = vrot.lane.b32.xlu0 %v1463, 24
        %v1508 = vpop.permute.xlu0 %1507
        %v1513 = vsel %vm783, %v935, %v1470
        %v1514 = vsel %vm783, %v937, %v1472
        %v1515 = vsel %vm783, %v963, %v1474
        %v1516 = vsel %vm783, %v965, %v1476
        %v1517 = vsel %vm842, %v1513, %v1486
        %v1518 = vsel %vm842, %v1514, %v1488
        %v1519 = vsel %vm842, %v1515, %v1490
        %v1520 = vsel %vm842, %v1516, %v1492
        %vm1521 = vcmask 195584
        %v1522 = vsel %vm1521, %v1517, %v1502
        %v1523 = vsel %vm1521, %v1518, %v1504
        %v1524 = vsel %vm1521, %v1519, %v1506
        %v1525 = vsel %vm1521, %v1520, %v1508
        %v1526 = vpack.c.bf16 %v1523, %v1522
        %v1527 = vpack.c.bf16 %v1525, %v1524
        %v1528 = vld [vmem:[%s6] sm:$0xf]
        %v1529 = vld [vmem:[%s6 + $0x4] sm:$0xf]
        %v1530 = vld [vmem:[%s6 + $0x8] sm:$0xf]
        %v1531 = vld [vmem:[%s6 + $0xc] sm:$0xf]
        %v1532 = vld [vmem:[%s7] sm:$0x1]
        %v1534 = vperm.slane %v1532, 0
        %v1540 = vunpack.c.l.b16 %v1528
        %v1541 = vunpack.c.l.b16 %v1529
        %v1542 = vunpack.c.l.b16 %v1530
        %v1543 = vunpack.c.l.b16 %v1531
        %v1544 = vpack.c.b16 %v1541, %v1540
        %v1545 = vpack.c.b16 %v1543, %v1542
        %vm1548 = vcmask 261120
        %v1550 = vsel %vm1548, %v1526, 0
        %v1553 = vsel %vm1548, %v1527, 0
        %1555 = vmatpush.bf16.msra.mxu0 0
        %1556 = vmatpush.bf16.msra.mxu0 0
        %1557 = vmatpush.bf16.msra.mxu0 0
        %1558 = vmatpush.bf16.msra.mxu0 0
        %1559 = vmatpush.bf16.msra.mxu0 0
        %1560 = vmatpush.bf16.msra.mxu0 0
        %1561 = vmatpush.bf16.msra.mxu0 %v1545
        %1562 = vmatpush.bf16.msra.mxu0 %v1544
        %1563 = vmatmul.bf16.gmra.mxu0 %v1550
        %v1564 = vpop.f32.mrf.mxu0
        %v1565 = vadd.f32 %v1534, %v1564
        %v1566 = vpop.f32.mrf.mxu0
        %v1567 = vadd.f32 %v1534, %v1566
        %1568 = vmatmul.bf16.gmra.mxu0 %v1553
        %v1569 = vpop.f32.mrf.mxu0
        %v1570 = vadd.f32 %v1534, %v1569
        %v1571 = vpop.f32.mrf.mxu0
        %v1572 = vadd.f32 %v1534, %v1571
        %1573 = vdwg.mxu0
        %vm1574 = vcmp.lt.s32.totalorder %v756, 32
        %v1575 = vsel %vm1574, 1, 0
        %v1576 = vcvt.s32.f32 %v1575
        %v1577 = vadd.f32 %v546, %v1565
        %v1578 = vadd.f32 %v547, %v1567
        %v1579 = vadd.f32 %v548, %v1570
        %v1580 = vadd.f32 %v549, %v1572
        %v1581 = vld [vmem:[%s8] sm:$0x1]
        %v1582 = vld [vmem:[%s9] sm:$0x1]
        %1583 = vadd.xlane.f32.xlu0 %v1577
        %v1584 = vpop.xlane.xlu0 %1583
        %1585 = vadd.xlane.f32.xlu0 %v1578
        %v1586 = vpop.xlane.xlu0 %1585
        %1587 = vadd.xlane.f32.xlu0 %v1579
        %v1588 = vpop.xlane.xlu0 %1587
        %1589 = vadd.xlane.f32.xlu0 %v1580
        %v1590 = vpop.xlane.xlu0 %1589
        %v1591 = vmul.f32 %v1584, 0.03125
        %v1592 = vmul.f32 %v1586, 0.03125
        %v1593 = vmul.f32 %v1588, 0.03125
        %v1594 = vmul.f32 %v1590, 0.03125
        %v1595 = vsub.f32 %v1577, %v1591
        %v1596 = vsub.f32 %v1578, %v1592
        %v1597 = vsub.f32 %v1579, %v1593
        %v1598 = vsub.f32 %v1580, %v1594
        %v1599 = vmul.f32 %v1595, %v1595
        %v1600 = vmul.f32 %v1596, %v1596
        %v1601 = vmul.f32 %v1597, %v1597
        %v1602 = vmul.f32 %v1598, %v1598
        %v1603 = vmul.f32 %v1599, %v1576
        %v1604 = vmul.f32 %v1600, %v1576
        %v1605 = vmul.f32 %v1601, %v1576
        %v1606 = vmul.f32 %v1602, %v1576
        %1607 = vadd.xlane.f32.xlu0 %v1603
        %v1608 = vpop.xlane.xlu0 %1607
        %1609 = vadd.xlane.f32.xlu0 %v1604
        %v1610 = vpop.xlane.xlu0 %1609
        %1611 = vadd.xlane.f32.xlu0 %v1605
        %v1612 = vpop.xlane.xlu0 %1611
        %1613 = vadd.xlane.f32.xlu0 %v1606
        %v1614 = vpop.xlane.xlu0 %1613
        %v1615 = vmul.f32 %v1608, 0.03125
        %v1616 = vmul.f32 %v1610, 0.03125
        %v1617 = vmul.f32 %v1612, 0.03125
        %v1618 = vmul.f32 %v1614, 0.03125
        %v1619 = vadd.f32 %v1615, 1e-05
        %v1620 = vadd.f32 %v1616, 1e-05
        %v1621 = vadd.f32 %v1617, 1e-05
        %v1622 = vadd.f32 %v1618, 1e-05
        %v1623 = vrsqrt.pop %v1619
        %v1624 = vmul.f32 %v1623, %v1619
        %v1625 = vmul.f32 %v1624, %v1623
        %v1626 = vmul.f32 0.5, %v1625
        %v1627 = vsub.f32 1.5, %v1626
        %v1628 = vmul.f32 %v1623, %v1627
        %vm1629 = vweird.f32 %v1619
        %vm1630 = vweird.f32 %v1623
        %vm1631 = vmor %vm1629, %vm1630
        %v1632 = vsel %vm1631, %v1623, %v1628
        %v1633 = vrsqrt.pop %v1620
        %v1634 = vmul.f32 %v1633, %v1620
        %v1635 = vmul.f32 %v1634, %v1633
        %v1636 = vmul.f32 0.5, %v1635
        %v1637 = vsub.f32 1.5, %v1636
        %v1638 = vmul.f32 %v1633, %v1637
        %vm1639 = vweird.f32 %v1620
        %vm1640 = vweird.f32 %v1633
        %vm1641 = vmor %vm1639, %vm1640
        %v1642 = vsel %vm1641, %v1633, %v1638
        %v1643 = vrsqrt.pop %v1621
        %v1644 = vmul.f32 %v1643, %v1621
        %v1645 = vmul.f32 %v1644, %v1643
        %v1646 = vmul.f32 0.5, %v1645
        %v1647 = vsub.f32 1.5, %v1646
        %v1648 = vmul.f32 %v1643, %v1647
        %vm1649 = vweird.f32 %v1621
        %vm1650 = vweird.f32 %v1643
        %vm1651 = vmor %vm1649, %vm1650
        %v1652 = vsel %vm1651, %v1643, %v1648
        %v1653 = vrsqrt.pop %v1622
        %v1654 = vmul.f32 %v1653, %v1622
        %v1655 = vmul.f32 %v1654, %v1653
        %v1656 = vmul.f32 0.5, %v1655
        %v1657 = vsub.f32 1.5, %v1656
        %v1658 = vmul.f32 %v1653, %v1657
        %vm1659 = vweird.f32 %v1622
        %vm1660 = vweird.f32 %v1653
        %vm1661 = vmor %vm1659, %vm1660
        %v1662 = vsel %vm1661, %v1653, %v1658
        %v1663 = vmul.f32 %v1595, %v1632
        %v1664 = vmul.f32 %v1596, %v1642
        %v1665 = vmul.f32 %v1597, %v1652
        %v1666 = vmul.f32 %v1598, %v1662
        %v1668 = vperm.slane %v1581, 0
        %v1670 = vmul.f32 %v1663, %v1668
        %v1671 = vmul.f32 %v1664, %v1668
        %v1672 = vmul.f32 %v1665, %v1668
        %v1673 = vmul.f32 %v1666, %v1668
        %v1675 = vperm.slane %v1582, 0
        %v1677 = vadd.f32 %v1670, %v1675
        %v1678 = vadd.f32 %v1671, %v1675
        %v1679 = vadd.f32 %v1672, %v1675
        %v1680 = vadd.f32 %v1673, %v1675
        %v1681 = vpack.c.bf16 %v1678, %v1677
        %v1682 = vpack.c.bf16 %v1680, %v1679
        %v1683 = vld [vmem:[%s10] sm:$0xf]
        %v1684 = vld [vmem:[%s10 + $0x4] sm:$0xf]
        %v1685 = vld [vmem:[%s10 + $0x8] sm:$0xf]
        %v1686 = vld [vmem:[%s10 + $0xc] sm:$0xf]
        %v1687 = vld [vmem:[%s10 + $0x10] sm:$0xf]
        %v1688 = vld [vmem:[%s10 + $0x14] sm:$0xf]
        %v1689 = vld [vmem:[%s10 + $0x18] sm:$0xf]
        %v1690 = vld [vmem:[%s10 + $0x1c] sm:$0xf]
        %v1691 = vld [vmem:[%s10 + $0x20] sm:$0xf]
        %v1692 = vld [vmem:[%s10 + $0x24] sm:$0xf]
        %v1693 = vld [vmem:[%s10 + $0x28] sm:$0xf]
        %v1694 = vld [vmem:[%s10 + $0x2c] sm:$0xf]
        %v1695 = vld [vmem:[%s10 + $0x30] sm:$0xf]
        %v1696 = vld [vmem:[%s10 + $0x34] sm:$0xf]
        %v1697 = vld [vmem:[%s10 + $0x38] sm:$0xf]
        %v1698 = vld [vmem:[%s10 + $0x3c] sm:$0xf]
        %v1699 = vld [vmem:[%s11] sm:$0x1]
        %v1701 = vperm.slane %v1699, 0
        %v1719 = vunpack.c.l.b16 %v1683
        %v1720 = vunpack.c.l.b16 %v1684
        %v1721 = vunpack.c.l.b16 %v1685
        %v1722 = vunpack.c.l.b16 %v1686
        %v1723 = vunpack.c.l.b16 %v1687
        %v1724 = vunpack.c.l.b16 %v1688
        %v1725 = vunpack.c.l.b16 %v1689
        %v1726 = vunpack.c.l.b16 %v1690
        %v1727 = vunpack.c.l.b16 %v1691
        %v1728 = vunpack.c.l.b16 %v1692
        %v1729 = vunpack.c.l.b16 %v1693
        %v1730 = vunpack.c.l.b16 %v1694
        %v1731 = vunpack.c.l.b16 %v1695
        %v1732 = vunpack.c.l.b16 %v1696
        %v1733 = vunpack.c.l.b16 %v1697
        %v1734 = vunpack.c.l.b16 %v1698
        %v1735 = vpack.c.b16 %v1720, %v1719
        %v1736 = vpack.c.b16 %v1722, %v1721
        %v1737 = vpack.c.b16 %v1724, %v1723
        %v1738 = vpack.c.b16 %v1726, %v1725
        %v1739 = vpack.c.b16 %v1728, %v1727
        %v1740 = vpack.c.b16 %v1730, %v1729
        %v1741 = vpack.c.b16 %v1732, %v1731
        %v1742 = vpack.c.b16 %v1734, %v1733
        %1751 = vmatpush.bf16.msra.mxu0 %v1742
        %1752 = vmatpush.bf16.msra.mxu0 %v1741
        %1753 = vmatpush.bf16.msra.mxu0 %v1740
        %1754 = vmatpush.bf16.msra.mxu0 %v1739
        %1755 = vmatpush.bf16.msra.mxu0 %v1738
        %1756 = vmatpush.bf16.msra.mxu0 %v1737
        %1757 = vmatpush.bf16.msra.mxu0 %v1736
        %1758 = vmatpush.bf16.msra.mxu0 %v1735
        %1759 = vmatmul.bf16.gmra.mxu0 %v1681
        %v1760 = vpop.f32.mrf.mxu0
        %v1761 = vadd.f32 %v1701, %v1760
        %v1762 = vpop.f32.mrf.mxu0
        %v1763 = vadd.f32 %v1701, %v1762
        %1764 = vmatmul.bf16.gmra.mxu0 %v1682
        %v1765 = vpop.f32.mrf.mxu0
        %v1766 = vadd.f32 %v1701, %v1765
        %v1767 = vpop.f32.mrf.mxu0
        %v1768 = vadd.f32 %v1701, %v1767
        %1769 = vdwg.mxu0
        %v1770 = vmax.f32 %v1761, 0.0
        %v1771 = vmax.f32 %v1763, 0.0
        %v1772 = vmax.f32 %v1766, 0.0
        %v1773 = vmax.f32 %v1768, 0.0
        %v1774 = vpack.c.bf16 %v1771, %v1770
        %v1775 = vpack.c.bf16 %v1773, %v1772
        %v1776 = vld [vmem:[%s12] sm:$0xf]
        %v1777 = vld [vmem:[%s12 + $0x4] sm:$0xf]
        %v1778 = vld [vmem:[%s12 + $0x8] sm:$0xf]
        %v1779 = vld [vmem:[%s12 + $0xc] sm:$0xf]
        %v1780 = vld [vmem:[%s12 + $0x10] sm:$0xf]
        %v1781 = vld [vmem:[%s12 + $0x14] sm:$0xf]
        %v1782 = vld [vmem:[%s12 + $0x18] sm:$0xf]
        %v1783 = vld [vmem:[%s12 + $0x1c] sm:$0xf]
        %v1784 = vld [vmem:[%s12 + $0x20] sm:$0xf]
        %v1785 = vld [vmem:[%s12 + $0x24] sm:$0xf]
        %v1786 = vld [vmem:[%s12 + $0x28] sm:$0xf]
        %v1787 = vld [vmem:[%s12 + $0x2c] sm:$0xf]
        %v1788 = vld [vmem:[%s12 + $0x30] sm:$0xf]
        %v1789 = vld [vmem:[%s12 + $0x34] sm:$0xf]
        %v1790 = vld [vmem:[%s12 + $0x38] sm:$0xf]
        %v1791 = vld [vmem:[%s12 + $0x3c] sm:$0xf]
        %v1792 = vld [vmem:[%s13] sm:$0x1]
        %v1794 = vperm.slane %v1792, 0
        %v1812 = vunpack.c.l.b16 %v1776
        %v1813 = vunpack.c.l.b16 %v1777
        %v1814 = vunpack.c.l.b16 %v1778
        %v1815 = vunpack.c.l.b16 %v1779
        %v1816 = vunpack.c.l.b16 %v1780
        %v1817 = vunpack.c.l.b16 %v1781
        %v1818 = vunpack.c.l.b16 %v1782
        %v1819 = vunpack.c.l.b16 %v1783
        %v1820 = vunpack.c.l.b16 %v1784
        %v1821 = vunpack.c.l.b16 %v1785
        %v1822 = vunpack.c.l.b16 %v1786
        %v1823 = vunpack.c.l.b16 %v1787
        %v1824 = vunpack.c.l.b16 %v1788
        %v1825 = vunpack.c.l.b16 %v1789
        %v1826 = vunpack.c.l.b16 %v1790
        %v1827 = vunpack.c.l.b16 %v1791
        %v1828 = vpack.c.b16 %v1813, %v1812
        %v1829 = vpack.c.b16 %v1815, %v1814
        %v1830 = vpack.c.b16 %v1817, %v1816
        %v1831 = vpack.c.b16 %v1819, %v1818
        %v1832 = vpack.c.b16 %v1821, %v1820
        %v1833 = vpack.c.b16 %v1823, %v1822
        %v1834 = vpack.c.b16 %v1825, %v1824
        %v1835 = vpack.c.b16 %v1827, %v1826
        %1844 = vmatpush.bf16.msra.mxu0 %v1835
        %1845 = vmatpush.bf16.msra.mxu0 %v1834
        %1846 = vmatpush.bf16.msra.mxu0 %v1833
        %1847 = vmatpush.bf16.msra.mxu0 %v1832
        %1848 = vmatpush.bf16.msra.mxu0 %v1831
        %1849 = vmatpush.bf16.msra.mxu0 %v1830
        %1850 = vmatpush.bf16.msra.mxu0 %v1829
        %1851 = vmatpush.bf16.msra.mxu0 %v1828
        %1852 = vmatmul.bf16.gmra.mxu0 %v1774
        %v1853 = vpop.f32.mrf.mxu0
        %v1854 = vadd.f32 %v1794, %v1853
        %v1855 = vpop.f32.mrf.mxu0
        %v1856 = vadd.f32 %v1794, %v1855
        %1857 = vmatmul.bf16.gmra.mxu0 %v1775
        %v1858 = vpop.f32.mrf.mxu0
        %v1859 = vadd.f32 %v1794, %v1858
        %v1860 = vpop.f32.mrf.mxu0
        %v1861 = vadd.f32 %v1794, %v1860
        %1862 = vdwg.mxu0
        %v1863 = vadd.f32 %v1677, %v1854
        %v1864 = vadd.f32 %v1678, %v1856
        %v1865 = vadd.f32 %v1679, %v1859
        %v1866 = vadd.f32 %v1680, %v1861
        %v1867 = vld [vmem:[%s14] sm:$0x1]
        %v1868 = vld [vmem:[%s15] sm:$0x1]
        %1869 = vadd.xlane.f32.xlu0 %v1863
        %v1870 = vpop.xlane.xlu0 %1869
        %1871 = vadd.xlane.f32.xlu0 %v1864
        %v1872 = vpop.xlane.xlu0 %1871
        %1873 = vadd.xlane.f32.xlu0 %v1865
        %v1874 = vpop.xlane.xlu0 %1873
        %1875 = vadd.xlane.f32.xlu0 %v1866
        %v1876 = vpop.xlane.xlu0 %1875
        %v1877 = vmul.f32 %v1870, 0.03125
        %v1878 = vmul.f32 %v1872, 0.03125
        %v1879 = vmul.f32 %v1874, 0.03125
        %v1880 = vmul.f32 %v1876, 0.03125
        %v1881 = vsub.f32 %v1863, %v1877
        %v1882 = vsub.f32 %v1864, %v1878
        %v1883 = vsub.f32 %v1865, %v1879
        %v1884 = vsub.f32 %v1866, %v1880
        %v1885 = vmul.f32 %v1881, %v1881
        %v1886 = vmul.f32 %v1882, %v1882
        %v1887 = vmul.f32 %v1883, %v1883
        %v1888 = vmul.f32 %v1884, %v1884
        %v1889 = vmul.f32 %v1885, %v1576
        %v1890 = vmul.f32 %v1886, %v1576
        %v1891 = vmul.f32 %v1887, %v1576
        %v1892 = vmul.f32 %v1888, %v1576
        %1893 = vadd.xlane.f32.xlu0 %v1889
        %v1894 = vpop.xlane.xlu0 %1893
        %1895 = vadd.xlane.f32.xlu0 %v1890
        %v1896 = vpop.xlane.xlu0 %1895
        %1897 = vadd.xlane.f32.xlu0 %v1891
        %v1898 = vpop.xlane.xlu0 %1897
        %1899 = vadd.xlane.f32.xlu0 %v1892
        %v1900 = vpop.xlane.xlu0 %1899
        %v1901 = vmul.f32 %v1894, 0.03125
        %v1902 = vmul.f32 %v1896, 0.03125
        %v1903 = vmul.f32 %v1898, 0.03125
        %v1904 = vmul.f32 %v1900, 0.03125
        %v1905 = vadd.f32 %v1901, 1e-05
        %v1906 = vadd.f32 %v1902, 1e-05
        %v1907 = vadd.f32 %v1903, 1e-05
        %v1908 = vadd.f32 %v1904, 1e-05
        %v1909 = vrsqrt.pop %v1905
        %v1910 = vmul.f32 %v1909, %v1905
        %v1911 = vmul.f32 %v1910, %v1909
        %v1912 = vmul.f32 0.5, %v1911
        %v1913 = vsub.f32 1.5, %v1912
        %v1914 = vmul.f32 %v1909, %v1913
        %vm1915 = vweird.f32 %v1905
        %vm1916 = vweird.f32 %v1909
        %vm1917 = vmor %vm1915, %vm1916
        %v1918 = vsel %vm1917, %v1909, %v1914
        %v1919 = vrsqrt.pop %v1906
        %v1920 = vmul.f32 %v1919, %v1906
        %v1921 = vmul.f32 %v1920, %v1919
        %v1922 = vmul.f32 0.5, %v1921
        %v1923 = vsub.f32 1.5, %v1922
        %v1924 = vmul.f32 %v1919, %v1923
        %vm1925 = vweird.f32 %v1906
        %vm1926 = vweird.f32 %v1919
        %vm1927 = vmor %vm1925, %vm1926
        %v1928 = vsel %vm1927, %v1919, %v1924
        %v1929 = vrsqrt.pop %v1907
        %v1930 = vmul.f32 %v1929, %v1907
        %v1931 = vmul.f32 %v1930, %v1929
        %v1932 = vmul.f32 0.5, %v1931
        %v1933 = vsub.f32 1.5, %v1932
        %v1934 = vmul.f32 %v1929, %v1933
        %vm1935 = vweird.f32 %v1907
        %vm1936 = vweird.f32 %v1929
        %vm1937 = vmor %vm1935, %vm1936
        %v1938 = vsel %vm1937, %v1929, %v1934
        %v1939 = vrsqrt.pop %v1908
        %v1940 = vmul.f32 %v1939, %v1908
        %v1941 = vmul.f32 %v1940, %v1939
        %v1942 = vmul.f32 0.5, %v1941
        %v1943 = vsub.f32 1.5, %v1942
        %v1944 = vmul.f32 %v1939, %v1943
        %vm1945 = vweird.f32 %v1908
        %vm1946 = vweird.f32 %v1939
        %vm1947 = vmor %vm1945, %vm1946
        %v1948 = vsel %vm1947, %v1939, %v1944
        %v1949 = vmul.f32 %v1881, %v1918
        %v1950 = vmul.f32 %v1882, %v1928
        %v1951 = vmul.f32 %v1883, %v1938
        %v1952 = vmul.f32 %v1884, %v1948
        %v1954 = vperm.slane %v1867, 0
        %v1956 = vmul.f32 %v1949, %v1954
        %v1957 = vmul.f32 %v1950, %v1954
        %v1958 = vmul.f32 %v1951, %v1954
        %v1959 = vmul.f32 %v1952, %v1954
        %v1961 = vperm.slane %v1868, 0
        %v1963 = vadd.f32 %v1956, %v1961
        %v1964 = vadd.f32 %v1957, %v1961
        %v1965 = vadd.f32 %v1958, %v1961
        %v1966 = vadd.f32 %v1959, %v1961
        %1967 = vst [vmem:[%s531] sm:$0xff] %v1963
        %1968 = vst [vmem:[%s531 + $0x8] sm:$0xff] %v1964
        %1969 = vst [vmem:[%s531 + $0x10] sm:$0xff] %v1965
        %1970 = vst [vmem:[%s531 + $0x18] sm:$0xff] %v1966
        %s1971 = sand.u32 %s384, 1
        %s1972 = scalar_lea.sflag [#allocation3], %s1971
        %s1973 = sand.u32 %s384, 1
        %s1974 = smul.addr %s1973, 32
        %s1975 = scalar_lea.vmem [#allocation2], %s1974
        // Predicated region
        $region85: #{transformer_layer.1} parent=83 // pred_check
          %p1976 = pneg %p394
        $region86: #{transformer_layer.1} parent=83 // pred_check_branch
          %1978 = sbr.rel (%p1976) target = $region88
        $region87: #{transformer_layer.1} parent=83 // pred_region
          %s1979 = smul.u32 4, %s30
          %1981 = vsyncadd %s1972, 0
          %s1982 = smul.addr %s1979, 8
          %s1983 = scalar_lea.hbm %s16, %s1982
          %s1984 = sshll.u32 %s1975, 4
          %s1985 = int_to_ptr.vmem [resolvable:$true] %s1984
          %s1986 = sshll.u32 %s1983, 4
          %s1987 = int_to_ptr.hbm [resolvable:$true] %s1986
          %1992 = dma.vmem_to_hbm [thread:$0]  %s1985, 512, %s1987, %s1972, 128, 128, 8
        $region88: #{transformer_layer.1} parent=83 // pred_fallthru
          _
      $region84: #{transformer_layer.1} parent=5 // pred_fallthru
        _
      %p1993 = scmp.le.s32.totalorder 2, %s25
      // Predicated region
      $region89: #{transformer_layer.1} parent=5 // pred_check
        %p1994 = pneg %p1993
      $region90: #{transformer_layer.1} parent=5 // pred_check_branch
        %1996 = sbr.rel (%p1994) target = $region92
      $region91: #{transformer_layer.1} parent=5 // pred_region
        %s1997 = ssub.s32 %s25, 2
        // Predicated region
        $region93: #{transformer_layer.1} parent=91 // pred_check
          %p1998 = pneg %p400
        $region94: #{transformer_layer.1} parent=91 // pred_check_branch
          %2000 = sbr.rel (%p1998) target = $region96
        $region95: #{transformer_layer.1} parent=91 // pred_region
          %s2001 = sand.u32 %s385, 1
          %s2002 = scalar_lea.sflag [#allocation3], %s2001
          %s2003 = sand.u32 %s385, 1
          %s2004 = smul.addr %s2003, 32
          %s2005 = scalar_lea.vmem [#allocation2], %s2004
          %2007 = dma.done %s2002, 512
        $region96: #{transformer_layer.1} parent=91 // pred_fallthru
          _
      $region92: #{transformer_layer.1} parent=5 // pred_fallthru
        _
    $region6: #{transformer_layer.1} parent=1 // loop_footer
      %s29 = sadd.s32 1, %s25
    $region7: #{transformer_layer.1} parent=1 // loop_footer_branch
      %24 = sbr.rel target = $region3
    $region8: #{transformer_layer.1} parent=1 // loop_exit
      _
    %2008 = vsyncpa [#allocation3], 1
    %s2009 = scalar_lea.sflag [#allocation3], 1
    %2010 = vsyncpa %s2009, 1

// kernel: transformer_layer.1
$region0: #{transformer_layer.1}
  #allocation0 [shape = 'u32[]', space=smem, size = 0x4, offset = 0x4, fixed_abs, tag = 'smem constant byte address 0x4 - core index']
  #allocation1 [shape = 'u32[72,128]{1,0:T(1,128)}', space=vmem, size = 0x9000, scoped, tag = 'internal scratch']
  %s0 = inlined_call_operand.vmem [shape: f32[128,128], index: 0, kind: input, shape index: {}]
  %s1 = inlined_call_operand.vmem [shape: f32[64,128], index: 1, kind: input, shape index: {}]
  %s2 = inlined_call_operand.vmem [shape: bf16[128,128], index: 2, kind: input, shape index: {}]
  %s3 = inlined_call_operand.vmem [shape: f32[1,128], index: 3, kind: input, shape index: {}]
  %s4 = inlined_call_operand.vmem [shape: bf16[128,128], index: 4, kind: input, shape index: {}]
  %s5 = inlined_call_operand.vmem [shape: f32[1,128], index: 5, kind: input, shape index: {}]
  %s6 = inlined_call_operand.vmem [shape: bf16[32,128], index: 6, kind: input, shape index: {}]
  %s7 = inlined_call_operand.vmem [shape: f32[1,128], index: 7, kind: input, shape index: {}]
  %s8 = inlined_call_operand.vmem [shape: f32[1,128], index: 8, kind: input, shape index: {}]
  %s9 = inlined_call_operand.vmem [shape: f32[1,128], index: 9, kind: input, shape index: {}]
  %s10 = inlined_call_operand.vmem [shape: bf16[128,128], index: 10, kind: input, shape index: {}]
  %s11 = inlined_call_operand.vmem [shape: f32[1,128], index: 11, kind: input, shape index: {}]
  %s12 = inlined_call_operand.vmem [shape: bf16[128,128], index: 12, kind: input, shape index: {}]
  %s13 = inlined_call_operand.vmem [shape: f32[1,128], index: 13, kind: input, shape index: {}]
  %s14 = inlined_call_operand.vmem [shape: f32[1,128], index: 14, kind: input, shape index: {}]
  %s15 = inlined_call_operand.vmem [shape: f32[1,128], index: 15, kind: input, shape index: {}]
  %s16 = inlined_call_operand.hbm [shape: f32[64,128], index: 16, kind: output, shape index: {}]
  %s17 = sld [smem:[#allocation0]]
  $region97: #{transformer_layer.1} parent=0
    _
  %s19 = ssub.s32 1, %s17
  %s20 = scalar_select 0, %s19, %s17
  $region1: #{transformer_layer.1} parent=0
    #allocation2 [shape = 'u8[32768]{0}', space=vmem, size = 0x8000, scoped, tag = 'output window, operand 0']
    #allocation3 [shape = 's32[2]{0}', space=sflag, size = 0x8, scoped, tag = 'scoped memory for transformer_layer.1']
    %21 = vsyncpa [#allocation3], 0
    %s22 = scalar_lea.sflag [#allocation3], 1
    %23 = vsyncpa %s22, 0
    loop: start=0, step=1, limit=4
    $region2: #{transformer_layer.1} parent=1 // loop_pre_header
      _
    $region3: #{transformer_layer.1} parent=1 // loop_header
      %s25 = sphi 0, %s29
      %p26 = scmp.ge.s32.totalorder %s25, 4
      %s35 = sphi 0, %s37
      %s38 = sphi 0, %s35
      %s39 = sphi 0, %s38
      %s55 = sphi 0, %s39
      %s61 = sphi 0, %s63
      %s64 = sphi 0, %s61
      %s65 = sphi 0, %s64
      %s81 = sphi 0, %s65
      %s85 = sphi 0, %s85
      %s87 = sphi 0, %s85
      %s88 = sphi 0, %s87
      %s102 = sphi 0, %s88
      %s106 = sphi 0, %s106
      %s108 = sphi 0, %s106
      %s109 = sphi 0, %s108
      %s123 = sphi 0, %s109
      %s127 = sphi 0, %s127
      %s129 = sphi 0, %s127
      %s130 = sphi 0, %s129
      %s144 = sphi 0, %s130
      %s148 = sphi 0, %s148
      %s150 = sphi 0, %s148
      %s151 = sphi 0, %s150
      %s165 = sphi 0, %s151
      %s169 = sphi 0, %s169
      %s171 = sphi 0, %s169
      %s172 = sphi 0, %s171
      %s186 = sphi 0, %s172
      %s190 = sphi 0, %s190
      %s192 = sphi 0, %s190
      %s193 = sphi 0, %s192
      %s207 = sphi 0, %s193
      %s211 = sphi 0, %s211
      %s213 = sphi 0, %s211
      %s214 = sphi 0, %s213
      %s228 = sphi 0, %s214
      %s232 = sphi 0, %s232
      %s234 = sphi 0, %s232
      %s235 = sphi 0, %s234
      %s249 = sphi 0, %s235
      %s253 = sphi 0, %s253
      %s255 = sphi 0, %s253
      %s256 = sphi 0, %s255
      %s270 = sphi 0, %s256
      %s274 = sphi 0, %s274
      %s276 = sphi 0, %s274
      %s277 = sphi 0, %s276
      %s291 = sphi 0, %s277
      %s295 = sphi 0, %s295
      %s297 = sphi 0, %s295
      %s298 = sphi 0, %s297
      %s312 = sphi 0, %s298
      %s316 = sphi 0, %s316
      %s318 = sphi 0, %s316
      %s319 = sphi 0, %s318
      %s333 = sphi 0, %s319
      %s337 = sphi 0, %s337
      %s339 = sphi 0, %s337
      %s340 = sphi 0, %s339
      %s354 = sphi 0, %s340
      %s358 = sphi 0, %s358
      %s360 = sphi 0, %s358
      %s361 = sphi 0, %s360
      %s375 = sphi 0, %s361
      %s381 = sphi 0, %s383
      %s384 = sphi 0, %s381
      %s385 = sphi 0, %s384
      %s401 = sphi 0, %s385
    $region4: #{transformer_layer.1} parent=1 // loop_header_branch
      %28 = sbr.rel (%p26) target = $region8
    $region5: #{transformer_layer.1} parent=1 // loop_body
      %s30 = ssub.s32 %s25, 1
      %s31 = ssub.s32 %s25, 2
      %s32 = sadd.s32 %s25, 1
      %s33 = ssub.s32 %s25, %s32
      %p34 = scmp.eq.s32.totalorder %s33, 0
      %s36 = sadd.s32 %s35, 1
      %s37 = scalar_select %p34, %s35, %s36
      %p40 = pneg %p34
      %p41 = scmp.eq.s32.totalorder %s25, 1
      %p42 = por %p40, %p41
      %p43 = scmp.ne.s32.totalorder %s35, %s38
      %p44 = scmp.eq.s32.totalorder %s25, 0
      %p45 = por %p43, %p44
      %p46 = scmp.ne.s32.totalorder %s35, %s38
      %p47 = scmp.eq.s32.totalorder %s30, 1
      %p48 = por %p46, %p47
      %p49 = scmp.ne.s32.totalorder %s38, %s39
      %p50 = scmp.eq.s32.totalorder %s30, 0
      %p51 = por %p49, %p50
      %p52 = scmp.ne.s32.totalorder %s38, %s39
      %p53 = scmp.eq.s32.totalorder %s31, 1
      %p54 = por %p52, %p53
      %p56 = scmp.ne.s32.totalorder %s39, %s55
      %p57 = scmp.eq.s32.totalorder %s31, 0
      %p58 = por %p56, %p57
      %s59 = ssub.s32 %s25, %s32
      %p60 = scmp.eq.s32.totalorder %s59, 0
      %s62 = sadd.s32 %s61, 1
      %s63 = scalar_select %p60, %s61, %s62
      %p66 = pneg %p60
      %p67 = scmp.eq.s32.totalorder %s25, 1
      %p68 = por %p66, %p67
      %p69 = scmp.ne.s32.totalorder %s61, %s64
      %p70 = scmp.eq.s32.totalorder %s25, 0
      %p71 = por %p69, %p70
      %p72 = scmp.ne.s32.totalorder %s61, %s64
      %p73 = scmp.eq.s32.totalorder %s30, 1
      %p74 = por %p72, %p73
      %p75 = scmp.ne.s32.totalorder %s64, %s65
      %p76 = scmp.eq.s32.totalorder %s30, 0
      %p77 = por %p75, %p76
      %p78 = scmp.ne.s32.totalorder %s64, %s65
      %p79 = scmp.eq.s32.totalorder %s31, 1
      %p80 = por %p78, %p79
      %p82 = scmp.ne.s32.totalorder %s65, %s81
      %p83 = scmp.eq.s32.totalorder %s31, 0
      %p84 = por %p82, %p83
      %s86 = sadd.s32 %s85, 1
      %p89 = scmp.eq.s32.totalorder %s25, 1
      %p90 = scmp.ne.s32.totalorder %s85, %s87
      %p91 = scmp.eq.s32.totalorder %s25, 0
      %p92 = por %p90, %p91
      %p93 = scmp.ne.s32.totalorder %s85, %s87
      %p94 = scmp.eq.s32.totalorder %s30, 1
      %p95 = por %p93, %p94
      %p96 = scmp.ne.s32.totalorder %s87, %s88
      %p97 = scmp.eq.s32.totalorder %s30, 0
      %p98 = por %p96, %p97
      %p99 = scmp.ne.s32.totalorder %s87, %s88
      %p100 = scmp.eq.s32.totalorder %s31, 1
      %p101 = por %p99, %p100
      %p103 = scmp.ne.s32.totalorder %s88, %s102
      %p104 = scmp.eq.s32.totalorder %s31, 0
      %p105 = por %p103, %p104
      %s107 = sadd.s32 %s106, 1
      %p110 = scmp.eq.s32.totalorder %s25, 1
      %p111 = scmp.ne.s32.totalorder %s106, %s108
      %p112 = scmp.eq.s32.totalorder %s25, 0
      %p113 = por %p111, %p112
      %p114 = scmp.ne.s32.totalorder %s106, %s108
      %p115 = scmp.eq.s32.totalorder %s30, 1
      %p116 = por %p114, %p115
      %p117 = scmp.ne.s32.totalorder %s108, %s109
      %p118 = scmp.eq.s32.totalorder %s30, 0
      %p119 = por %p117, %p118
      %p120 = scmp.ne.s32.totalorder %s108, %s109
      %p121 = scmp.eq.s32.totalorder %s31, 1
      %p122 = por %p120, %p121
      %p124 = scmp.ne.s32.totalorder %s109, %s123
      %p125 = scmp.eq.s32.totalorder %s31, 0
      %p126 = por %p124, %p125
      %s128 = sadd.s32 %s127, 1
      %p131 = scmp.eq.s32.totalorder %s25, 1
      %p132 = scmp.ne.s32.totalorder %s127, %s129
      %p133 = scmp.eq.s32.totalorder %s25, 0
      %p134 = por %p132, %p133
      %p135 = scmp.ne.s32.totalorder %s127, %s129
      %p136 = scmp.eq.s32.totalorder %s30, 1
      %p137 = por %p135, %p136
      %p138 = scmp.ne.s32.totalorder %s129, %s130
      %p139 = scmp.eq.s32.totalorder %s30, 0
      %p140 = por %p138, %p139
      %p141 = scmp.ne.s32.totalorder %s129, %s130
      %p142 = scmp.eq.s32.totalorder %s31, 1
      %p143 = por %p141, %p142
      %p145 = scmp.ne.s32.totalorder %s130, %s144
      %p146 = scmp.eq.s32.totalorder %s31, 0
      %p147 = por %p145, %p146
      %s149 = sadd.s32 %s148, 1
      %p152 = scmp.eq.s32.totalorder %s25, 1
      %p153 = scmp.ne.s32.totalorder %s148, %s150
      %p154 = scmp.eq.s32.totalorder %s25, 0
      %p155 = por %p153, %p154
      %p156 = scmp.ne.s32.totalorder %s148, %s150
      %p157 = scmp.eq.s32.totalorder %s30, 1
      %p158 = por %p156, %p157
      %p159 = scmp.ne.s32.totalorder %s150, %s151
      %p160 = scmp.eq.s32.totalorder %s30, 0
      %p161 = por %p159, %p160
      %p162 = scmp.ne.s32.totalorder %s150, %s151
      %p163 = scmp.eq.s32.totalorder %s31, 1
      %p164 = por %p162, %p163
      %p166 = scmp.ne.s32.totalorder %s151, %s165
      %p167 = scmp.eq.s32.totalorder %s31, 0
      %p168 = por %p166, %p167
      %s170 = sadd.s32 %s169, 1
      %p173 = scmp.eq.s32.totalorder %s25, 1
      %p174 = scmp.ne.s32.totalorder %s169, %s171
      %p175 = scmp.eq.s32.totalorder %s25, 0
      %p176 = por %p174, %p175
      %p177 = scmp.ne.s32.totalorder %s169, %s171
      %p178 = scmp.eq.s32.totalorder %s30, 1
      %p179 = por %p177, %p178
      %p180 = scmp.ne.s32.totalorder %s171, %s172
      %p181 = scmp.eq.s32.totalorder %s30, 0
      %p182 = por %p180, %p181
      %p183 = scmp.ne.s32.totalorder %s171, %s172
      %p184 = scmp.eq.s32.totalorder %s31, 1
      %p185 = por %p183, %p184
      %p187 = scmp.ne.s32.totalorder %s172, %s186
      %p188 = scmp.eq.s32.totalorder %s31, 0
      %p189 = por %p187, %p188
      %s191 = sadd.s32 %s190, 1
      %p194 = scmp.eq.s32.totalorder %s25, 1
      %p195 = scmp.ne.s32.totalorder %s190, %s192
      %p196 = scmp.eq.s32.totalorder %s25, 0
      %p197 = por %p195, %p196
      %p198 = scmp.ne.s32.totalorder %s190, %s192
      %p199 = scmp.eq.s32.totalorder %s30, 1
      %p200 = por %p198, %p199
      %p201 = scmp.ne.s32.totalorder %s192, %s193
      %p202 = scmp.eq.s32.totalorder %s30, 0
      %p203 = por %p201, %p202
      %p204 = scmp.ne.s32.totalorder %s192, %s193
      %p205 = scmp.eq.s32.totalorder %s31, 1
      %p206 = por %p204, %p205
      %p208 = scmp.ne.s32.totalorder %s193, %s207
      %p209 = scmp.eq.s32.totalorder %s31, 0
      %p210 = por %p208, %p209
      %s212 = sadd.s32 %s211, 1
      %p215 = scmp.eq.s32.totalorder %s25, 1
      %p216 = scmp.ne.s32.totalorder %s211, %s213
      %p217 = scmp.eq.s32.totalorder %s25, 0
      %p218 = por %p216, %p217
      %p219 = scmp.ne.s32.totalorder %s211, %s213
      %p220 = scmp.eq.s32.totalorder %s30, 1
      %p221 = por %p219, %p220
      %p222 = scmp.ne.s32.totalorder %s213, %s214
      %p223 = scmp.eq.s32.totalorder %s30, 0
      %p224 = por %p222, %p223
      %p225 = scmp.ne.s32.totalorder %s213, %s214
      %p226 = scmp.eq.s32.totalorder %s31, 1
      %p227 = por %p225, %p226
      %p229 = scmp.ne.s32.totalorder %s214, %s228
      %p230 = scmp.eq.s32.totalorder %s31, 0
      %p231 = por %p229, %p230
      %s233 = sadd.s32 %s232, 1
      %p236 = scmp.eq.s32.totalorder %s25, 1
      %p237 = scmp.ne.s32.totalorder %s232, %s234
      %p238 = scmp.eq.s32.totalorder %s25, 0
      %p239 = por %p237, %p238
      %p240 = scmp.ne.s32.totalorder %s232, %s234
      %p241 = scmp.eq.s32.totalorder %s30, 1
      %p242 = por %p240, %p241
      %p243 = scmp.ne.s32.totalorder %s234, %s235
      %p244 = scmp.eq.s32.totalorder %s30, 0
      %p245 = por %p243, %p244
      %p246 = scmp.ne.s32.totalorder %s234, %s235
      %p247 = scmp.eq.s32.totalorder %s31, 1
      %p248 = por %p246, %p247
      %p250 = scmp.ne.s32.totalorder %s235, %s249
      %p251 = scmp.eq.s32.totalorder %s31, 0
      %p252 = por %p250, %p251
      %s254 = sadd.s32 %s253, 1
      %p257 = scmp.eq.s32.totalorder %s25, 1
      %p258 = scmp.ne.s32.totalorder %s253, %s255
      %p259 = scmp.eq.s32.totalorder %s25, 0
      %p260 = por %p258, %p259
      %p261 = scmp.ne.s32.totalorder %s253, %s255
      %p262 = scmp.eq.s32.totalorder %s30, 1
      %p263 = por %p261, %p262
      %p264 = scmp.ne.s32.totalorder %s255, %s256
      %p265 = scmp.eq.s32.totalorder %s30, 0
      %p266 = por %p264, %p265
      %p267 = scmp.ne.s32.totalorder %s255, %s256
      %p268 = scmp.eq.s32.totalorder %s31, 1
      %p269 = por %p267, %p268
      %p271 = scmp.ne.s32.totalorder %s256, %s270
      %p272 = scmp.eq.s32.totalorder %s31, 0
      %p273 = por %p271, %p272
      %s275 = sadd.s32 %s274, 1
      %p278 = scmp.eq.s32.totalorder %s25, 1
      %p279 = scmp.ne.s32.totalorder %s274, %s276
      %p280 = scmp.eq.s32.totalorder %s25, 0
      %p281 = por %p279, %p280
      %p282 = scmp.ne.s32.totalorder %s274, %s276
      %p283 = scmp.eq.s32.totalorder %s30, 1
      %p284 = por %p282, %p283
      %p285 = scmp.ne.s32.totalorder %s276, %s277
      %p286 = scmp.eq.s32.totalorder %s30, 0
      %p287 = por %p285, %p286
      %p288 = scmp.ne.s32.totalorder %s276, %s277
      %p289 = scmp.eq.s32.totalorder %s31, 1
      %p290 = por %p288, %p289
      %p292 = scmp.ne.s32.totalorder %s277, %s291
      %p293 = scmp.eq.s32.totalorder %s31, 0
      %p294 = por %p292, %p293
      %s296 = sadd.s32 %s295, 1
      %p299 = scmp.eq.s32.totalorder %s25, 1
      %p300 = scmp.ne.s32.totalorder %s295, %s297
      %p301 = scmp.eq.s32.totalorder %s25, 0
      %p302 = por %p300, %p301
      %p303 = scmp.ne.s32.totalorder %s295, %s297
      %p304 = scmp.eq.s32.totalorder %s30, 1
      %p305 = por %p303, %p304
      %p306 = scmp.ne.s32.totalorder %s297, %s298
      %p307 = scmp.eq.s32.totalorder %s30, 0
      %p308 = por %p306, %p307
      %p309 = scmp.ne.s32.totalorder %s297, %s298
      %p310 = scmp.eq.s32.totalorder %s31, 1
      %p311 = por %p309, %p310
      %p313 = scmp.ne.s32.totalorder %s298, %s312
      %p314 = scmp.eq.s32.totalorder %s31, 0
      %p315 = por %p313, %p314
      %s317 = sadd.s32 %s316, 1
      %p320 = scmp.eq.s32.totalorder %s25, 1
      %p321 = scmp.ne.s32.totalorder %s316, %s318
      %p322 = scmp.eq.s32.totalorder %s25, 0
      %p323 = por %p321, %p322
      %p324 = scmp.ne.s32.totalorder %s316, %s318
      %p325 = scmp.eq.s32.totalorder %s30, 1
      %p326 = por %p324, %p325
      %p327 = scmp.ne.s32.totalorder %s318, %s319
      %p328 = scmp.eq.s32.totalorder %s30, 0
      %p329 = por %p327, %p328
      %p330 = scmp.ne.s32.totalorder %s318, %s319
      %p331 = scmp.eq.s32.totalorder %s31, 1
      %p332 = por %p330, %p331
      %p334 = scmp.ne.s32.totalorder %s319, %s333
      %p335 = scmp.eq.s32.totalorder %s31, 0
      %p336 = por %p334, %p335
      %s338 = sadd.s32 %s337, 1
      %p341 = scmp.eq.s32.totalorder %s25, 1
      %p342 = scmp.ne.s32.totalorder %s337, %s339
      %p343 = scmp.eq.s32.totalorder %s25, 0
      %p344 = por %p342, %p343
      %p345 = scmp.ne.s32.totalorder %s337, %s339
      %p346 = scmp.eq.s32.totalorder %s30, 1
      %p347 = por %p345, %p346
      %p348 = scmp.ne.s32.totalorder %s339, %s340
      %p349 = scmp.eq.s32.totalorder %s30, 0
      %p350 = por %p348, %p349
      %p351 = scmp.ne.s32.totalorder %s339, %s340
      %p352 = scmp.eq.s32.totalorder %s31, 1
      %p353 = por %p351, %p352
      %p355 = scmp.ne.s32.totalorder %s340, %s354
      %p356 = scmp.eq.s32.totalorder %s31, 0
      %p357 = por %p355, %p356
      %s359 = sadd.s32 %s358, 1
      %p362 = scmp.eq.s32.totalorder %s25, 1
      %p363 = scmp.ne.s32.totalorder %s358, %s360
      %p364 = scmp.eq.s32.totalorder %s25, 0
      %p365 = por %p363, %p364
      %p366 = scmp.ne.s32.totalorder %s358, %s360
      %p367 = scmp.eq.s32.totalorder %s30, 1
      %p368 = por %p366, %p367
      %p369 = scmp.ne.s32.totalorder %s360, %s361
      %p370 = scmp.eq.s32.totalorder %s30, 0
      %p371 = por %p369, %p370
      %p372 = scmp.ne.s32.totalorder %s360, %s361
      %p373 = scmp.eq.s32.totalorder %s31, 1
      %p374 = por %p372, %p373
      %p376 = scmp.ne.s32.totalorder %s361, %s375
      %p377 = scmp.eq.s32.totalorder %s31, 0
      %p378 = por %p376, %p377
      %s379 = ssub.s32 %s25, %s32
      %p380 = scmp.eq.s32.totalorder %s379, 0
      %s382 = sadd.s32 %s381, 1
      %s383 = scalar_select %p380, %s381, %s382
      %p386 = pneg %p380
      %p387 = scmp.eq.s32.totalorder %s25, 1
      %p388 = por %p386, %p387
      %p389 = scmp.ne.s32.totalorder %s381, %s384
      %p390 = scmp.eq.s32.totalorder %s25, 0
      %p391 = por %p389, %p390
      %p392 = scmp.ne.s32.totalorder %s381, %s384
      %p393 = scmp.eq.s32.totalorder %s30, 1
      %p394 = por %p392, %p393
      %p395 = scmp.ne.s32.totalorder %s384, %s385
      %p396 = scmp.eq.s32.totalorder %s30, 0
      %p397 = por %p395, %p396
      %p398 = scmp.ne.s32.totalorder %s384, %s385
      %p399 = scmp.eq.s32.totalorder %s31, 1
      %p400 = por %p398, %p399
      %p402 = scmp.ne.s32.totalorder %s385, %s401
      %p403 = scmp.eq.s32.totalorder %s31, 0
      %p404 = por %p402, %p403
      %p405 = scmp.le.s32.totalorder 1, %s25
      %p406 = scmp.lt.s32.totalorder %s25, 3
      %p407 = pnand %p405, %p406
      %p408 = pneg %p407
      // Predicated region
      $region9: #{transformer_layer.1} parent=5 // pred_check
        _
      $region10: #{transformer_layer.1} parent=5 // pred_check_branch
        %410 = sbr.rel (%p407) target = $region12
      $region11: #{transformer_layer.1} parent=5 // pred_region
        %s411 = ssub.s32 %s25, 1
        // Predicated region
        $region13: #{transformer_layer.1} parent=11 // pred_check
          %p412 = pneg %p98
        $region14: #{transformer_layer.1} parent=11 // pred_check_branch
          %414 = sbr.rel (%p412) target = $region16
        $region15: #{transformer_layer.1} parent=11 // pred_region
          _
        $region16: #{transformer_layer.1} parent=11 // pred_fallthru
          _
        // Predicated region
        $region17: #{transformer_layer.1} parent=11 // pred_check
          %p415 = pneg %p119
        $region18: #{transformer_layer.1} parent=11 // pred_check_branch
          %417 = sbr.rel (%p415) target = $region20
        $region19: #{transformer_layer.1} parent=11 // pred_region
          _
        $region20: #{transformer_layer.1} parent=11 // pred_fallthru
          _
        // Predicated region
        $region21: #{transformer_layer.1} parent=11 // pred_check
          %p418 = pneg %p140
        $region22: #{transformer_layer.1} parent=11 // pred_check_branch
          %420 = sbr.rel (%p418) target = $region24
        $region23: #{transformer_layer.1} parent=11 // pred_region
          _
        $region24: #{transformer_layer.1} parent=11 // pred_fallthru
          _
        // Predicated region
        $region25: #{transformer_layer.1} parent=11 // pred_check
          %p421 = pneg %p161
        $region26: #{transformer_layer.1} parent=11 // pred_check_branch
          %423 = sbr.rel (%p421) target = $region28
        $region27: #{transformer_layer.1} parent=11 // pred_region
          _
        $region28: #{transformer_layer.1} parent=11 // pred_fallthru
          _
        // Predicated region
        $region29: #{transformer_layer.1} parent=11 // pred_check
          %p424 = pneg %p182
        $region30: #{transformer_layer.1} parent=11 // pred_check_branch
          %426 = sbr.rel (%p424) target = $region32
        $region31: #{transformer_layer.1} parent=11 // pred_region
          _
        $region32: #{transformer_layer.1} parent=11 // pred_fallthru
          _
        // Predicated region
        $region33: #{transformer_layer.1} parent=11 // pred_check
          %p427 = pneg %p203
        $region34: #{transformer_layer.1} parent=11 // pred_check_branch
          %429 = sbr.rel (%p427) target = $region36
        $region35: #{transformer_layer.1} parent=11 // pred_region
          _
        $region36: #{transformer_layer.1} parent=11 // pred_fallthru
          _
        // Predicated region
        $region37: #{transformer_layer.1} parent=11 // pred_check
          %p430 = pneg %p224
        $region38: #{transformer_layer.1} parent=11 // pred_check_branch
          %432 = sbr.rel (%p430) target = $region40
        $region39: #{transformer_layer.1} parent=11 // pred_region
          _
        $region40: #{transformer_layer.1} parent=11 // pred_fallthru
          _
        // Predicated region
        $region41: #{transformer_layer.1} parent=11 // pred_check
          %p433 = pneg %p245
        $region42: #{transformer_layer.1} parent=11 // pred_check_branch
          %435 = sbr.rel (%p433) target = $region44
        $region43: #{transformer_layer.1} parent=11 // pred_region
          _
        $region44: #{transformer_layer.1} parent=11 // pred_fallthru
          _
        // Predicated region
        $region45: #{transformer_layer.1} parent=11 // pred_check
          %p436 = pneg %p266
        $region46: #{transformer_layer.1} parent=11 // pred_check_branch
          %438 = sbr.rel (%p436) target = $region48
        $region47: #{transformer_layer.1} parent=11 // pred_region
          _
        $region48: #{transformer_layer.1} parent=11 // pred_fallthru
          _
        // Predicated region
        $region49: #{transformer_layer.1} parent=11 // pred_check
          %p439 = pneg %p287
        $region50: #{transformer_layer.1} parent=11 // pred_check_branch
          %441 = sbr.rel (%p439) target = $region52
        $region51: #{transformer_layer.1} parent=11 // pred_region
          _
        $region52: #{transformer_layer.1} parent=11 // pred_fallthru
          _
        // Predicated region
        $region53: #{transformer_layer.1} parent=11 // pred_check
          %p442 = pneg %p308
        $region54: #{transformer_layer.1} parent=11 // pred_check_branch
          %444 = sbr.rel (%p442) target = $region56
        $region55: #{transformer_layer.1} parent=11 // pred_region
          _
        $region56: #{transformer_layer.1} parent=11 // pred_fallthru
          _
        // Predicated region
        $region57: #{transformer_layer.1} parent=11 // pred_check
          %p445 = pneg %p329
        $region58: #{transformer_layer.1} parent=11 // pred_check_branch
          %447 = sbr.rel (%p445) target = $region60
        $region59: #{transformer_layer.1} parent=11 // pred_region
          _
        $region60: #{transformer_layer.1} parent=11 // pred_fallthru
          _
        // Predicated region
        $region61: #{transformer_layer.1} parent=11 // pred_check
          %p448 = pneg %p350
        $region62: #{transformer_layer.1} parent=11 // pred_check_branch
          %450 = sbr.rel (%p448) target = $region64
        $region63: #{transformer_layer.1} parent=11 // pred_region
          _
        $region64: #{transformer_layer.1} parent=11 // pred_fallthru
          _
        // Predicated region
        $region65: #{transformer_layer.1} parent=11 // pred_check
          %p451 = pneg %p371
        $region66: #{transformer_layer.1} parent=11 // pred_check_branch
          %453 = sbr.rel (%p451) target = $region68
        $region67: #{transformer_layer.1} parent=11 // pred_region
          _
        $region68: #{transformer_layer.1} parent=11 // pred_fallthru
          _
      $region12: #{transformer_layer.1} parent=5 // pred_fallthru
        _
      %p454 = scmp.lt.s32.totalorder %s25, 2
      // Predicated region
      $region69: #{transformer_layer.1} parent=5 // pred_check
        %p455 = pneg %p454
      $region70: #{transformer_layer.1} parent=5 // pred_check_branch
        %457 = sbr.rel (%p455) target = $region72
      $region71: #{transformer_layer.1} parent=5 // pred_region
        // Predicated region
        $region73: #{transformer_layer.1} parent=71 // pred_check
          %p458 = pneg %p45
        $region74: #{transformer_layer.1} parent=71 // pred_check_branch
          %460 = sbr.rel (%p458) target = $region76
        $region75: #{transformer_layer.1} parent=71 // pred_region
          %s461 = smul.u32 8, %s25
          %p462 = scmp.lt.s32.totalorder %s461, 15
          %s463 = scalar_select %p462, %s461, 15
          %s464 = smul.addr %s463, 8
          %s465 = scalar_lea.vmem %s0, %s464
          %s466 = smul.u32 8, %s25
        $region76: #{transformer_layer.1} parent=71 // pred_fallthru
          _
        // Predicated region
        $region77: #{transformer_layer.1} parent=71 // pred_check
          %p467 = pneg %p71
        $region78: #{transformer_layer.1} parent=71 // pred_check_branch
          %469 = sbr.rel (%p467) target = $region80
        $region79: #{transformer_layer.1} parent=71 // pred_region
          %s470 = smul.u32 4, %s25
          %p471 = scmp.lt.s32.totalorder %s470, 7
          %s472 = scalar_select %p471, %s470, 7
          %s473 = smul.addr %s472, 8
          %s474 = scalar_lea.vmem %s1, %s473
          %s475 = smul.u32 4, %s25
        $region80: #{transformer_layer.1} parent=71 // pred_fallthru
          _
      $region72: #{transformer_layer.1} parent=5 // pred_fallthru
        _
      %p476 = scmp.le.s32.totalorder 1, %s25
      %p477 = scmp.lt.s32.totalorder %s25, 3
      %p478 = pnand %p476, %p477
      %p479 = pneg %p478
      // Predicated region
      $region81: #{transformer_layer.1} parent=5 // pred_check
        _
      $region82: #{transformer_layer.1} parent=5 // pred_check_branch
        %481 = sbr.rel (%p478) target = $region84
      $region83: #{transformer_layer.1} parent=5 // pred_region
        %s482 = ssub.s32 %s25, 1
        %s483 = smul.u32 8, %s30
        %p484 = scmp.lt.s32.totalorder %s483, 15
        %s485 = scalar_select %p484, %s483, 15
        %s486 = smul.addr %s485, 8
        %s487 = scalar_lea.vmem %s0, %s486
        %p488 = pneg %p51
        %p489 = pneg %p48
        %s490 = smul.u32 4, %s30
        %p491 = scmp.lt.s32.totalorder %s490, 7
        %s492 = scalar_select %p491, %s490, 7
        %s493 = smul.addr %s492, 8
        %s494 = scalar_lea.vmem %s1, %s493
        %p495 = pneg %p77
        %p496 = pneg %p74
        %p497 = pneg %p98
        %p498 = pneg %p95
        %p499 = pneg %p119
        %p500 = pneg %p116
        %p501 = pneg %p140
        %p502 = pneg %p137
        %p503 = pneg %p161
        %p504 = pneg %p158
        %p505 = pneg %p182
        %p506 = pneg %p179
        %p507 = pneg %p203
        %p508 = pneg %p200
        %p509 = pneg %p224
        %p510 = pneg %p221
        %p511 = pneg %p245
        %p512 = pneg %p242
        %p513 = pneg %p266
        %p514 = pneg %p263
        %p515 = pneg %p287
        %p516 = pneg %p284
        %p517 = pneg %p308
        %p518 = pneg %p305
        %p519 = pneg %p329
        %p520 = pneg %p326
        %p521 = pneg %p350
        %p522 = pneg %p347
        %p523 = pneg %p371
        %p524 = pneg %p368
        %p525 = pneg %p397
        %p526 = pneg %p394
        %s527 = sand.u32 %s384, 1
        %s528 = scalar_lea.sflag [#allocation3], %s527
        %s529 = sand.u32 %s384, 1
        %s530 = smul.addr %s529, 32
        %s531 = scalar_lea.vmem [#allocation2], %s530
        %s532 = smul.u32 8, %s30
        %p533 = scmp.lt.s32.totalorder %s532, 15
        %s534 = scalar_select %p533, %s532, 15
        %s535 = smul.addr %s534, 8
        %s536 = scalar_lea.vmem %s0, %s535
        %s537 = smul.u32 8, %s30
        %s538 = smul.u32 4, %s30
        %p539 = scmp.lt.s32.totalorder %s538, 7
        %s540 = scalar_select %p539, %s538, 7
        %s541 = smul.addr %s540, 8
        %s542 = scalar_lea.vmem %s1, %s541
        %s543 = smul.u32 4, %s30
        %s544 = smul.u32 4, %s30
        %v546 = vld [vmem:[%s536] sm:$0xff]
        %v547 = vld [vmem:[%s536 + $0x8] sm:$0xff]
        %v548 = vld [vmem:[%s536 + $0x10] sm:$0xff]
        %v549 = vld [vmem:[%s536 + $0x18] sm:$0xff]
        %v550 = vld [vmem:[%s536 + $0x20] sm:$0xff]
        %v551 = vld [vmem:[%s536 + $0x28] sm:$0xff]
        %v552 = vld [vmem:[%s536 + $0x30] sm:$0xff]
        %v553 = vld [vmem:[%s536 + $0x38] sm:$0xff]
        %v554 = vpack.c.bf16 %v547, %v546
        %v555 = vpack.c.bf16 %v549, %v548
        %v556 = vpack.c.bf16 %v551, %v550
        %v557 = vpack.c.bf16 %v553, %v552
        %v558 = vld [vmem:[%s2] sm:$0xf]
        %v559 = vld [vmem:[%s2 + $0x4] sm:$0xf]
        %v560 = vld [vmem:[%s2 + $0x8] sm:$0xf]
        %v561 = vld [vmem:[%s2 + $0xc] sm:$0xf]
        %v562 = vld [vmem:[%s2 + $0x10] sm:$0xf]
        %v563 = vld [vmem:[%s2 + $0x14] sm:$0xf]
        %v564 = vld [vmem:[%s2 + $0x18] sm:$0xf]
        %v565 = vld [vmem:[%s2 + $0x1c] sm:$0xf]
        %v566 = vld [vmem:[%s2 + $0x20] sm:$0xf]
        %v567 = vld [vmem:[%s2 + $0x24] sm:$0xf]
        %v568 = vld [vmem:[%s2 + $0x28] sm:$0xf]
        %v569 = vld [vmem:[%s2 + $0x2c] sm:$0xf]
        %v570 = vld [vmem:[%s2 + $0x30] sm:$0xf]
        %v571 = vld [vmem:[%s2 + $0x34] sm:$0xf]
        %v572 = vld [vmem:[%s2 + $0x38] sm:$0xf]
        %v573 = vld [vmem:[%s2 + $0x3c] sm:$0xf]
        %v574 = vld [vmem:[%s3] sm:$0x1]
        %v576 = vperm.slane %v574, 0
        %v594 = vunpack.c.l.b16 %v558
        %v595 = vunpack.c.l.b16 %v559
        %v596 = vunpack.c.l.b16 %v560
        %v597 = vunpack.c.l.b16 %v561
        %v598 = vunpack.c.l.b16 %v562
        %v599 = vunpack.c.l.b16 %v563
        %v600 = vunpack.c.l.b16 %v564
        %v601 = vunpack.c.l.b16 %v565
        %v602 = vunpack.c.l.b16 %v566
        %v603 = vunpack.c.l.b16 %v567
        %v604 = vunpack.c.l.b16 %v568
        %v605 = vunpack.c.l.b16 %v569
        %v606 = vunpack.c.l.b16 %v570
        %v607 = vunpack.c.l.b16 %v571
        %v608 = vunpack.c.l.b16 %v572
        %v609 = vunpack.c.l.b16 %v573
        %v610 = vpack.c.b16 %v595, %v594
        %v611 = vpack.c.b16 %v597, %v596
        %v612 = vpack.c.b16 %v599, %v598
        %v613 = vpack.c.b16 %v601, %v600
        %v614 = vpack.c.b16 %v603, %v602
        %v615 = vpack.c.b16 %v605, %v604
        %v616 = vpack.c.b16 %v607, %v606
        %v617 = vpack.c.b16 %v609, %v608
        %626 = vmatpush.bf16.msra.mxu0 %v617
        %627 = vmatpush.bf16.msra.mxu0 %v616
        %628 = vmatpush.bf16.msra.mxu0 %v615
        %629 = vmatpush.bf16.msra.mxu0 %v614
        %630 = vmatpush.bf16.msra.mxu0 %v613
        %631 = vmatpush.bf16.msra.mxu0 %v612
        %632 = vmatpush.bf16.msra.mxu0 %v611
        %633 = vmatpush.bf16.msra.mxu0 %v610
        %634 = vmatmul.bf16.gmra.mxu0 %v554
        %v635 = vpop.f32.mrf.mxu0
        %v636 = vadd.f32 %v576, %v635
        %v637 = vpop.f32.mrf.mxu0
        %v638 = vadd.f32 %v576, %v637
        %639 = vmatmul.bf16.gmra.mxu0 %v555
        %v640 = vpop.f32.mrf.mxu0
        %v641 = vadd.f32 %v576, %v640
        %v642 = vpop.f32.mrf.mxu0
        %v643 = vadd.f32 %v576, %v642
        %644 = vmatmul.bf16.gmra.mxu0 %v556
        %v645 = vpop.f32.mrf.mxu0
        %v646 = vadd.f32 %v576, %v645
        %v647 = vpop.f32.mrf.mxu0
        %v648 = vadd.f32 %v576, %v647
        %649 = vmatmul.bf16.gmra.mxu0 %v557
        %v650 = vpop.f32.mrf.mxu0
        %v651 = vadd.f32 %v576, %v650
        %v652 = vpop.f32.mrf.mxu0
        %v653 = vadd.f32 %v576, %v652
        %654 = vdwg.mxu0
        %v655 = vld [vmem:[%s542] sm:$0xff]
        %v656 = vld [vmem:[%s542 + $0x8] sm:$0xff]
        %v657 = vld [vmem:[%s542 + $0x10] sm:$0xff]
        %v658 = vld [vmem:[%s542 + $0x18] sm:$0xff]
        %v659 = vpack.c.bf16 %v656, %v655
        %v660 = vpack.c.bf16 %v658, %v657
        %v661 = vld [vmem:[%s4] sm:$0xf]
        %v662 = vld [vmem:[%s4 + $0x4] sm:$0xf]
        %v663 = vld [vmem:[%s4 + $0x8] sm:$0xf]
        %v664 = vld [vmem:[%s4 + $0xc] sm:$0xf]
        %v665 = vld [vmem:[%s4 + $0x10] sm:$0xf]
        %v666 = vld [vmem:[%s4 + $0x14] sm:$0xf]
        %v667 = vld [vmem:[%s4 + $0x18] sm:$0xf]
        %v668 = vld [vmem:[%s4 + $0x1c] sm:$0xf]
        %v669 = vld [vmem:[%s4 + $0x20] sm:$0xf]
        %v670 = vld [vmem:[%s4 + $0x24] sm:$0xf]
        %v671 = vld [vmem:[%s4 + $0x28] sm:$0xf]
        %v672 = vld [vmem:[%s4 + $0x2c] sm:$0xf]
        %v673 = vld [vmem:[%s4 + $0x30] sm:$0xf]
        %v674 = vld [vmem:[%s4 + $0x34] sm:$0xf]
        %v675 = vld [vmem:[%s4 + $0x38] sm:$0xf]
        %v676 = vld [vmem:[%s4 + $0x3c] sm:$0xf]
        %v677 = vld [vmem:[%s5] sm:$0x1]
        %v679 = vperm.slane %v677, 0
        %v697 = vunpack.c.l.b16 %v661
        %v698 = vunpack.c.l.b16 %v662
        %v699 = vunpack.c.l.b16 %v663
        %v700 = vunpack.c.l.b16 %v664
        %v701 = vunpack.c.l.b16 %v665
        %v702 = vunpack.c.l.b16 %v666
        %v703 = vunpack.c.l.b16 %v667
        %v704 = vunpack.c.l.b16 %v668
        %v705 = vunpack.c.l.b16 %v669
        %v706 = vunpack.c.l.b16 %v670
        %v707 = vunpack.c.l.b16 %v671
        %v708 = vunpack.c.l.b16 %v672
        %v709 = vunpack.c.l.b16 %v673
        %v710 = vunpack.c.l.b16 %v674
        %v711 = vunpack.c.l.b16 %v675
        %v712 = vunpack.c.l.b16 %v676
        %v713 = vpack.c.b16 %v698, %v697
        %v714 = vpack.c.b16 %v700, %v699
        %v715 = vpack.c.b16 %v702, %v701
        %v716 = vpack.c.b16 %v704, %v703
        %v717 = vpack.c.b16 %v706, %v705
        %v718 = vpack.c.b16 %v708, %v707
        %v719 = vpack.c.b16 %v710, %v709
        %v720 = vpack.c.b16 %v712, %v711
        %729 = vmatpush.bf16.msra.mxu0 %v720
        %730 = vmatpush.bf16.msra.mxu0 %v719
        %731 = vmatpush.bf16.msra.mxu0 %v718
        %732 = vmatpush.bf16.msra.mxu0 %v717
        %733 = vmatpush.bf16.msra.mxu0 %v716
        %734 = vmatpush.bf16.msra.mxu0 %v715
        %735 = vmatpush.bf16.msra.mxu0 %v714
        %736 = vmatpush.bf16.msra.mxu0 %v713
        %737 = vmatmul.bf16.gmra.mxu0 %v659
        %v738 = vpop.f32.mrf.mxu0
        %v739 = vadd.f32 %v679, %v738
        %v740 = vpop.f32.mrf.mxu0
        %v741 = vadd.f32 %v679, %v740
        %742 = vmatmul.bf16.gmra.mxu0 %v660
        %v743 = vpop.f32.mrf.mxu0
        %v744 = vadd.f32 %v679, %v743
        %v745 = vpop.f32.mrf.mxu0
        %v746 = vadd.f32 %v679, %v745
        %747 = vdwg.mxu0
        %v748 = vmul.f32 %v636, 0.35355338
        %v749 = vmul.f32 %v638, 0.35355338
        %v750 = vmul.f32 %v641, 0.35355338
        %v751 = vmul.f32 %v643, 0.35355338
        %v752 = vlaneseq
        %v753 = vshrl.u32 %v752, 7
        %v754 = vadd.s32 %v753, 8
        %v755 = vlaneseq
        %v756 = vand.u32 %v755, 127
        %vm757 = vcmp.lt.s32.totalorder %v756, %v753
        %vm758 = vcmp.lt.s32.totalorder %v756, %v754
        %vm759 = vcmp.gt.s32.totalorder %v753, 0
        %vm760 = vcmp.gt.s32.totalorder %v754, 0
        %v761 = vpack.c.bf16 %v748, %v748
        %v762 = vpack.c.bf16 %v749, %v749
        %v763 = vpack.c.bf16 %v750, %v750
        %v764 = vpack.c.bf16 %v751, %v751
        %v765 = vpack.c.bf16 %v646, %v646
        %v766 = vpack.c.bf16 %v648, %v648
        %v767 = vpack.c.bf16 %v651, %v651
        %v768 = vpack.c.bf16 %v653, %v653
        %v769 = vpack.c.bf16 %v739, %v739
        %v770 = vpack.c.bf16 %v741, %v741
        %v771 = vpack.c.bf16 %v744, %v744
        %v772 = vpack.c.bf16 %v746, %v746
        %v775 = vunpack.c.l.b16 %v761
        %v776 = vunpack.c.l.b16 %v762
        %v777 = vpack.c.b16 %v776, %v775
        %v780 = vunpack.c.l.b16 %v765
        %v781 = vunpack.c.l.b16 %v766
        %v782 = vpack.c.b16 %v781, %v780
        %vm783 = vcmask 64512
        %v785 = vsel %vm783, %v777, 0
        %v788 = vsel %vm783, %v782, 0
        %790 = vmatpush.bf16.xpose.msra.mxu0 0
        %791 = vmatpush.bf16.xpose.msra.mxu0 0
        %792 = vmatpush.bf16.xpose.msra.mxu0 0
        %793 = vmatpush.bf16.xpose.msra.mxu0 0
        %794 = vmatpush.bf16.xpose.msra.mxu0 0
        %795 = vmatpush.bf16.xpose.msra.mxu0 0
        %796 = vmatpush.bf16.xpose.msra.mxu0 0
        %797 = vmatpush.bf16.xpose.msra.mxu0 %v788
        %798 = vmatmul.bf16.gmra.mxu0 %v785
        %v799 = vpop.f32.mrf.mxu0
        %v800 = vadd.f32 0.0, %v799
        %v801 = vpop.f32.mrf.mxu0
        %v802 = vadd.f32 0.0, %v801
        %803 = vdwg.mxu0
        %v806 = vunpack.c.l.b16 %v763
        %v807 = vunpack.c.l.b16 %v764
        %v808 = vpack.c.b16 %v807, %v806
        %v811 = vunpack.c.l.b16 %v767
        %v812 = vunpack.c.l.b16 %v768
        %v813 = vpack.c.b16 %v812, %v811
        %v815 = vsel %vm783, %v808, 0
        %v818 = vsel %vm783, %v813, 0
        %820 = vmatpush.bf16.xpose.msra.mxu0 0
        %821 = vmatpush.bf16.xpose.msra.mxu0 0
        %822 = vmatpush.bf16.xpose.msra.mxu0 0
        %823 = vmatpush.bf16.xpose.msra.mxu0 0
        %824 = vmatpush.bf16.xpose.msra.mxu0 0
        %825 = vmatpush.bf16.xpose.msra.mxu0 0
        %826 = vmatpush.bf16.xpose.msra.mxu0 0
        %827 = vmatpush.bf16.xpose.msra.mxu0 %v818
        %828 = vmatmul.bf16.gmra.mxu0 %v815
        %v829 = vpop.f32.mrf.mxu0
        %v830 = vadd.f32 0.0, %v829
        %v831 = vpop.f32.mrf.mxu0
        %v832 = vadd.f32 0.0, %v831
        %833 = vdwg.mxu0
        %v834 = vsel %vm757, 1, 0
        %v835 = vsel %vm758, 1, 0
        %vm836 = vcmp.eq.s32.totalorder %v834, 1
        %vm837 = vcmp.eq.s32.totalorder %v835, 1
        %v838 = vsel %vm836, %v800, -1e+32
        %v839 = vsel %vm837, %v802, -1e+32
        %v840 = vsel %vm836, %v830, -1e+32
        %v841 = vsel %vm837, %v832, -1e+32
        %vm842 = vcmask 130048
        %v843 = vsel %vm842, %v838, -inf
        %844 = vmax.xlane.f32.xlu0 %v843
        %v845 = vpop.xlane.xlu0 %844
        %v846 = vsel %vm842, %v839, -inf
        %847 = vmax.xlane.f32.xlu0 %v846
        %v848 = vpop.xlane.xlu0 %847
        %v849 = vsel %vm842, %v840, -inf
        %850 = vmax.xlane.f32.xlu0 %v849
        %v851 = vpop.xlane.xlu0 %850
        %v852 = vsel %vm842, %v841, -inf
        %853 = vmax.xlane.f32.xlu0 %v852
        %v854 = vpop.xlane.xlu0 %853
        %v855 = vsub.f32 %v838, %v845
        %v856 = vsub.f32 %v839, %v848
        %v857 = vsub.f32 %v840, %v851
        %v858 = vsub.f32 %v841, %v854
        %v859 = vmul.f32 %v855, 1.442695
        %v860 = vpow.pop %v859
        %v861 = vmul.f32 %v856, 1.442695
        %v862 = vpow.pop %v861
        %v863 = vmul.f32 %v857, 1.442695
        %v864 = vpow.pop %v863
        %v865 = vmul.f32 %v858, 1.442695
        %v866 = vpow.pop %v865
        %v867 = vsel %vm842, %v860, 0.0
        %868 = vadd.xlane.f32.xlu0 %v867
        %v869 = vpop.xlane.xlu0 %868
        %v870 = vsel %vm842, %v862, 0.0
        %871 = vadd.xlane.f32.xlu0 %v870
        %v872 = vpop.xlane.xlu0 %871
        %v873 = vsel %vm842, %v864, 0.0
        %874 = vadd.xlane.f32.xlu0 %v873
        %v875 = vpop.xlane.xlu0 %874
        %v876 = vsel %vm842, %v866, 0.0
        %877 = vadd.xlane.f32.xlu0 %v876
        %v878 = vpop.xlane.xlu0 %877
        %v879 = vrcp.pop %v869
        %v880 = vrcp.pop %v872
        %v881 = vrcp.pop %v875
        %v882 = vrcp.pop %v878
        %v883 = vmul.f32 %v869, %v879
        %v884 = vmul.f32 %v872, %v880
        %v885 = vmul.f32 %v875, %v881
        %v886 = vmul.f32 %v878, %v882
        %v887 = vsub.f32 2.0, %v883
        %v888 = vsub.f32 2.0, %v884
        %v889 = vsub.f32 2.0, %v885
        %v890 = vsub.f32 2.0, %v886
        %v891 = vmul.f32 %v879, %v887
        %v892 = vmul.f32 %v880, %v888
        %v893 = vmul.f32 %v881, %v889
        %v894 = vmul.f32 %v882, %v890
        %v895 = vmul.f32 %v860, %v891
        %v896 = vmul.f32 %v862, %v892
        %v897 = vmul.f32 %v864, %v893
        %v898 = vmul.f32 %v866, %v894
        %v899 = vsel %vm759, 1, 0
        %v900 = vsel %vm760, 1, 0
        %vm901 = vcmp.eq.s32.totalorder %v899, 1
        %vm902 = vcmp.eq.s32.totalorder %v900, 1
        %v903 = vsel %vm901, %v895, 0.0
        %v904 = vsel %vm902, %v896, 0.0
        %v905 = vsel %vm901, %v897, 0.0
        %v906 = vsel %vm902, %v898, 0.0
        %v907 = vpack.c.bf16 %v903, %v903
        %v908 = vpack.c.bf16 %v904, %v904
        %v909 = vpack.c.bf16 %v905, %v905
        %v910 = vpack.c.bf16 %v906, %v906
        %v913 = vunpack.c.l.b16 %v907
        %v914 = vunpack.c.l.b16 %v908
        %v915 = vpack.c.b16 %v914, %v913
        %v918 = vunpack.c.l.b16 %v769
        %v919 = vunpack.c.l.b16 %v770
        %v920 = vpack.c.b16 %v919, %v918
        %v923 = vsel %vm842, %v915, 0
        %925 = vmatpush.bf16.msra.mxu0 0
        %926 = vmatpush.bf16.msra.mxu0 0
        %927 = vmatpush.bf16.msra.mxu0 0
        %928 = vmatpush.bf16.msra.mxu0 0
        %929 = vmatpush.bf16.msra.mxu0 0
        %930 = vmatpush.bf16.msra.mxu0 0
        %931 = vmatpush.bf16.msra.mxu0 0
        %932 = vmatpush.bf16.msra.mxu0 %v920
        %933 = vmatmul.bf16.gmra.mxu0 %v923
        %v934 = vpop.f32.mrf.mxu0
        %v935 = vadd.f32 0.0, %v934
        %v936 = vpop.f32.mrf.mxu0
        %v937 = vadd.f32 0.0, %v936
        %938 = vdwg.mxu0
        %v941 = vunpack.c.l.b16 %v909
        %v942 = vunpack.c.l.b16 %v910
        %v943 = vpack.c.b16 %v942, %v941
        %v946 = vunpack.c.l.b16 %v771
        %v947 = vunpack.c.l.b16 %v772
        %v948 = vpack.c.b16 %v947, %v946
        %v951 = vsel %vm842, %v943, 0
        %953 = vmatpush.bf16.msra.mxu0 0
        %954 = vmatpush.bf16.msra.mxu0 0
        %955 = vmatpush.bf16.msra.mxu0 0
        %956 = vmatpush.bf16.msra.mxu0 0
        %957 = vmatpush.bf16.msra.mxu0 0
        %958 = vmatpush.bf16.msra.mxu0 0
        %959 = vmatpush.bf16.msra.mxu0 0
        %960 = vmatpush.bf16.msra.mxu0 %v948
        %961 = vmatmul.bf16.gmra.mxu0 %v951
        %v962 = vpop.f32.mrf.mxu0
        %v963 = vadd.f32 0.0, %v962
        %v964 = vpop.f32.mrf.mxu0
        %v965 = vadd.f32 0.0, %v964
        %966 = vdwg.mxu0
        %967 = vrot.lane.b32.xlu0 %v777, 120
        %v968 = vpop.permute.xlu0 %967
        %969 = vrot.lane.b32.xlu0 %v782, 120
        %v970 = vpop.permute.xlu0 %969
        %v972 = vsel %vm783, %v968, 0
        %v975 = vsel %vm783, %v970, 0
        %977 = vmatpush.bf16.xpose.msra.mxu0 0
        %978 = vmatpush.bf16.xpose.msra.mxu0 0
        %979 = vmatpush.bf16.xpose.msra.mxu0 0
        %980 = vmatpush.bf16.xpose.msra.mxu0 0
        %981 = vmatpush.bf16.xpose.msra.mxu0 0
        %982 = vmatpush.bf16.xpose.msra.mxu0 0
        %983 = vmatpush.bf16.xpose.msra.mxu0 0
        %984 = vmatpush.bf16.xpose.msra.mxu0 %v975
        %985 = vmatmul.bf16.gmra.mxu0 %v972
        %v986 = vpop.f32.mrf.mxu0
        %v987 = vadd.f32 0.0, %v986
        %v988 = vpop.f32.mrf.mxu0
        %v989 = vadd.f32 0.0, %v988
        %990 = vdwg.mxu0
        %991 = vrot.lane.b32.xlu0 %v808, 120
        %v992 = vpop.permute.xlu0 %991
        %993 = vrot.lane.b32.xlu0 %v813, 120
        %v994 = vpop.permute.xlu0 %993
        %v996 = vsel %vm783, %v992, 0
        %v999 = vsel %vm783, %v994, 0
        %1001 = vmatpush.bf16.xpose.msra.mxu0 0
        %1002 = vmatpush.bf16.xpose.msra.mxu0 0
        %1003 = vmatpush.bf16.xpose.msra.mxu0 0
        %1004 = vmatpush.bf16.xpose.msra.mxu0 0
        %1005 = vmatpush.bf16.xpose.msra.mxu0 0
        %1006 = vmatpush.bf16.xpose.msra.mxu0 0
        %1007 = vmatpush.bf16.xpose.msra.mxu0 0
        %1008 = vmatpush.bf16.xpose.msra.mxu0 %v999
        %1009 = vmatmul.bf16.gmra.mxu0 %v996
        %v1010 = vpop.f32.mrf.mxu0
        %v1011 = vadd.f32 0.0, %v1010
        %v1012 = vpop.f32.mrf.mxu0
        %v1013 = vadd.f32 0.0, %v1012
        %1014 = vdwg.mxu0
        %v1015 = vsel %vm836, %v987, -1e+32
        %v1016 = vsel %vm837, %v989, -1e+32
        %v1017 = vsel %vm836, %v1011, -1e+32
        %v1018 = vsel %vm837, %v1013, -1e+32
        %v1019 = vsel %vm842, %v1015, -inf
        %1020 = vmax.xlane.f32.xlu0 %v1019
        %v1021 = vpop.xlane.xlu0 %1020
        %v1022 = vsel %vm842, %v1016, -inf
        %1023 = vmax.xlane.f32.xlu0 %v1022
        %v1024 = vpop.xlane.xlu0 %1023
        %v1025 = vsel %vm842, %v1017, -inf
        %1026 = vmax.xlane.f32.xlu0 %v1025
        %v1027 = vpop.xlane.xlu0 %1026
        %v1028 = vsel %vm842, %v1018, -inf
        %1029 = vmax.xlane.f32.xlu0 %v1028
        %v1030 = vpop.xlane.xlu0 %1029
        %v1031 = vsub.f32 %v1015, %v1021
        %v1032 = vsub.f32 %v1016, %v1024
        %v1033 = vsub.f32 %v1017, %v1027
        %v1034 = vsub.f32 %v1018, %v1030
        %v1035 = vmul.f32 %v1031, 1.442695
        %v1036 = vpow.pop %v1035
        %v1037 = vmul.f32 %v1032, 1.442695
        %v1038 = vpow.pop %v1037
        %v1039 = vmul.f32 %v1033, 1.442695
        %v1040 = vpow.pop %v1039
        %v1041 = vmul.f32 %v1034, 1.442695
        %v1042 = vpow.pop %v1041
        %v1043 = vsel %vm842, %v1036, 0.0
        %1044 = vadd.xlane.f32.xlu0 %v1043
        %v1045 = vpop.xlane.xlu0 %1044
        %v1046 = vsel %vm842, %v1038, 0.0
        %1047 = vadd.xlane.f32.xlu0 %v1046
        %v1048 = vpop.xlane.xlu0 %1047
        %v1049 = vsel %vm842, %v1040, 0.0
        %1050 = vadd.xlane.f32.xlu0 %v1049
        %v1051 = vpop.xlane.xlu0 %1050
        %v1052 = vsel %vm842, %v1042, 0.0
        %1053 = vadd.xlane.f32.xlu0 %v1052
        %v1054 = vpop.xlane.xlu0 %1053
        %v1055 = vrcp.pop %v1045
        %v1056 = vrcp.pop %v1048
        %v1057 = vrcp.pop %v1051
        %v1058 = vrcp.pop %v1054
        %v1059 = vmul.f32 %v1045, %v1055
        %v1060 = vmul.f32 %v1048, %v1056
        %v1061 = vmul.f32 %v1051, %v1057
        %v1062 = vmul.f32 %v1054, %v1058
        %v1063 = vsub.f32 2.0, %v1059
        %v1064 = vsub.f32 2.0, %v1060
        %v1065 = vsub.f32 2.0, %v1061
        %v1066 = vsub.f32 2.0, %v1062
        %v1067 = vmul.f32 %v1055, %v1063
        %v1068 = vmul.f32 %v1056, %v1064
        %v1069 = vmul.f32 %v1057, %v1065
        %v1070 = vmul.f32 %v1058, %v1066
        %v1071 = vmul.f32 %v1036, %v1067
        %v1072 = vmul.f32 %v1038, %v1068
        %v1073 = vmul.f32 %v1040, %v1069
        %v1074 = vmul.f32 %v1042, %v1070
        %v1075 = vsel %vm901, %v1071, 0.0
        %v1076 = vsel %vm902, %v1072, 0.0
        %v1077 = vsel %vm901, %v1073, 0.0
        %v1078 = vsel %vm902, %v1074, 0.0
        %v1079 = vpack.c.bf16 %v1075, %v1075
        %v1080 = vpack.c.bf16 %v1076, %v1076
        %v1081 = vpack.c.bf16 %v1077, %v1077
        %v1082 = vpack.c.bf16 %v1078, %v1078
        %v1085 = vunpack.c.l.b16 %v1079
        %v1086 = vunpack.c.l.b16 %v1080
        %v1087 = vpack.c.b16 %v1086, %v1085
        %1088 = vrot.lane.b32.xlu0 %v920, 120
        %v1089 = vpop.permute.xlu0 %1088
        %v1092 = vsel %vm842, %v1087, 0
        %1094 = vmatpush.bf16.msra.mxu0 0
        %1095 = vmatpush.bf16.msra.mxu0 0
        %1096 = vmatpush.bf16.msra.mxu0 0
        %1097 = vmatpush.bf16.msra.mxu0 0
        %1098 = vmatpush.bf16.msra.mxu0 0
        %1099 = vmatpush.bf16.msra.mxu0 0
        %1100 = vmatpush.bf16.msra.mxu0 0
        %1101 = vmatpush.bf16.msra.mxu0 %v1089
        %1102 = vmatmul.bf16.gmra.mxu0 %v1092
        %v1103 = vpop.f32.mrf.mxu0
        %v1104 = vadd.f32 0.0, %v1103
        %v1105 = vpop.f32.mrf.mxu0
        %v1106 = vadd.f32 0.0, %v1105
        %1107 = vdwg.mxu0
        %v1110 = vunpack.c.l.b16 %v1081
        %v1111 = vunpack.c.l.b16 %v1082
        %v1112 = vpack.c.b16 %v1111, %v1110
        %1113 = vrot.lane.b32.xlu0 %v948, 120
        %v1114 = vpop.permute.xlu0 %1113
        %v1117 = vsel %vm842, %v1112, 0
        %1119 = vmatpush.bf16.msra.mxu0 0
        %1120 = vmatpush.bf16.msra.mxu0 0
        %1121 = vmatpush.bf16.msra.mxu0 0
        %1122 = vmatpush.bf16.msra.mxu0 0
        %1123 = vmatpush.bf16.msra.mxu0 0
        %1124 = vmatpush.bf16.msra.mxu0 0
        %1125 = vmatpush.bf16.msra.mxu0 0
        %1126 = vmatpush.bf16.msra.mxu0 %v1114
        %1127 = vmatmul.bf16.gmra.mxu0 %v1117
        %v1128 = vpop.f32.mrf.mxu0
        %v1129 = vadd.f32 0.0, %v1128
        %v1130 = vpop.f32.mrf.mxu0
        %v1131 = vadd.f32 0.0, %v1130
        %1132 = vdwg.mxu0
        %1133 = vrot.lane.b32.xlu0 %v777, 112
        %v1134 = vpop.permute.xlu0 %1133
        %1135 = vrot.lane.b32.xlu0 %v782, 112
        %v1136 = vpop.permute.xlu0 %1135
        %v1138 = vsel %vm783, %v1134, 0
        %v1141 = vsel %vm783, %v1136, 0
        %1143 = vmatpush.bf16.xpose.msra.mxu0 0
        %1144 = vmatpush.bf16.xpose.msra.mxu0 0
        %1145 = vmatpush.bf16.xpose.msra.mxu0 0
        %1146 = vmatpush.bf16.xpose.msra.mxu0 0
        %1147 = vmatpush.bf16.xpose.msra.mxu0 0
        %1148 = vmatpush.bf16.xpose.msra.mxu0 0
        %1149 = vmatpush.bf16.xpose.msra.mxu0 0
        %1150 = vmatpush.bf16.xpose.msra.mxu0 %v1141
        %1151 = vmatmul.bf16.gmra.mxu0 %v1138
        %v1152 = vpop.f32.mrf.mxu0
        %v1153 = vadd.f32 0.0, %v1152
        %v1154 = vpop.f32.mrf.mxu0
        %v1155 = vadd.f32 0.0, %v1154
        %1156 = vdwg.mxu0
        %1157 = vrot.lane.b32.xlu0 %v808, 112
        %v1158 = vpop.permute.xlu0 %1157
        %1159 = vrot.lane.b32.xlu0 %v813, 112
        %v1160 = vpop.permute.xlu0 %1159
        %v1162 = vsel %vm783, %v1158, 0
        %v1165 = vsel %vm783, %v1160, 0
        %1167 = vmatpush.bf16.xpose.msra.mxu0 0
        %1168 = vmatpush.bf16.xpose.msra.mxu0 0
        %1169 = vmatpush.bf16.xpose.msra.mxu0 0
        %1170 = vmatpush.bf16.xpose.msra.mxu0 0
        %1171 = vmatpush.bf16.xpose.msra.mxu0 0
        %1172 = vmatpush.bf16.xpose.msra.mxu0 0
        %1173 = vmatpush.bf16.xpose.msra.mxu0 0
        %1174 = vmatpush.bf16.xpose.msra.mxu0 %v1165
        %1175 = vmatmul.bf16.gmra.mxu0 %v1162
        %v1176 = vpop.f32.mrf.mxu0
        %v1177 = vadd.f32 0.0, %v1176
        %v1178 = vpop.f32.mrf.mxu0
        %v1179 = vadd.f32 0.0, %v1178
        %1180 = vdwg.mxu0
        %v1181 = vsel %vm836, %v1153, -1e+32
        %v1182 = vsel %vm837, %v1155, -1e+32
        %v1183 = vsel %vm836, %v1177, -1e+32
        %v1184 = vsel %vm837, %v1179, -1e+32
        %v1185 = vsel %vm842, %v1181, -inf
        %1186 = vmax.xlane.f32.xlu0 %v1185
        %v1187 = vpop.xlane.xlu0 %1186
        %v1188 = vsel %vm842, %v1182, -inf
        %1189 = vmax.xlane.f32.xlu0 %v1188
        %v1190 = vpop.xlane.xlu0 %1189
        %v1191 = vsel %vm842, %v1183, -inf
        %1192 = vmax.xlane.f32.xlu0 %v1191
        %v1193 = vpop.xlane.xlu0 %1192
        %v1194 = vsel %vm842, %v1184, -inf
        %1195 = vmax.xlane.f32.xlu0 %v1194
        %v1196 = vpop.xlane.xlu0 %1195
        %v1197 = vsub.f32 %v1181, %v1187
        %v1198 = vsub.f32 %v1182, %v1190
        %v1199 = vsub.f32 %v1183, %v1193
        %v1200 = vsub.f32 %v1184, %v1196
        %v1201 = vmul.f32 %v1197, 1.442695
        %v1202 = vpow.pop %v1201
        %v1203 = vmul.f32 %v1198, 1.442695
        %v1204 = vpow.pop %v1203
        %v1205 = vmul.f32 %v1199, 1.442695
        %v1206 = vpow.pop %v1205
        %v1207 = vmul.f32 %v1200, 1.442695
        %v1208 = vpow.pop %v1207
        %v1209 = vsel %vm842, %v1202, 0.0
        %1210 = vadd.xlane.f32.xlu0 %v1209
        %v1211 = vpop.xlane.xlu0 %1210
        %v1212 = vsel %vm842, %v1204, 0.0
        %1213 = vadd.xlane.f32.xlu0 %v1212
        %v1214 = vpop.xlane.xlu0 %1213
        %v1215 = vsel %vm842, %v1206, 0.0
        %1216 = vadd.xlane.f32.xlu0 %v1215
        %v1217 = vpop.xlane.xlu0 %1216
        %v1218 = vsel %vm842, %v1208, 0.0
        %1219 = vadd.xlane.f32.xlu0 %v1218
        %v1220 = vpop.xlane.xlu0 %1219
        %v1221 = vrcp.pop %v1211
        %v1222 = vrcp.pop %v1214
        %v1223 = vrcp.pop %v1217
        %v1224 = vrcp.pop %v1220
        %v1225 = vmul.f32 %v1211, %v1221
        %v1226 = vmul.f32 %v1214, %v1222
        %v1227 = vmul.f32 %v1217, %v1223
        %v1228 = vmul.f32 %v1220, %v1224
        %v1229 = vsub.f32 2.0, %v1225
        %v1230 = vsub.f32 2.0, %v1226
        %v1231 = vsub.f32 2.0, %v1227
        %v1232 = vsub.f32 2.0, %v1228
        %v1233 = vmul.f32 %v1221, %v1229
        %v1234 = vmul.f32 %v1222, %v1230
        %v1235 = vmul.f32 %v1223, %v1231
        %v1236 = vmul.f32 %v1224, %v1232
        %v1237 = vmul.f32 %v1202, %v1233
        %v1238 = vmul.f32 %v1204, %v1234
        %v1239 = vmul.f32 %v1206, %v1235
        %v1240 = vmul.f32 %v1208, %v1236
        %v1241 = vsel %vm901, %v1237, 0.0
        %v1242 = vsel %vm902, %v1238, 0.0
        %v1243 = vsel %vm901, %v1239, 0.0
        %v1244 = vsel %vm902, %v1240, 0.0
        %v1245 = vpack.c.bf16 %v1241, %v1241
        %v1246 = vpack.c.bf16 %v1242, %v1242
        %v1247 = vpack.c.bf16 %v1243, %v1243
        %v1248 = vpack.c.bf16 %v1244, %v1244
        %v1251 = vunpack.c.l.b16 %v1245
        %v1252 = vunpack.c.l.b16 %v1246
        %v1253 = vpack.c.b16 %v1252, %v1251
        %1254 = vrot.lane.b32.xlu0 %v920, 112
        %v1255 = vpop.permute.xlu0 %1254
        %v1258 = vsel %vm842, %v1253, 0
        %1260 = vmatpush.bf16.msra.mxu0 0
        %1261 = vmatpush.bf16.msra.mxu0 0
        %1262 = vmatpush.bf16.msra.mxu0 0
        %1263 = vmatpush.bf16.msra.mxu0 0
        %1264 = vmatpush.bf16.msra.mxu0 0
        %1265 = vmatpush.bf16.msra.mxu0 0
        %1266 = vmatpush.bf16.msra.mxu0 0
        %1267 = vmatpush.bf16.msra.mxu0 %v1255
        %1268 = vmatmul.bf16.gmra.mxu0 %v1258
        %v1269 = vpop.f32.mrf.mxu0
        %v1270 = vadd.f32 0.0, %v1269
        %v1271 = vpop.f32.mrf.mxu0
        %v1272 = vadd.f32 0.0, %v1271
        %1273 = vdwg.mxu0
        %v1276 = vunpack.c.l.b16 %v1247
        %v1277 = vunpack.c.l.b16 %v1248
        %v1278 = vpack.c.b16 %v1277, %v1276
        %1279 = vrot.lane.b32.xlu0 %v948, 112
        %v1280 = vpop.permute.xlu0 %1279
        %v1283 = vsel %vm842, %v1278, 0
        %1285 = vmatpush.bf16.msra.mxu0 0
        %1286 = vmatpush.bf16.msra.mxu0 0
        %1287 = vmatpush.bf16.msra.mxu0 0
        %1288 = vmatpush.bf16.msra.mxu0 0
        %1289 = vmatpush.bf16.msra.mxu0 0
        %1290 = vmatpush.bf16.msra.mxu0 0
        %1291 = vmatpush.bf16.msra.mxu0 0
        %1292 = vmatpush.bf16.msra.mxu0 %v1280
        %1293 = vmatmul.bf16.gmra.mxu0 %v1283
        %v1294 = vpop.f32.mrf.mxu0
        %v1295 = vadd.f32 0.0, %v1294
        %v1296 = vpop.f32.mrf.mxu0
        %v1297 = vadd.f32 0.0, %v1296
        %1298 = vdwg.mxu0
        %1299 = vrot.lane.b32.xlu0 %v777, 104
        %v1300 = vpop.permute.xlu0 %1299
        %1301 = vrot.lane.b32.xlu0 %v782, 104
        %v1302 = vpop.permute.xlu0 %1301
        %v1304 = vsel %vm783, %v1300, 0
        %v1307 = vsel %vm783, %v1302, 0
        %1309 = vmatpush.bf16.xpose.msra.mxu0 0
        %1310 = vmatpush.bf16.xpose.msra.mxu0 0
        %1311 = vmatpush.bf16.xpose.msra.mxu0 0
        %1312 = vmatpush.bf16.xpose.msra.mxu0 0
        %1313 = vmatpush.bf16.xpose.msra.mxu0 0
        %1314 = vmatpush.bf16.xpose.msra.mxu0 0
        %1315 = vmatpush.bf16.xpose.msra.mxu0 0
        %1316 = vmatpush.bf16.xpose.msra.mxu0 %v1307
        %1317 = vmatmul.bf16.gmra.mxu0 %v1304
        %v1318 = vpop.f32.mrf.mxu0
        %v1319 = vadd.f32 0.0, %v1318
        %v1320 = vpop.f32.mrf.mxu0
        %v1321 = vadd.f32 0.0, %v1320
        %1322 = vdwg.mxu0
        %1323 = vrot.lane.b32.xlu0 %v808, 104
        %v1324 = vpop.permute.xlu0 %1323
        %1325 = vrot.lane.b32.xlu0 %v813, 104
        %v1326 = vpop.permute.xlu0 %1325
        %v1328 = vsel %vm783, %v1324, 0
        %v1331 = vsel %vm783, %v1326, 0
        %1333 = vmatpush.bf16.xpose.msra.mxu0 0
        %1334 = vmatpush.bf16.xpose.msra.mxu0 0
        %1335 = vmatpush.bf16.xpose.msra.mxu0 0
        %1336 = vmatpush.bf16.xpose.msra.mxu0 0
        %1337 = vmatpush.bf16.xpose.msra.mxu0 0
        %1338 = vmatpush.bf16.xpose.msra.mxu0 0
        %1339 = vmatpush.bf16.xpose.msra.mxu0 0
        %1340 = vmatpush.bf16.xpose.msra.mxu0 %v1331
        %1341 = vmatmul.bf16.gmra.mxu0 %v1328
        %v1342 = vpop.f32.mrf.mxu0
        %v1343 = vadd.f32 0.0, %v1342
        %v1344 = vpop.f32.mrf.mxu0
        %v1345 = vadd.f32 0.0, %v1344
        %1346 = vdwg.mxu0
        %v1347 = vsel %vm836, %v1319, -1e+32
        %v1348 = vsel %vm837, %v1321, -1e+32
        %v1349 = vsel %vm836, %v1343, -1e+32
        %v1350 = vsel %vm837, %v1345, -1e+32
        %v1351 = vsel %vm842, %v1347, -inf
        %1352 = vmax.xlane.f32.xlu0 %v1351
        %v1353 = vpop.xlane.xlu0 %1352
        %v1354 = vsel %vm842, %v1348, -inf
        %1355 = vmax.xlane.f32.xlu0 %v1354
        %v1356 = vpop.xlane.xlu0 %1355
        %v1357 = vsel %vm842, %v1349, -inf
        %1358 = vmax.xlane.f32.xlu0 %v1357
        %v1359 = vpop.xlane.xlu0 %1358
        %v1360 = vsel %vm842, %v1350, -inf
        %1361 = vmax.xlane.f32.xlu0 %v1360
        %v1362 = vpop.xlane.xlu0 %1361
        %v1363 = vsub.f32 %v1347, %v1353
        %v1364 = vsub.f32 %v1348, %v1356
        %v1365 = vsub.f32 %v1349, %v1359
        %v1366 = vsub.f32 %v1350, %v1362
        %v1367 = vmul.f32 %v1363, 1.442695
        %v1368 = vpow.pop %v1367
        %v1369 = vmul.f32 %v1364, 1.442695
        %v1370 = vpow.pop %v1369
        %v1371 = vmul.f32 %v1365, 1.442695
        %v1372 = vpow.pop %v1371
        %v1373 = vmul.f32 %v1366, 1.442695
        %v1374 = vpow.pop %v1373
        %v1375 = vsel %vm842, %v1368, 0.0
        %1376 = vadd.xlane.f32.xlu0 %v1375
        %v1377 = vpop.xlane.xlu0 %1376
        %v1378 = vsel %vm842, %v1370, 0.0
        %1379 = vadd.xlane.f32.xlu0 %v1378
        %v1380 = vpop.xlane.xlu0 %1379
        %v1381 = vsel %vm842, %v1372, 0.0
        %1382 = vadd.xlane.f32.xlu0 %v1381
        %v1383 = vpop.xlane.xlu0 %1382
        %v1384 = vsel %vm842, %v1374, 0.0
        %1385 = vadd.xlane.f32.xlu0 %v1384
        %v1386 = vpop.xlane.xlu0 %1385
        %v1387 = vrcp.pop %v1377
        %v1388 = vrcp.pop %v1380
        %v1389 = vrcp.pop %v1383
        %v1390 = vrcp.pop %v1386
        %v1391 = vmul.f32 %v1377, %v1387
        %v1392 = vmul.f32 %v1380, %v1388
        %v1393 = vmul.f32 %v1383, %v1389
        %v1394 = vmul.f32 %v1386, %v1390
        %v1395 = vsub.f32 2.0, %v1391
        %v1396 = vsub.f32 2.0, %v1392
        %v1397 = vsub.f32 2.0, %v1393
        %v1398 = vsub.f32 2.0, %v1394
        %v1399 = vmul.f32 %v1387, %v1395
        %v1400 = vmul.f32 %v1388, %v1396
        %v1401 = vmul.f32 %v1389, %v1397
        %v1402 = vmul.f32 %v1390, %v1398
        %v1403 = vmul.f32 %v1368, %v1399
        %v1404 = vmul.f32 %v1370, %v1400
        %v1405 = vmul.f32 %v1372, %v1401
        %v1406 = vmul.f32 %v1374, %v1402
        %v1407 = vsel %vm901, %v1403, 0.0
        %v1408 = vsel %vm902, %v1404, 0.0
        %v1409 = vsel %vm901, %v1405, 0.0
        %v1410 = vsel %vm902, %v1406, 0.0
        %v1411 = vpack.c.bf16 %v1407, %v1407
        %v1412 = vpack.c.bf16 %v1408, %v1408
        %v1413 = vpack.c.bf16 %v1409, %v1409
        %v1414 = vpack.c.bf16 %v1410, %v1410
        %v1417 = vunpack.c.l.b16 %v1411
        %v1418 = vunpack.c.l.b16 %v1412
        %v1419 = vpack.c.b16 %v1418, %v1417
        %1420 = vrot.lane.b32.xlu0 %v920, 104
        %v1421 = vpop.permute.xlu0 %1420
        %v1424 = vsel %vm842, %v1419, 0
        %1426 = vmatpush.bf16.msra.mxu0 0
        %1427 = vmatpush.bf16.msra.mxu0 0
        %1428 = vmatpush.bf16.msra.mxu0 0
        %1429 = vmatpush.bf16.msra.mxu0 0
        %1430 = vmatpush.bf16.msra.mxu0 0
        %1431 = vmatpush.bf16.msra.mxu0 0
        %1432 = vmatpush.bf16.msra.mxu0 0
        %1433 = vmatpush.bf16.msra.mxu0 %v1421
        %1434 = vmatmul.bf16.gmra.mxu0 %v1424
        %v1435 = vpop.f32.mrf.mxu0
        %v1436 = vadd.f32 0.0, %v1435
        %v1437 = vpop.f32.mrf.mxu0
        %v1438 = vadd.f32 0.0, %v1437
        %1439 = vdwg.mxu0
        %v1442 = vunpack.c.l.b16 %v1413
        %v1443 = vunpack.c.l.b16 %v1414
        %v1444 = vpack.c.b16 %v1443, %v1442
        %1445 = vrot.lane.b32.xlu0 %v948, 104
        %v1446 = vpop.permute.xlu0 %1445
        %v1449 = vsel %vm842, %v1444, 0
        %1451 = vmatpush.bf16.msra.mxu0 0
        %1452 = vmatpush.bf16.msra.mxu0 0
        %1453 = vmatpush.bf16.msra.mxu0 0
        %1454 = vmatpush.bf16.msra.mxu0 0
        %1455 = vmatpush.bf16.msra.mxu0 0
        %1456 = vmatpush.bf16.msra.mxu0 0
        %1457 = vmatpush.bf16.msra.mxu0 0
        %1458 = vmatpush.bf16.msra.mxu0 %v1446
        %1459 = vmatmul.bf16.gmra.mxu0 %v1449
        %v1460 = vpop.f32.mrf.mxu0
        %v1461 = vadd.f32 0.0, %v1460
        %v1462 = vpop.f32.mrf.mxu0
        %v1463 = vadd.f32 0.0, %v1462
        %1464 = vdwg.mxu0
        %1469 = vrot.lane.b32.xlu0 %v1104, 8
        %v1470 = vpop.permute.xlu0 %1469
        %1471 = vrot.lane.b32.xlu0 %v1106, 8
        %v1472 = vpop.permute.xlu0 %1471
        %1473 = vrot.lane.b32.xlu0 %v1129, 8
        %v1474 = vpop.permute.xlu0 %1473
        %1475 = vrot.lane.b32.xlu0 %v1131, 8
        %v1476 = vpop.permute.xlu0 %1475
        %1485 = vrot.lane.b32.xlu0 %v1270, 16
        %v1486 = vpop.permute.xlu0 %1485
        %1487 = vrot.lane.b32.xlu0 %v1272, 16
        %v1488 = vpop.permute.xlu0 %1487
        %1489 = vrot.lane.b32.xlu0 %v1295, 16
        %v1490 = vpop.permute.xlu0 %1489
        %1491 = vrot.lane.b32.xlu0 %v1297, 16
        %v1492 = vpop.permute.xlu0 %1491
        %1501 = vrot.lane.b32.xlu0 %v1436, 24
        %v1502 = vpop.permute.xlu0 %1501
        %1503 = vrot.lane.b32.xlu0 %v1438, 24
        %v1504 = vpop.permute.xlu0 %1503
        %1505 = vrot.lane.b32.xlu0 %v1461, 24
        %v1506 = vpop.permute.xlu0 %1505
        %1507 = vrot.lane.b32.xlu0 %v1463, 24
        %v1508 = vpop.permute.xlu0 %1507
        %v1513 = vsel %vm783, %v935, %v1470
        %v1514 = vsel %vm783, %v937, %v1472
        %v1515 = vsel %vm783, %v963, %v1474
        %v1516 = vsel %vm783, %v965, %v1476
        %v1517 = vsel %vm842, %v1513, %v1486
        %v1518 = vsel %vm842, %v1514, %v1488
        %v1519 = vsel %vm842, %v1515, %v1490
        %v1520 = vsel %vm842, %v1516, %v1492
        %vm1521 = vcmask 195584
        %v1522 = vsel %vm1521, %v1517, %v1502
        %v1523 = vsel %vm1521, %v1518, %v1504
        %v1524 = vsel %vm1521, %v1519, %v1506
        %v1525 = vsel %vm1521, %v1520, %v1508
        %v1526 = vpack.c.bf16 %v1523, %v1522
        %v1527 = vpack.c.bf16 %v1525, %v1524
        %v1528 = vld [vmem:[%s6] sm:$0xf]
        %v1529 = vld [vmem:[%s6 + $0x4] sm:$0xf]
        %v1530 = vld [vmem:[%s6 + $0x8] sm:$0xf]
        %v1531 = vld [vmem:[%s6 + $0xc] sm:$0xf]
        %v1532 = vld [vmem:[%s7] sm:$0x1]
        %v1534 = vperm.slane %v1532, 0
        %v1540 = vunpack.c.l.b16 %v1528
        %v1541 = vunpack.c.l.b16 %v1529
        %v1542 = vunpack.c.l.b16 %v1530
        %v1543 = vunpack.c.l.b16 %v1531
        %v1544 = vpack.c.b16 %v1541, %v1540
        %v1545 = vpack.c.b16 %v1543, %v1542
        %vm1548 = vcmask 261120
        %v1550 = vsel %vm1548, %v1526, 0
        %v1553 = vsel %vm1548, %v1527, 0
        %1555 = vmatpush.bf16.msra.mxu0 0
        %1556 = vmatpush.bf16.msra.mxu0 0
        %1557 = vmatpush.bf16.msra.mxu0 0
        %1558 = vmatpush.bf16.msra.mxu0 0
        %1559 = vmatpush.bf16.msra.mxu0 0
        %1560 = vmatpush.bf16.msra.mxu0 0
        %1561 = vmatpush.bf16.msra.mxu0 %v1545
        %1562 = vmatpush.bf16.msra.mxu0 %v1544
        %1563 = vmatmul.bf16.gmra.mxu0 %v1550
        %v1564 = vpop.f32.mrf.mxu0
        %v1565 = vadd.f32 %v1534, %v1564
        %v1566 = vpop.f32.mrf.mxu0
        %v1567 = vadd.f32 %v1534, %v1566
        %1568 = vmatmul.bf16.gmra.mxu0 %v1553
        %v1569 = vpop.f32.mrf.mxu0
        %v1570 = vadd.f32 %v1534, %v1569
        %v1571 = vpop.f32.mrf.mxu0
        %v1572 = vadd.f32 %v1534, %v1571
        %1573 = vdwg.mxu0
        %vm1574 = vcmp.lt.s32.totalorder %v756, 32
        %v1575 = vsel %vm1574, 1, 0
        %v1576 = vcvt.s32.f32 %v1575
        %v1577 = vadd.f32 %v546, %v1565
        %v1578 = vadd.f32 %v547, %v1567
        %v1579 = vadd.f32 %v548, %v1570
        %v1580 = vadd.f32 %v549, %v1572
        %v1581 = vld [vmem:[%s8] sm:$0x1]
        %v1582 = vld [vmem:[%s9] sm:$0x1]
        %1583 = vadd.xlane.f32.xlu0 %v1577
        %v1584 = vpop.xlane.xlu0 %1583
        %1585 = vadd.xlane.f32.xlu0 %v1578
        %v1586 = vpop.xlane.xlu0 %1585
        %1587 = vadd.xlane.f32.xlu0 %v1579
        %v1588 = vpop.xlane.xlu0 %1587
        %1589 = vadd.xlane.f32.xlu0 %v1580
        %v1590 = vpop.xlane.xlu0 %1589
        %v1591 = vmul.f32 %v1584, 0.03125
        %v1592 = vmul.f32 %v1586, 0.03125
        %v1593 = vmul.f32 %v1588, 0.03125
        %v1594 = vmul.f32 %v1590, 0.03125
        %v1595 = vsub.f32 %v1577, %v1591
        %v1596 = vsub.f32 %v1578, %v1592
        %v1597 = vsub.f32 %v1579, %v1593
        %v1598 = vsub.f32 %v1580, %v1594
        %v1599 = vmul.f32 %v1595, %v1595
        %v1600 = vmul.f32 %v1596, %v1596
        %v1601 = vmul.f32 %v1597, %v1597
        %v1602 = vmul.f32 %v1598, %v1598
        %v1603 = vmul.f32 %v1599, %v1576
        %v1604 = vmul.f32 %v1600, %v1576
        %v1605 = vmul.f32 %v1601, %v1576
        %v1606 = vmul.f32 %v1602, %v1576
        %1607 = vadd.xlane.f32.xlu0 %v1603
        %v1608 = vpop.xlane.xlu0 %1607
        %1609 = vadd.xlane.f32.xlu0 %v1604
        %v1610 = vpop.xlane.xlu0 %1609
        %1611 = vadd.xlane.f32.xlu0 %v1605
        %v1612 = vpop.xlane.xlu0 %1611
        %1613 = vadd.xlane.f32.xlu0 %v1606
        %v1614 = vpop.xlane.xlu0 %1613
        %v1615 = vmul.f32 %v1608, 0.03125
        %v1616 = vmul.f32 %v1610, 0.03125
        %v1617 = vmul.f32 %v1612, 0.03125
        %v1618 = vmul.f32 %v1614, 0.03125
        %v1619 = vadd.f32 %v1615, 1e-05
        %v1620 = vadd.f32 %v1616, 1e-05
        %v1621 = vadd.f32 %v1617, 1e-05
        %v1622 = vadd.f32 %v1618, 1e-05
        %v1623 = vrsqrt.pop %v1619
        %v1624 = vmul.f32 %v1623, %v1619
        %v1625 = vmul.f32 %v1624, %v1623
        %v1626 = vmul.f32 0.5, %v1625
        %v1627 = vsub.f32 1.5, %v1626
        %v1628 = vmul.f32 %v1623, %v1627
        %vm1629 = vweird.f32 %v1619
        %vm1630 = vweird.f32 %v1623
        %vm1631 = vmor %vm1629, %vm1630
        %v1632 = vsel %vm1631, %v1623, %v1628
        %v1633 = vrsqrt.pop %v1620
        %v1634 = vmul.f32 %v1633, %v1620
        %v1635 = vmul.f32 %v1634, %v1633
        %v1636 = vmul.f32 0.5, %v1635
        %v1637 = vsub.f32 1.5, %v1636
        %v1638 = vmul.f32 %v1633, %v1637
        %vm1639 = vweird.f32 %v1620
        %vm1640 = vweird.f32 %v1633
        %vm1641 = vmor %vm1639, %vm1640
        %v1642 = vsel %vm1641, %v1633, %v1638
        %v1643 = vrsqrt.pop %v1621
        %v1644 = vmul.f32 %v1643, %v1621
        %v1645 = vmul.f32 %v1644, %v1643
        %v1646 = vmul.f32 0.5, %v1645
        %v1647 = vsub.f32 1.5, %v1646
        %v1648 = vmul.f32 %v1643, %v1647
        %vm1649 = vweird.f32 %v1621
        %vm1650 = vweird.f32 %v1643
        %vm1651 = vmor %vm1649, %vm1650
        %v1652 = vsel %vm1651, %v1643, %v1648
        %v1653 = vrsqrt.pop %v1622
        %v1654 = vmul.f32 %v1653, %v1622
        %v1655 = vmul.f32 %v1654, %v1653
        %v1656 = vmul.f32 0.5, %v1655
        %v1657 = vsub.f32 1.5, %v1656
        %v1658 = vmul.f32 %v1653, %v1657
        %vm1659 = vweird.f32 %v1622
        %vm1660 = vweird.f32 %v1653
        %vm1661 = vmor %vm1659, %vm1660
        %v1662 = vsel %vm1661, %v1653, %v1658
        %v1663 = vmul.f32 %v1595, %v1632
        %v1664 = vmul.f32 %v1596, %v1642
        %v1665 = vmul.f32 %v1597, %v1652
        %v1666 = vmul.f32 %v1598, %v1662
        %v1668 = vperm.slane %v1581, 0
        %v1670 = vmul.f32 %v1663, %v1668
        %v1671 = vmul.f32 %v1664, %v1668
        %v1672 = vmul.f32 %v1665, %v1668
        %v1673 = vmul.f32 %v1666, %v1668
        %v1675 = vperm.slane %v1582, 0
        %v1677 = vadd.f32 %v1670, %v1675
        %v1678 = vadd.f32 %v1671, %v1675
        %v1679 = vadd.f32 %v1672, %v1675
        %v1680 = vadd.f32 %v1673, %v1675
        %v1681 = vpack.c.bf16 %v1678, %v1677
        %v1682 = vpack.c.bf16 %v1680, %v1679
        %v1683 = vld [vmem:[%s10] sm:$0xf]
        %v1684 = vld [vmem:[%s10 + $0x4] sm:$0xf]
        %v1685 = vld [vmem:[%s10 + $0x8] sm:$0xf]
        %v1686 = vld [vmem:[%s10 + $0xc] sm:$0xf]
        %v1687 = vld [vmem:[%s10 + $0x10] sm:$0xf]
        %v1688 = vld [vmem:[%s10 + $0x14] sm:$0xf]
        %v1689 = vld [vmem:[%s10 + $0x18] sm:$0xf]
        %v1690 = vld [vmem:[%s10 + $0x1c] sm:$0xf]
        %v1691 = vld [vmem:[%s10 + $0x20] sm:$0xf]
        %v1692 = vld [vmem:[%s10 + $0x24] sm:$0xf]
        %v1693 = vld [vmem:[%s10 + $0x28] sm:$0xf]
        %v1694 = vld [vmem:[%s10 + $0x2c] sm:$0xf]
        %v1695 = vld [vmem:[%s10 + $0x30] sm:$0xf]
        %v1696 = vld [vmem:[%s10 + $0x34] sm:$0xf]
        %v1697 = vld [vmem:[%s10 + $0x38] sm:$0xf]
        %v1698 = vld [vmem:[%s10 + $0x3c] sm:$0xf]
        %v1699 = vld [vmem:[%s11] sm:$0x1]
        %v1701 = vperm.slane %v1699, 0
        %v1719 = vunpack.c.l.b16 %v1683
        %v1720 = vunpack.c.l.b16 %v1684
        %v1721 = vunpack.c.l.b16 %v1685
        %v1722 = vunpack.c.l.b16 %v1686
        %v1723 = vunpack.c.l.b16 %v1687
        %v1724 = vunpack.c.l.b16 %v1688
        %v1725 = vunpack.c.l.b16 %v1689
        %v1726 = vunpack.c.l.b16 %v1690
        %v1727 = vunpack.c.l.b16 %v1691
        %v1728 = vunpack.c.l.b16 %v1692
        %v1729 = vunpack.c.l.b16 %v1693
        %v1730 = vunpack.c.l.b16 %v1694
        %v1731 = vunpack.c.l.b16 %v1695
        %v1732 = vunpack.c.l.b16 %v1696
        %v1733 = vunpack.c.l.b16 %v1697
        %v1734 = vunpack.c.l.b16 %v1698
        %v1735 = vpack.c.b16 %v1720, %v1719
        %v1736 = vpack.c.b16 %v1722, %v1721
        %v1737 = vpack.c.b16 %v1724, %v1723
        %v1738 = vpack.c.b16 %v1726, %v1725
        %v1739 = vpack.c.b16 %v1728, %v1727
        %v1740 = vpack.c.b16 %v1730, %v1729
        %v1741 = vpack.c.b16 %v1732, %v1731
        %v1742 = vpack.c.b16 %v1734, %v1733
        %1751 = vmatpush.bf16.msra.mxu0 %v1742
        %1752 = vmatpush.bf16.msra.mxu0 %v1741
        %1753 = vmatpush.bf16.msra.mxu0 %v1740
        %1754 = vmatpush.bf16.msra.mxu0 %v1739
        %1755 = vmatpush.bf16.msra.mxu0 %v1738
        %1756 = vmatpush.bf16.msra.mxu0 %v1737
        %1757 = vmatpush.bf16.msra.mxu0 %v1736
        %1758 = vmatpush.bf16.msra.mxu0 %v1735
        %1759 = vmatmul.bf16.gmra.mxu0 %v1681
        %v1760 = vpop.f32.mrf.mxu0
        %v1761 = vadd.f32 %v1701, %v1760
        %v1762 = vpop.f32.mrf.mxu0
        %v1763 = vadd.f32 %v1701, %v1762
        %1764 = vmatmul.bf16.gmra.mxu0 %v1682
        %v1765 = vpop.f32.mrf.mxu0
        %v1766 = vadd.f32 %v1701, %v1765
        %v1767 = vpop.f32.mrf.mxu0
        %v1768 = vadd.f32 %v1701, %v1767
        %1769 = vdwg.mxu0
        %v1770 = vmax.f32 %v1761, 0.0
        %v1771 = vmax.f32 %v1763, 0.0
        %v1772 = vmax.f32 %v1766, 0.0
        %v1773 = vmax.f32 %v1768, 0.0
        %v1774 = vpack.c.bf16 %v1771, %v1770
        %v1775 = vpack.c.bf16 %v1773, %v1772
        %v1776 = vld [vmem:[%s12] sm:$0xf]
        %v1777 = vld [vmem:[%s12 + $0x4] sm:$0xf]
        %v1778 = vld [vmem:[%s12 + $0x8] sm:$0xf]
        %v1779 = vld [vmem:[%s12 + $0xc] sm:$0xf]
        %v1780 = vld [vmem:[%s12 + $0x10] sm:$0xf]
        %v1781 = vld [vmem:[%s12 + $0x14] sm:$0xf]
        %v1782 = vld [vmem:[%s12 + $0x18] sm:$0xf]
        %v1783 = vld [vmem:[%s12 + $0x1c] sm:$0xf]
        %v1784 = vld [vmem:[%s12 + $0x20] sm:$0xf]
        %v1785 = vld [vmem:[%s12 + $0x24] sm:$0xf]
        %v1786 = vld [vmem:[%s12 + $0x28] sm:$0xf]
        %v1787 = vld [vmem:[%s12 + $0x2c] sm:$0xf]
        %v1788 = vld [vmem:[%s12 + $0x30] sm:$0xf]
        %v1789 = vld [vmem:[%s12 + $0x34] sm:$0xf]
        %v1790 = vld [vmem:[%s12 + $0x38] sm:$0xf]
        %v1791 = vld [vmem:[%s12 + $0x3c] sm:$0xf]
        %v1792 = vld [vmem:[%s13] sm:$0x1]
        %v1794 = vperm.slane %v1792, 0
        %v1812 = vunpack.c.l.b16 %v1776
        %v1813 = vunpack.c.l.b16 %v1777
        %v1814 = vunpack.c.l.b16 %v1778
        %v1815 = vunpack.c.l.b16 %v1779
        %v1816 = vunpack.c.l.b16 %v1780
        %v1817 = vunpack.c.l.b16 %v1781
        %v1818 = vunpack.c.l.b16 %v1782
        %v1819 = vunpack.c.l.b16 %v1783
        %v1820 = vunpack.c.l.b16 %v1784
        %v1821 = vunpack.c.l.b16 %v1785
        %v1822 = vunpack.c.l.b16 %v1786
        %v1823 = vunpack.c.l.b16 %v1787
        %v1824 = vunpack.c.l.b16 %v1788
        %v1825 = vunpack.c.l.b16 %v1789
        %v1826 = vunpack.c.l.b16 %v1790
        %v1827 = vunpack.c.l.b16 %v1791
        %v1828 = vpack.c.b16 %v1813, %v1812
        %v1829 = vpack.c.b16 %v1815, %v1814
        %v1830 = vpack.c.b16 %v1817, %v1816
        %v1831 = vpack.c.b16 %v1819, %v1818
        %v1832 = vpack.c.b16 %v1821, %v1820
        %v1833 = vpack.c.b16 %v1823, %v1822
        %v1834 = vpack.c.b16 %v1825, %v1824
        %v1835 = vpack.c.b16 %v1827, %v1826
        %1844 = vmatpush.bf16.msra.mxu0 %v1835
        %1845 = vmatpush.bf16.msra.mxu0 %v1834
        %1846 = vmatpush.bf16.msra.mxu0 %v1833
        %1847 = vmatpush.bf16.msra.mxu0 %v1832
        %1848 = vmatpush.bf16.msra.mxu0 %v1831
        %1849 = vmatpush.bf16.msra.mxu0 %v1830
        %1850 = vmatpush.bf16.msra.mxu0 %v1829
        %1851 = vmatpush.bf16.msra.mxu0 %v1828
        %1852 = vmatmul.bf16.gmra.mxu0 %v1774
        %v1853 = vpop.f32.mrf.mxu0
        %v1854 = vadd.f32 %v1794, %v1853
        %v1855 = vpop.f32.mrf.mxu0
        %v1856 = vadd.f32 %v1794, %v1855
        %1857 = vmatmul.bf16.gmra.mxu0 %v1775
        %v1858 = vpop.f32.mrf.mxu0
        %v1859 = vadd.f32 %v1794, %v1858
        %v1860 = vpop.f32.mrf.mxu0
        %v1861 = vadd.f32 %v1794, %v1860
        %1862 = vdwg.mxu0
        %v1863 = vadd.f32 %v1677, %v1854
        %v1864 = vadd.f32 %v1678, %v1856
        %v1865 = vadd.f32 %v1679, %v1859
        %v1866 = vadd.f32 %v1680, %v1861
        %v1867 = vld [vmem:[%s14] sm:$0x1]
        %v1868 = vld [vmem:[%s15] sm:$0x1]
        %1869 = vadd.xlane.f32.xlu0 %v1863
        %v1870 = vpop.xlane.xlu0 %1869
        %1871 = vadd.xlane.f32.xlu0 %v1864
        %v1872 = vpop.xlane.xlu0 %1871
        %1873 = vadd.xlane.f32.xlu0 %v1865
        %v1874 = vpop.xlane.xlu0 %1873
        %1875 = vadd.xlane.f32.xlu0 %v1866
        %v1876 = vpop.xlane.xlu0 %1875
        %v1877 = vmul.f32 %v1870, 0.03125
        %v1878 = vmul.f32 %v1872, 0.03125
        %v1879 = vmul.f32 %v1874, 0.03125
        %v1880 = vmul.f32 %v1876, 0.03125
        %v1881 = vsub.f32 %v1863, %v1877
        %v1882 = vsub.f32 %v1864, %v1878
        %v1883 = vsub.f32 %v1865, %v1879
        %v1884 = vsub.f32 %v1866, %v1880
        %v1885 = vmul.f32 %v1881, %v1881
        %v1886 = vmul.f32 %v1882, %v1882
        %v1887 = vmul.f32 %v1883, %v1883
        %v1888 = vmul.f32 %v1884, %v1884
        %v1889 = vmul.f32 %v1885, %v1576
        %v1890 = vmul.f32 %v1886, %v1576
        %v1891 = vmul.f32 %v1887, %v1576
        %v1892 = vmul.f32 %v1888, %v1576
        %1893 = vadd.xlane.f32.xlu0 %v1889
        %v1894 = vpop.xlane.xlu0 %1893
        %1895 = vadd.xlane.f32.xlu0 %v1890
        %v1896 = vpop.xlane.xlu0 %1895
        %1897 = vadd.xlane.f32.xlu0 %v1891
        %v1898 = vpop.xlane.xlu0 %1897
        %1899 = vadd.xlane.f32.xlu0 %v1892
        %v1900 = vpop.xlane.xlu0 %1899
        %v1901 = vmul.f32 %v1894, 0.03125
        %v1902 = vmul.f32 %v1896, 0.03125
        %v1903 = vmul.f32 %v1898, 0.03125
        %v1904 = vmul.f32 %v1900, 0.03125
        %v1905 = vadd.f32 %v1901, 1e-05
        %v1906 = vadd.f32 %v1902, 1e-05
        %v1907 = vadd.f32 %v1903, 1e-05
        %v1908 = vadd.f32 %v1904, 1e-05
        %v1909 = vrsqrt.pop %v1905
        %v1910 = vmul.f32 %v1909, %v1905
        %v1911 = vmul.f32 %v1910, %v1909
        %v1912 = vmul.f32 0.5, %v1911
        %v1913 = vsub.f32 1.5, %v1912
        %v1914 = vmul.f32 %v1909, %v1913
        %vm1915 = vweird.f32 %v1905
        %vm1916 = vweird.f32 %v1909
        %vm1917 = vmor %vm1915, %vm1916
        %v1918 = vsel %vm1917, %v1909, %v1914
        %v1919 = vrsqrt.pop %v1906
        %v1920 = vmul.f32 %v1919, %v1906
        %v1921 = vmul.f32 %v1920, %v1919
        %v1922 = vmul.f32 0.5, %v1921
        %v1923 = vsub.f32 1.5, %v1922
        %v1924 = vmul.f32 %v1919, %v1923
        %vm1925 = vweird.f32 %v1906
        %vm1926 = vweird.f32 %v1919
        %vm1927 = vmor %vm1925, %vm1926
        %v1928 = vsel %vm1927, %v1919, %v1924
        %v1929 = vrsqrt.pop %v1907
        %v1930 = vmul.f32 %v1929, %v1907
        %v1931 = vmul.f32 %v1930, %v1929
        %v1932 = vmul.f32 0.5, %v1931
        %v1933 = vsub.f32 1.5, %v1932
        %v1934 = vmul.f32 %v1929, %v1933
        %vm1935 = vweird.f32 %v1907
        %vm1936 = vweird.f32 %v1929
        %vm1937 = vmor %vm1935, %vm1936
        %v1938 = vsel %vm1937, %v1929, %v1934
        %v1939 = vrsqrt.pop %v1908
        %v1940 = vmul.f32 %v1939, %v1908
        %v1941 = vmul.f32 %v1940, %v1939
        %v1942 = vmul.f32 0.5, %v1941
        %v1943 = vsub.f32 1.5, %v1942
        %v1944 = vmul.f32 %v1939, %v1943
        %vm1945 = vweird.f32 %v1908
        %vm1946 = vweird.f32 %v1939
        %vm1947 = vmor %vm1945, %vm1946
        %v1948 = vsel %vm1947, %v1939, %v1944
        %v1949 = vmul.f32 %v1881, %v1918
        %v1950 = vmul.f32 %v1882, %v1928
        %v1951 = vmul.f32 %v1883, %v1938
        %v1952 = vmul.f32 %v1884, %v1948
        %v1954 = vperm.slane %v1867, 0
        %v1956 = vmul.f32 %v1949, %v1954
        %v1957 = vmul.f32 %v1950, %v1954
        %v1958 = vmul.f32 %v1951, %v1954
        %v1959 = vmul.f32 %v1952, %v1954
        %v1961 = vperm.slane %v1868, 0
        %v1963 = vadd.f32 %v1956, %v1961
        %v1964 = vadd.f32 %v1957, %v1961
        %v1965 = vadd.f32 %v1958, %v1961
        %v1966 = vadd.f32 %v1959, %v1961
        %1967 = vst [vmem:[%s531] sm:$0xff] %v1963
        %1968 = vst [vmem:[%s531 + $0x8] sm:$0xff] %v1964
        %1969 = vst [vmem:[%s531 + $0x10] sm:$0xff] %v1965
        %1970 = vst [vmem:[%s531 + $0x18] sm:$0xff] %v1966
        %s1971 = sand.u32 %s384, 1
        %s1972 = scalar_lea.sflag [#allocation3], %s1971
        %s1973 = sand.u32 %s384, 1
        %s1974 = smul.addr %s1973, 32
        %s1975 = scalar_lea.vmem [#allocation2], %s1974
        // Predicated region
        $region85: #{transformer_layer.1} parent=83 // pred_check
          %p1976 = pneg %p394
        $region86: #{transformer_layer.1} parent=83 // pred_check_branch
          %1978 = sbr.rel (%p1976) target = $region88
        $region87: #{transformer_layer.1} parent=83 // pred_region
          %s1979 = smul.u32 4, %s30
          %1981 = vsyncadd %s1972, 0
          %s1982 = smul.addr %s1979, 8
          %s1983 = scalar_lea.hbm %s16, %s1982
          %s1984 = sshll.u32 %s1975, 4
          %s1985 = int_to_ptr.vmem [resolvable:$true] %s1984
          %s1986 = sshll.u32 %s1983, 4
          %s1987 = int_to_ptr.hbm [resolvable:$true] %s1986
          %1992 = dma.vmem_to_hbm [thread:$0]  %s1985, 512, %s1987, %s1972, 128, 128, 8
        $region88: #{transformer_layer.1} parent=83 // pred_fallthru
          _
      $region84: #{transformer_layer.1} parent=5 // pred_fallthru
        _
      %p1993 = scmp.le.s32.totalorder 2, %s25
      // Predicated region
      $region89: #{transformer_layer.1} parent=5 // pred_check
        %p1994 = pneg %p1993
      $region90: #{transformer_layer.1} parent=5 // pred_check_branch
        %1996 = sbr.rel (%p1994) target = $region92
      $region91: #{transformer_layer.1} parent=5 // pred_region
        %s1997 = ssub.s32 %s25, 2
        // Predicated region
        $region93: #{transformer_layer.1} parent=91 // pred_check
          %p1998 = pneg %p400
        $region94: #{transformer_layer.1} parent=91 // pred_check_branch
          %2000 = sbr.rel (%p1998) target = $region96
        $region95: #{transformer_layer.1} parent=91 // pred_region
          %s2001 = sand.u32 %s385, 1
          %s2002 = scalar_lea.sflag [#allocation3], %s2001
          %s2003 = sand.u32 %s385, 1
          %s2004 = smul.addr %s2003, 32
          %s2005 = scalar_lea.vmem [#allocation2], %s2004
          %2007 = dma.done %s2002, 512
        $region96: #{transformer_layer.1} parent=91 // pred_fallthru
          _
      $region92: #{transformer_layer.1} parent=5 // pred_fallthru
        _
    $region6: #{transformer_layer.1} parent=1 // loop_footer
      %s29 = sadd.s32 1, %s25
    $region7: #{transformer_layer.1} parent=1 // loop_footer_branch
      %24 = sbr.rel target = $region3
    $region8: #{transformer_layer.1} parent=1 // loop_exit
      _
    %2008 = vsyncpa [#allocation3], 1
    %s2009 = scalar_lea.sflag [#allocation3], 1
    %2010 = vsyncpa %s2009, 1

</llo_original>
